<compile_context>
chip_gen: v7x
topology: tpu7x:2x2x1
jax: 0.10.0
libtpu: 0.0.40
codegen_flags: <defaults>
</compile_context>

<pallas_src>
import jax
import jax.numpy as jnp
from jax.experimental import pallas as pl
from jax.experimental.pallas import tpu as pltpu

# Small, TPU-friendly stand-in sizes consistent with the module.
BATCH = 2
SEQ = 16
DIM = 128          # token dim
HEADS = 8          # PyTorch default heads=8
DIM_HEAD = 16      # small dim_head so inner = heads*dim_head = 128
INNER = HEADS * DIM_HEAD


# --------------------------------------------------------------------------
# Fused multi-head self-attention kernel (whole batch, all heads, one step)
# --------------------------------------------------------------------------
def _attention_kernel(x_ref, wqkv_ref, wo_ref, bo_ref, out_ref):
    B, N, D = x_ref.shape
    H, _, dh3 = wqkv_ref.shape
    dh = dh3 // 3
    scale = dh ** -0.5

    x = x_ref[...]                                   # (B, N, D)
    x2d = x.reshape(B * N, D)                        # collapse leading dims (lane dim unchanged)
    xh = jnp.broadcast_to(x2d[None], (H, B * N, D))  # head-batched view of the tokens

    wqkv = wqkv_ref[...]                             # (H, D, 3*dh)  packed [q|k|v] per head
    wo = wo_ref[...]                                 # (H, dh, D)
    bo = bo_ref[...]                                 # (1, D)

    # Fused QKV projection: one head-batched matmul, M = B*N rows.
    qkv = jnp.einsum('hnd,hdf->hnf', xh, wqkv,
                     preferred_element_type=jnp.float32)   # (H, B*N, 3*dh)

    for b in range(B):                               # static, B is tiny
        blk = qkv[:, b * N:(b + 1) * N, :]           # (H, N, 3*dh)  sublane-aligned slice
        q = blk[:, :, 0:dh]
        k = blk[:, :, dh:2 * dh]
        v = blk[:, :, 2 * dh:3 * dh]

        # Head-batched attention scores + numerically-stable softmax.
        s = jnp.einsum('hqd,hkd->hqk', q, k,
                       preferred_element_type=jnp.float32) * scale   # (H, N, N)
        s = s - jnp.max(s, axis=-1, keepdims=True)
        p = jnp.exp(s)
        p = p / jnp.sum(p, axis=-1, keepdims=True)

        o = jnp.einsum('hqk,hkd->hqd', p, v,
                       preferred_element_type=jnp.float32)           # (H, N, dh)

        # Output projection folded per-head: sum_h o_h @ wo[h]  (== concat(o) @ Wo)
        yh = jnp.einsum('hqd,hdf->hqf', o, wo,
                        preferred_element_type=jnp.float32)          # (H, N, D)
        y = jnp.sum(yh, axis=0) + bo                                 # (N, D)

        out_ref[b, :, :] = y.astype(out_ref.dtype)


@jax.jit
def attention_forward(x, params):
    B, N, D = x.shape
    vmem = pl.BlockSpec(memory_space=pltpu.MemorySpace.VMEM)
    return pl.pallas_call(
        _attention_kernel,
        out_shape=jax.ShapeDtypeStruct((B, N, D), jnp.float32),
        in_specs=[vmem, vmem, vmem, vmem],
        out_specs=vmem,
    )(x, params["wqkv"], params["wo"], params["bo"])


# --------------------------------------------------------------------------
# Pure-JAX reference (mirrors the PyTorch forward exactly, given packed weights)
# --------------------------------------------------------------------------
def attention_reference(x, params):
    wqkv, wo, bo = params["wqkv"], params["wo"], params["bo"]
    H, D, dh3 = wqkv.shape
    dh = dh3 // 3
    scale = dh ** -0.5
    hp = jax.lax.Precision.HIGHEST

    wq, wk, wv = wqkv[:, :, :dh], wqkv[:, :, dh:2 * dh], wqkv[:, :, 2 * dh:]
    q = jnp.einsum('bnd,hdf->bhnf', x, wq, precision=hp)
    k = jnp.einsum('bnd,hdf->bhnf', x, wk, precision=hp)
    v = jnp.einsum('bnd,hdf->bhnf', x, wv, precision=hp)
    dots = jnp.einsum('bhqf,bhkf->bhqk', q, k, precision=hp) * scale
    attn = jax.nn.softmax(dots, axis=-1)
    out = jnp.einsum('bhqk,bhkf->bhqf', attn, v, precision=hp)
    B, N = x.shape[0], x.shape[1]
    out = out.transpose(0, 2, 1, 3).reshape(B, N, H * dh)      # 'b h n d -> b n (h d)'
    return jnp.einsum('bnf,fD->bnD', out, wo.reshape(H * dh, D), precision=hp) + bo


# --------------------------------------------------------------------------
# Deterministic synthetic parameters (head-major packed layout)
# --------------------------------------------------------------------------
def init_params(key):
    k1, k2, k3 = jax.random.split(key, 3)
    std = 0.1
    return {
        # to_qkv weight, packed per head as [Wq_h | Wk_h | Wv_h] -> (H, D, 3*dh)
        "wqkv": std * jax.random.normal(k1, (HEADS, DIM, 3 * DIM_HEAD), jnp.float32),
        # to_out Linear weight, split per head into (dh, D) row blocks -> (H, dh, D)
        "wo": std * jax.random.normal(k2, (HEADS, DIM_HEAD, DIM), jnp.float32),
        "bo": std * jax.random.normal(k3, (1, DIM), jnp.float32),
    }


if __name__ == "__main__":
    key = jax.random.PRNGKey(0)
    kp, kx = jax.random.split(key, 2)
    params = init_params(kp)
    x = jax.random.normal(kx, (BATCH, SEQ, DIM), jnp.float32)

    out = attention_forward(x, params)
    out = jax.block_until_ready(out)

    assert out.shape == (BATCH, SEQ, DIM), out.shape
    assert bool(jnp.all(jnp.isfinite(out)))

    ref = attention_reference(x, params)
    assert bool(jnp.allclose(out, ref, rtol=1e-2, atol=1e-2)), (
        float(jnp.max(jnp.abs(out - ref))))

    print("KERNEL_OK")
</pallas_src>

<mosaic_0001>
module attributes {stable_mosaic.version = 11 : i64} {
  func.func @_attention_kernel(%arg0: memref<2x16x128xf32, #tpu.memory_space<vmem>>, %arg1: memref<8x128x48xf32, #tpu.memory_space<vmem>>, %arg2: memref<8x16x128xf32, #tpu.memory_space<vmem>>, %arg3: memref<1x128xf32, #tpu.memory_space<vmem>>, %arg4: memref<2x16x128xf32, #tpu.memory_space<vmem>>) attributes {dimension_semantics = [], scalar_prefetch = 0 : i64, scratch_operands = 0 : i64, tpu.core_type = #tpu.core_type<tc>} {
    %c0 = arith.constant 0 : index
    %c0_0 = arith.constant 0 : index
    %c0_1 = arith.constant 0 : index
    %0 = vector.load %arg0[%c0, %c0_0, %c0_1] : memref<2x16x128xf32, #tpu.memory_space<vmem>>, vector<2x16x128xf32>
    %1 = vector.shape_cast %0 : vector<2x16x128xf32> to vector<32x128xf32>
    %2 = vector.shape_cast %1 : vector<32x128xf32> to vector<1x32x128xf32>
    %3 = vector.shape_cast %2 : vector<1x32x128xf32> to vector<1x32x128xf32>
    %4 = vector.broadcast %3 : vector<1x32x128xf32> to vector<8x32x128xf32>
    %c0_2 = arith.constant 0 : index
    %c0_3 = arith.constant 0 : index
    %c0_4 = arith.constant 0 : index
    %5 = vector.load %arg1[%c0_2, %c0_3, %c0_4] : memref<8x128x48xf32, #tpu.memory_space<vmem>>, vector<8x128x48xf32>
    %c0_5 = arith.constant 0 : index
    %c0_6 = arith.constant 0 : index
    %c0_7 = arith.constant 0 : index
    %6 = vector.load %arg2[%c0_5, %c0_6, %c0_7] : memref<8x16x128xf32, #tpu.memory_space<vmem>>, vector<8x16x128xf32>
    %c0_8 = arith.constant 0 : index
    %c0_9 = arith.constant 0 : index
    %7 = vector.load %arg3[%c0_8, %c0_9] : memref<1x128xf32, #tpu.memory_space<vmem>>, vector<1x128xf32>
    "tpu.trace_start"() <{level = 10 : i32, message = "hnd,hdf->hnf"}> : () -> ()
    %cst = arith.constant dense<0.000000e+00> : vector<8x32x48xf32>
    %8 = tpu.matmul %4, %5, %cst {dimension_numbers = #tpu.dot_dimension_numbers<[2], [1], [1], [2], [0, 0, 0, 1, 1, 2], [0], [0]>} : vector<8x32x128xf32>, vector<8x128x48xf32>, vector<8x32x48xf32> -> vector<8x32x48xf32>
    "tpu.trace_stop"() : () -> ()
    %9 = vector.extract_strided_slice %8 {offsets = [0, 0, 0], sizes = [8, 16, 48], strides = [1, 1, 1]} : vector<8x32x48xf32> to vector<8x16x48xf32>
    %10 = vector.extract_strided_slice %9 {offsets = [0, 0, 0], sizes = [8, 16, 16], strides = [1, 1, 1]} : vector<8x16x48xf32> to vector<8x16x16xf32>
    %11 = vector.extract_strided_slice %9 {offsets = [0, 0, 16], sizes = [8, 16, 16], strides = [1, 1, 1]} : vector<8x16x48xf32> to vector<8x16x16xf32>
    %12 = vector.extract_strided_slice %9 {offsets = [0, 0, 32], sizes = [8, 16, 16], strides = [1, 1, 1]} : vector<8x16x48xf32> to vector<8x16x16xf32>
    "tpu.trace_start"() <{level = 10 : i32, message = "hqd,hkd->hqk"}> : () -> ()
    %cst_10 = arith.constant dense<0.000000e+00> : vector<8x16x16xf32>
    %13 = tpu.matmul %10, %11, %cst_10 {dimension_numbers = #tpu.dot_dimension_numbers<[2], [2], [1], [1], [0, 0, 0, 1, 1, 1], [0], [0]>} : vector<8x16x16xf32>, vector<8x16x16xf32>, vector<8x16x16xf32> -> vector<8x16x16xf32>
    "tpu.trace_stop"() : () -> ()
    %cst_11 = arith.constant 2.500000e-01 : f32
    %14 = vector.broadcast %cst_11 : f32 to vector<8x16x16xf32>
    %15 = arith.mulf %13, %14 : vector<8x16x16xf32>
    %cst_12 = arith.constant dense<0xFF800000> : vector<8x16xf32>
    %16 = vector.multi_reduction <maximumf>, %15, %cst_12 [2] : vector<8x16x16xf32> to vector<8x16xf32>
    %17 = vector.shape_cast %16 : vector<8x16xf32> to vector<8x16x1xf32>
    %18 = vector.broadcast %17 : vector<8x16x1xf32> to vector<8x16x16xf32>
    %19 = arith.subf %15, %18 : vector<8x16x16xf32>
    %20 = math.exp %19 : vector<8x16x16xf32>
    %cst_13 = arith.constant dense<0.000000e+00> : vector<8x16xf32>
    %21 = vector.multi_reduction <add>, %20, %cst_13 [2] : vector<8x16x16xf32> to vector<8x16xf32>
    %22 = vector.shape_cast %21 : vector<8x16xf32> to vector<8x16x1xf32>
    %23 = vector.broadcast %22 : vector<8x16x1xf32> to vector<8x16x16xf32>
    %24 = arith.divf %20, %23 : vector<8x16x16xf32>
    "tpu.trace_start"() <{level = 10 : i32, message = "hqk,hkd->hqd"}> : () -> ()
    %cst_14 = arith.constant dense<0.000000e+00> : vector<8x16x16xf32>
    %25 = tpu.matmul %24, %12, %cst_14 {dimension_numbers = #tpu.dot_dimension_numbers<[2], [1], [1], [2], [0, 0, 0, 1, 1, 2], [0], [0]>} : vector<8x16x16xf32>, vector<8x16x16xf32>, vector<8x16x16xf32> -> vector<8x16x16xf32>
    "tpu.trace_stop"() : () -> ()
    "tpu.trace_start"() <{level = 10 : i32, message = "hqd,hdf->hqf"}> : () -> ()
    %cst_15 = arith.constant dense<0.000000e+00> : vector<8x16x128xf32>
    %26 = tpu.matmul %25, %6, %cst_15 {dimension_numbers = #tpu.dot_dimension_numbers<[2], [1], [1], [2], [0, 0, 0, 1, 1, 2], [0], [0]>} : vector<8x16x16xf32>, vector<8x16x128xf32>, vector<8x16x128xf32> -> vector<8x16x128xf32>
    "tpu.trace_stop"() : () -> ()
    %cst_16 = arith.constant dense<0.000000e+00> : vector<16x128xf32>
    %27 = vector.multi_reduction <add>, %26, %cst_16 [0] : vector<8x16x128xf32> to vector<16x128xf32>
    %28 = vector.broadcast %7 : vector<1x128xf32> to vector<16x128xf32>
    %29 = arith.addf %27, %28 : vector<16x128xf32>
    %c0_17 = arith.constant 0 : index
    %c0_18 = arith.constant 0 : index
    %c0_19 = arith.constant 0 : index
    %30 = vector.load %arg4[%c0_17, %c0_18, %c0_19] : memref<2x16x128xf32, #tpu.memory_space<vmem>>, vector<1x16x128xf32>
    %31 = vector.shape_cast %30 : vector<1x16x128xf32> to vector<16x128xf32>
    %32 = vector.shape_cast %29 : vector<16x128xf32> to vector<1x16x128xf32>
    tpu.vector_store %arg4[%c0_17, %c0_18, %c0_19], %32 {strides = array<i32>} : memref<2x16x128xf32, #tpu.memory_space<vmem>>, vector<1x16x128xf32>,
    %33 = vector.extract_strided_slice %8 {offsets = [0, 16, 0], sizes = [8, 16, 48], strides = [1, 1, 1]} : vector<8x32x48xf32> to vector<8x16x48xf32>
    %34 = vector.extract_strided_slice %33 {offsets = [0, 0, 0], sizes = [8, 16, 16], strides = [1, 1, 1]} : vector<8x16x48xf32> to vector<8x16x16xf32>
    %35 = vector.extract_strided_slice %33 {offsets = [0, 0, 16], sizes = [8, 16, 16], strides = [1, 1, 1]} : vector<8x16x48xf32> to vector<8x16x16xf32>
    %36 = vector.extract_strided_slice %33 {offsets = [0, 0, 32], sizes = [8, 16, 16], strides = [1, 1, 1]} : vector<8x16x48xf32> to vector<8x16x16xf32>
    "tpu.trace_start"() <{level = 10 : i32, message = "hqd,hkd->hqk"}> : () -> ()
    %cst_20 = arith.constant dense<0.000000e+00> : vector<8x16x16xf32>
    %37 = tpu.matmul %34, %35, %cst_20 {dimension_numbers = #tpu.dot_dimension_numbers<[2], [2], [1], [1], [0, 0, 0, 1, 1, 1], [0], [0]>} : vector<8x16x16xf32>, vector<8x16x16xf32>, vector<8x16x16xf32> -> vector<8x16x16xf32>
    "tpu.trace_stop"() : () -> ()
    %cst_21 = arith.constant 2.500000e-01 : f32
    %38 = vector.broadcast %cst_21 : f32 to vector<8x16x16xf32>
    %39 = arith.mulf %37, %38 : vector<8x16x16xf32>
    %cst_22 = arith.constant dense<0xFF800000> : vector<8x16xf32>
    %40 = vector.multi_reduction <maximumf>, %39, %cst_22 [2] : vector<8x16x16xf32> to vector<8x16xf32>
    %41 = vector.shape_cast %40 : vector<8x16xf32> to vector<8x16x1xf32>
    %42 = vector.broadcast %41 : vector<8x16x1xf32> to vector<8x16x16xf32>
    %43 = arith.subf %39, %42 : vector<8x16x16xf32>
    %44 = math.exp %43 : vector<8x16x16xf32>
    %cst_23 = arith.constant dense<0.000000e+00> : vector<8x16xf32>
    %45 = vector.multi_reduction <add>, %44, %cst_23 [2] : vector<8x16x16xf32> to vector<8x16xf32>
    %46 = vector.shape_cast %45 : vector<8x16xf32> to vector<8x16x1xf32>
    %47 = vector.broadcast %46 : vector<8x16x1xf32> to vector<8x16x16xf32>
    %48 = arith.divf %44, %47 : vector<8x16x16xf32>
    "tpu.trace_start"() <{level = 10 : i32, message = "hqk,hkd->hqd"}> : () -> ()
    %cst_24 = arith.constant dense<0.000000e+00> : vector<8x16x16xf32>
    %49 = tpu.matmul %48, %36, %cst_24 {dimension_numbers = #tpu.dot_dimension_numbers<[2], [1], [1], [2], [0, 0, 0, 1, 1, 2], [0], [0]>} : vector<8x16x16xf32>, vector<8x16x16xf32>, vector<8x16x16xf32> -> vector<8x16x16xf32>
    "tpu.trace_stop"() : () -> ()
    "tpu.trace_start"() <{level = 10 : i32, message = "hqd,hdf->hqf"}> : () -> ()
    %cst_25 = arith.constant dense<0.000000e+00> : vector<8x16x128xf32>
    %50 = tpu.matmul %49, %6, %cst_25 {dimension_numbers = #tpu.dot_dimension_numbers<[2], [1], [1], [2], [0, 0, 0, 1, 1, 2], [0], [0]>} : vector<8x16x16xf32>, vector<8x16x128xf32>, vector<8x16x128xf32> -> vector<8x16x128xf32>
    "tpu.trace_stop"() : () -> ()
    %cst_26 = arith.constant dense<0.000000e+00> : vector<16x128xf32>
    %51 = vector.multi_reduction <add>, %50, %cst_26 [0] : vector<8x16x128xf32> to vector<16x128xf32>
    %52 = vector.broadcast %7 : vector<1x128xf32> to vector<16x128xf32>
    %53 = arith.addf %51, %52 : vector<16x128xf32>
    %c1 = arith.constant 1 : index
    %c0_27 = arith.constant 0 : index
    %c0_28 = arith.constant 0 : index
    %54 = vector.load %arg4[%c1, %c0_27, %c0_28] : memref<2x16x128xf32, #tpu.memory_space<vmem>>, vector<1x16x128xf32>
    %55 = vector.shape_cast %54 : vector<1x16x128xf32> to vector<16x128xf32>
    %56 = vector.shape_cast %53 : vector<16x128xf32> to vector<1x16x128xf32>
    tpu.vector_store %arg4[%c1, %c0_27, %c0_28], %56 {strides = array<i32>} : memref<2x16x128xf32, #tpu.memory_space<vmem>>, vector<1x16x128xf32>,
    return
  }
}

</mosaic_0001>

<llo_original>
// kernel: attention_forward.1
$region0: #{attention_forward.1}
  #allocation0 [shape = 'u32[]', space=smem, size = 0x4, offset = 0x4, fixed_abs, tag = 'smem constant byte address 0x4 - core index']
  #allocation1 [shape = 'u32[144,128]{1,0:T(1,128)}', space=vmem, size = 0x12000, scoped, tag = 'internal scratch']
  %s0 = inlined_call_operand.vmem [shape: f32[2,16,128], index: 0, kind: input, shape index: {}]
  %s1 = inlined_call_operand.vmem [shape: f32[8,128,48], index: 1, kind: input, shape index: {}]
  %s2 = inlined_call_operand.vmem [shape: f32[8,16,128], index: 2, kind: input, shape index: {}]
  %s3 = inlined_call_operand.vmem [shape: f32[1,128], index: 3, kind: input, shape index: {}]
  %s4 = inlined_call_operand.hbm [shape: f32[2,16,128], index: 4, kind: output, shape index: {}]
  %s5 = sld [smem:[#allocation0]]
  $region26: #{attention_forward.1} parent=0
    _
  %s7 = ssub.s32 1, %s5
  %s8 = scalar_select 0, %s7, %s5
  $region1: #{attention_forward.1} parent=0
    #allocation2 [shape = 'u8[16384]{0}', space=vmem, size = 0x4000, scoped, tag = 'output window, operand 0, single buffered']
    #allocation3 [shape = 's32[1]{0}', space=sflag, size = 0x4, scoped, tag = 'scoped memory for attention_forward.1']
    %9 = vsyncpa [#allocation3], 0
    // Predicated region
    $region2: #{attention_forward.1} parent=1 // pred_check
      _
    $region3: #{attention_forward.1} parent=1 // pred_check_branch
      %11 = sbr.rel (0) target = $region5
    $region4: #{attention_forward.1} parent=1 // pred_region
      _
    $region5: #{attention_forward.1} parent=1 // pred_fallthru
      _
    // Predicated region
    $region6: #{attention_forward.1} parent=1 // pred_check
      _
    $region7: #{attention_forward.1} parent=1 // pred_check_branch
      %13 = sbr.rel (0) target = $region9
    $region8: #{attention_forward.1} parent=1 // pred_region
      _
    $region9: #{attention_forward.1} parent=1 // pred_fallthru
      _
    // Predicated region
    $region10: #{attention_forward.1} parent=1 // pred_check
      _
    $region11: #{attention_forward.1} parent=1 // pred_check_branch
      %15 = sbr.rel (0) target = $region13
    $region12: #{attention_forward.1} parent=1 // pred_region
      _
    $region13: #{attention_forward.1} parent=1 // pred_fallthru
      _
    // Predicated region
    $region14: #{attention_forward.1} parent=1 // pred_check
      _
    $region15: #{attention_forward.1} parent=1 // pred_check_branch
      %17 = sbr.rel (0) target = $region17
    $region16: #{attention_forward.1} parent=1 // pred_region
      _
    $region17: #{attention_forward.1} parent=1 // pred_fallthru
      _
    %v18 = vld [vmem:[%s0] sm:$0xff]
    %v19 = vld [vmem:[%s0 + $0x8] sm:$0xff]
    %v20 = vld [vmem:[%s0 + $0x10] sm:$0xff]
    %v21 = vld [vmem:[%s0 + $0x18] sm:$0xff]
    %v22 = vld [vmem:[%s1] sm:$0xff]
    %v23 = vld [vmem:[%s1 + $0x8] sm:$0xff]
    %v24 = vld [vmem:[%s1 + $0x10] sm:$0xff]
    %v25 = vld [vmem:[%s1 + $0x18] sm:$0xff]
    %v26 = vld [vmem:[%s1 + $0x20] sm:$0xff]
    %v27 = vld [vmem:[%s1 + $0x28] sm:$0xff]
    %v28 = vld [vmem:[%s1 + $0x30] sm:$0xff]
    %v29 = vld [vmem:[%s1 + $0x38] sm:$0xff]
    %v30 = vld [vmem:[%s1 + $0x40] sm:$0xff]
    %v31 = vld [vmem:[%s1 + $0x48] sm:$0xff]
    %v32 = vld [vmem:[%s1 + $0x50] sm:$0xff]
    %v33 = vld [vmem:[%s1 + $0x58] sm:$0xff]
    %v34 = vld [vmem:[%s1 + $0x60] sm:$0xff]
    %v35 = vld [vmem:[%s1 + $0x68] sm:$0xff]
    %v36 = vld [vmem:[%s1 + $0x70] sm:$0xff]
    %v37 = vld [vmem:[%s1 + $0x78] sm:$0xff]
    %v38 = vld [vmem:[%s1 + $0x80] sm:$0xff]
    %v39 = vld [vmem:[%s1 + $0x88] sm:$0xff]
    %v40 = vld [vmem:[%s1 + $0x90] sm:$0xff]
    %v41 = vld [vmem:[%s1 + $0x98] sm:$0xff]
    %v42 = vld [vmem:[%s1 + $0xa0] sm:$0xff]
    %v43 = vld [vmem:[%s1 + $0xa8] sm:$0xff]
    %v44 = vld [vmem:[%s1 + $0xb0] sm:$0xff]
    %v45 = vld [vmem:[%s1 + $0xb8] sm:$0xff]
    %v46 = vld [vmem:[%s1 + $0xc0] sm:$0xff]
    %v47 = vld [vmem:[%s1 + $0xc8] sm:$0xff]
    %v48 = vld [vmem:[%s1 + $0xd0] sm:$0xff]
    %v49 = vld [vmem:[%s1 + $0xd8] sm:$0xff]
    %v50 = vld [vmem:[%s1 + $0xe0] sm:$0xff]
    %v51 = vld [vmem:[%s1 + $0xe8] sm:$0xff]
    %v52 = vld [vmem:[%s1 + $0xf0] sm:$0xff]
    %v53 = vld [vmem:[%s1 + $0xf8] sm:$0xff]
    %v54 = vld [vmem:[%s1 + $0x100] sm:$0xff]
    %v55 = vld [vmem:[%s1 + $0x108] sm:$0xff]
    %v56 = vld [vmem:[%s1 + $0x110] sm:$0xff]
    %v57 = vld [vmem:[%s1 + $0x118] sm:$0xff]
    %v58 = vld [vmem:[%s1 + $0x120] sm:$0xff]
    %v59 = vld [vmem:[%s1 + $0x128] sm:$0xff]
    %v60 = vld [vmem:[%s1 + $0x130] sm:$0xff]
    %v61 = vld [vmem:[%s1 + $0x138] sm:$0xff]
    %v62 = vld [vmem:[%s1 + $0x140] sm:$0xff]
    %v63 = vld [vmem:[%s1 + $0x148] sm:$0xff]
    %v64 = vld [vmem:[%s1 + $0x150] sm:$0xff]
    %v65 = vld [vmem:[%s1 + $0x158] sm:$0xff]
    %v66 = vld [vmem:[%s1 + $0x160] sm:$0xff]
    %v67 = vld [vmem:[%s1 + $0x168] sm:$0xff]
    %v68 = vld [vmem:[%s1 + $0x170] sm:$0xff]
    %v69 = vld [vmem:[%s1 + $0x178] sm:$0xff]
    %v70 = vld [vmem:[%s1 + $0x180] sm:$0xff]
    %v71 = vld [vmem:[%s1 + $0x188] sm:$0xff]
    %v72 = vld [vmem:[%s1 + $0x190] sm:$0xff]
    %v73 = vld [vmem:[%s1 + $0x198] sm:$0xff]
    %v74 = vld [vmem:[%s1 + $0x1a0] sm:$0xff]
    %v75 = vld [vmem:[%s1 + $0x1a8] sm:$0xff]
    %v76 = vld [vmem:[%s1 + $0x1b0] sm:$0xff]
    %v77 = vld [vmem:[%s1 + $0x1b8] sm:$0xff]
    %v78 = vld [vmem:[%s1 + $0x1c0] sm:$0xff]
    %v79 = vld [vmem:[%s1 + $0x1c8] sm:$0xff]
    %v80 = vld [vmem:[%s1 + $0x1d0] sm:$0xff]
    %v81 = vld [vmem:[%s1 + $0x1d8] sm:$0xff]
    %v82 = vld [vmem:[%s1 + $0x1e0] sm:$0xff]
    %v83 = vld [vmem:[%s1 + $0x1e8] sm:$0xff]
    %v84 = vld [vmem:[%s1 + $0x1f0] sm:$0xff]
    %v85 = vld [vmem:[%s1 + $0x1f8] sm:$0xff]
    %v86 = vld [vmem:[%s1 + $0x200] sm:$0xff]
    %v87 = vld [vmem:[%s1 + $0x208] sm:$0xff]
    %v88 = vld [vmem:[%s1 + $0x210] sm:$0xff]
    %v89 = vld [vmem:[%s1 + $0x218] sm:$0xff]
    %v90 = vld [vmem:[%s1 + $0x220] sm:$0xff]
    %v91 = vld [vmem:[%s1 + $0x228] sm:$0xff]
    %v92 = vld [vmem:[%s1 + $0x230] sm:$0xff]
    %v93 = vld [vmem:[%s1 + $0x238] sm:$0xff]
    %v94 = vld [vmem:[%s1 + $0x240] sm:$0xff]
    %v95 = vld [vmem:[%s1 + $0x248] sm:$0xff]
    %v96 = vld [vmem:[%s1 + $0x250] sm:$0xff]
    %v97 = vld [vmem:[%s1 + $0x258] sm:$0xff]
    %v98 = vld [vmem:[%s1 + $0x260] sm:$0xff]
    %v99 = vld [vmem:[%s1 + $0x268] sm:$0xff]
    %v100 = vld [vmem:[%s1 + $0x270] sm:$0xff]
    %v101 = vld [vmem:[%s1 + $0x278] sm:$0xff]
    %v102 = vld [vmem:[%s1 + $0x280] sm:$0xff]
    %v103 = vld [vmem:[%s1 + $0x288] sm:$0xff]
    %v104 = vld [vmem:[%s1 + $0x290] sm:$0xff]
    %v105 = vld [vmem:[%s1 + $0x298] sm:$0xff]
    %v106 = vld [vmem:[%s1 + $0x2a0] sm:$0xff]
    %v107 = vld [vmem:[%s1 + $0x2a8] sm:$0xff]
    %v108 = vld [vmem:[%s1 + $0x2b0] sm:$0xff]
    %v109 = vld [vmem:[%s1 + $0x2b8] sm:$0xff]
    %v110 = vld [vmem:[%s1 + $0x2c0] sm:$0xff]
    %v111 = vld [vmem:[%s1 + $0x2c8] sm:$0xff]
    %v112 = vld [vmem:[%s1 + $0x2d0] sm:$0xff]
    %v113 = vld [vmem:[%s1 + $0x2d8] sm:$0xff]
    %v114 = vld [vmem:[%s1 + $0x2e0] sm:$0xff]
    %v115 = vld [vmem:[%s1 + $0x2e8] sm:$0xff]
    %v116 = vld [vmem:[%s1 + $0x2f0] sm:$0xff]
    %v117 = vld [vmem:[%s1 + $0x2f8] sm:$0xff]
    %v118 = vld [vmem:[%s1 + $0x300] sm:$0xff]
    %v119 = vld [vmem:[%s1 + $0x308] sm:$0xff]
    %v120 = vld [vmem:[%s1 + $0x310] sm:$0xff]
    %v121 = vld [vmem:[%s1 + $0x318] sm:$0xff]
    %v122 = vld [vmem:[%s1 + $0x320] sm:$0xff]
    %v123 = vld [vmem:[%s1 + $0x328] sm:$0xff]
    %v124 = vld [vmem:[%s1 + $0x330] sm:$0xff]
    %v125 = vld [vmem:[%s1 + $0x338] sm:$0xff]
    %v126 = vld [vmem:[%s1 + $0x340] sm:$0xff]
    %v127 = vld [vmem:[%s1 + $0x348] sm:$0xff]
    %v128 = vld [vmem:[%s1 + $0x350] sm:$0xff]
    %v129 = vld [vmem:[%s1 + $0x358] sm:$0xff]
    %v130 = vld [vmem:[%s1 + $0x360] sm:$0xff]
    %v131 = vld [vmem:[%s1 + $0x368] sm:$0xff]
    %v132 = vld [vmem:[%s1 + $0x370] sm:$0xff]
    %v133 = vld [vmem:[%s1 + $0x378] sm:$0xff]
    %v134 = vld [vmem:[%s1 + $0x380] sm:$0xff]
    %v135 = vld [vmem:[%s1 + $0x388] sm:$0xff]
    %v136 = vld [vmem:[%s1 + $0x390] sm:$0xff]
    %v137 = vld [vmem:[%s1 + $0x398] sm:$0xff]
    %v138 = vld [vmem:[%s1 + $0x3a0] sm:$0xff]
    %v139 = vld [vmem:[%s1 + $0x3a8] sm:$0xff]
    %v140 = vld [vmem:[%s1 + $0x3b0] sm:$0xff]
    %v141 = vld [vmem:[%s1 + $0x3b8] sm:$0xff]
    %v142 = vld [vmem:[%s1 + $0x3c0] sm:$0xff]
    %v143 = vld [vmem:[%s1 + $0x3c8] sm:$0xff]
    %v144 = vld [vmem:[%s1 + $0x3d0] sm:$0xff]
    %v145 = vld [vmem:[%s1 + $0x3d8] sm:$0xff]
    %v146 = vld [vmem:[%s1 + $0x3e0] sm:$0xff]
    %v147 = vld [vmem:[%s1 + $0x3e8] sm:$0xff]
    %v148 = vld [vmem:[%s1 + $0x3f0] sm:$0xff]
    %v149 = vld [vmem:[%s1 + $0x3f8] sm:$0xff]
    %v150 = vld [vmem:[%s2] sm:$0xff]
    %v151 = vld [vmem:[%s2 + $0x8] sm:$0xff]
    %v152 = vld [vmem:[%s2 + $0x10] sm:$0xff]
    %v153 = vld [vmem:[%s2 + $0x18] sm:$0xff]
    %v154 = vld [vmem:[%s2 + $0x20] sm:$0xff]
    %v155 = vld [vmem:[%s2 + $0x28] sm:$0xff]
    %v156 = vld [vmem:[%s2 + $0x30] sm:$0xff]
    %v157 = vld [vmem:[%s2 + $0x38] sm:$0xff]
    %v158 = vld [vmem:[%s2 + $0x40] sm:$0xff]
    %v159 = vld [vmem:[%s2 + $0x48] sm:$0xff]
    %v160 = vld [vmem:[%s2 + $0x50] sm:$0xff]
    %v161 = vld [vmem:[%s2 + $0x58] sm:$0xff]
    %v162 = vld [vmem:[%s2 + $0x60] sm:$0xff]
    %v163 = vld [vmem:[%s2 + $0x68] sm:$0xff]
    %v164 = vld [vmem:[%s2 + $0x70] sm:$0xff]
    %v165 = vld [vmem:[%s2 + $0x78] sm:$0xff]
    %v166 = vld [vmem:[%s3] sm:$0x1]
    %167 = vmatprep.subr.mxu0 0.0
    %168 = vmatpush1.msra.mxu0 %v22
    %169 = vmatprep.subr.mxu0 0.0
    %170 = vmatpush1.msra.mxu0 %v23
    %171 = vmatprep.subr.mxu0 0.0
    %172 = vmatpush1.msra.mxu0 %v24
    %173 = vmatprep.subr.mxu0 0.0
    %174 = vmatpush1.msra.mxu0 %v25
    %175 = vmatprep.subr.mxu0 0.0
    %176 = vmatpush1.msra.mxu0 %v26
    %177 = vmatprep.subr.mxu0 0.0
    %178 = vmatpush1.msra.mxu0 %v27
    %179 = vmatprep.subr.mxu0 0.0
    %180 = vmatpush1.msra.mxu0 %v28
    %181 = vmatprep.subr.mxu0 0.0
    %182 = vmatpush1.msra.mxu0 %v29
    %183 = vmatprep.subr.mxu0 0.0
    %184 = vmatpush1.msra.mxu0 %v30
    %185 = vmatprep.subr.mxu0 0.0
    %186 = vmatpush1.msra.mxu0 %v31
    %187 = vmatprep.subr.mxu0 0.0
    %188 = vmatpush1.msra.mxu0 %v32
    %189 = vmatprep.subr.mxu0 0.0
    %190 = vmatpush1.msra.mxu0 %v33
    %191 = vmatprep.subr.mxu0 0.0
    %192 = vmatpush1.msra.mxu0 %v34
    %193 = vmatprep.subr.mxu0 0.0
    %194 = vmatpush1.msra.mxu0 %v35
    %195 = vmatprep.subr.mxu0 0.0
    %196 = vmatpush1.msra.mxu0 %v36
    %197 = vmatprep.subr.mxu0 0.0
    %198 = vmatpush1.msra.mxu0 %v37
    %199 = vmatprep.subr.mxu0 0.0
    %200 = vmatpush1.msra.mxu0 0.0
    %201 = vmatprep.subr.mxu0 0.0
    %202 = vmatpush1.msra.mxu0 0.0
    %203 = vmatprep.subr.mxu0 0.0
    %204 = vmatpush1.msra.mxu0 0.0
    %205 = vmatprep.subr.mxu0 0.0
    %206 = vmatpush1.msra.mxu0 0.0
    %207 = vmatprep.subr.mxu0 0.0
    %208 = vmatpush1.msra.mxu0 0.0
    %209 = vmatprep.subr.mxu0 0.0
    %210 = vmatpush1.msra.mxu0 0.0
    %211 = vmatprep.subr.mxu0 0.0
    %212 = vmatpush1.msra.mxu0 0.0
    %213 = vmatprep.subr.mxu0 0.0
    %214 = vmatpush1.msra.mxu0 0.0
    %215 = vmatprep.subr.mxu0 0.0
    %216 = vmatpush1.msra.mxu0 0.0
    %217 = vmatprep.subr.mxu0 0.0
    %218 = vmatpush1.msra.mxu0 0.0
    %219 = vmatprep.subr.mxu0 0.0
    %220 = vmatpush1.msra.mxu0 0.0
    %221 = vmatprep.subr.mxu0 0.0
    %222 = vmatpush1.msra.mxu0 0.0
    %223 = vmatprep.subr.mxu0 0.0
    %224 = vmatpush1.msra.mxu0 0.0
    %225 = vmatprep.subr.mxu0 0.0
    %226 = vmatpush1.msra.mxu0 0.0
    %227 = vmatprep.subr.mxu0 0.0
    %228 = vmatpush1.msra.mxu0 0.0
    %229 = vmatprep.subr.mxu0 0.0
    %230 = vmatpush1.msra.mxu0 0.0
    %231 = vmatprep.mubr.f32.mxu0 0.0
    %232 = vmatmul.mubr.f32.gmra.mrb[0].mxu0 %v18
    %v233 = vpop.f32.mrb[0].mxu0
    %v234 = vadd.f32 0.0, %v233
    %v235 = vpop.f32.mrb[0].mxu0
    %236 = vmatprep.mubr.f32.mxu0 0.0
    %237 = vmatmul.mubr.f32.gmra.mrb[0].mxu0 %v19
    %v238 = vpop.f32.mrb[0].mxu0
    %v239 = vadd.f32 0.0, %v238
    %v240 = vpop.f32.mrb[0].mxu0
    %241 = vmatprep.mubr.f32.mxu0 0.0
    %242 = vmatmul.mubr.f32.gmra.mrb[0].mxu0 %v20
    %v243 = vpop.f32.mrb[0].mxu0
    %v244 = vadd.f32 0.0, %v243
    %v245 = vpop.f32.mrb[0].mxu0
    %246 = vmatprep.mubr.f32.mxu0 0.0
    %247 = vmatmul.mubr.f32.gmra.mrb[0].mxu0 %v21
    %v248 = vpop.f32.mrb[0].mxu0
    %v249 = vadd.f32 0.0, %v248
    %v250 = vpop.f32.mrb[0].mxu0
    %251 = vdwg.mxu0
    %252 = vmatprep.subr.mxu0 0.0
    %253 = vmatpush1.msra.mxu0 %v38
    %254 = vmatprep.subr.mxu0 0.0
    %255 = vmatpush1.msra.mxu0 %v39
    %256 = vmatprep.subr.mxu0 0.0
    %257 = vmatpush1.msra.mxu0 %v40
    %258 = vmatprep.subr.mxu0 0.0
    %259 = vmatpush1.msra.mxu0 %v41
    %260 = vmatprep.subr.mxu0 0.0
    %261 = vmatpush1.msra.mxu0 %v42
    %262 = vmatprep.subr.mxu0 0.0
    %263 = vmatpush1.msra.mxu0 %v43
    %264 = vmatprep.subr.mxu0 0.0
    %265 = vmatpush1.msra.mxu0 %v44
    %266 = vmatprep.subr.mxu0 0.0
    %267 = vmatpush1.msra.mxu0 %v45
    %268 = vmatprep.subr.mxu0 0.0
    %269 = vmatpush1.msra.mxu0 %v46
    %270 = vmatprep.subr.mxu0 0.0
    %271 = vmatpush1.msra.mxu0 %v47
    %272 = vmatprep.subr.mxu0 0.0
    %273 = vmatpush1.msra.mxu0 %v48
    %274 = vmatprep.subr.mxu0 0.0
    %275 = vmatpush1.msra.mxu0 %v49
    %276 = vmatprep.subr.mxu0 0.0
    %277 = vmatpush1.msra.mxu0 %v50
    %278 = vmatprep.subr.mxu0 0.0
    %279 = vmatpush1.msra.mxu0 %v51
    %280 = vmatprep.subr.mxu0 0.0
    %281 = vmatpush1.msra.mxu0 %v52
    %282 = vmatprep.subr.mxu0 0.0
    %283 = vmatpush1.msra.mxu0 %v53
    %284 = vmatprep.subr.mxu0 0.0
    %285 = vmatpush1.msra.mxu0 0.0
    %286 = vmatprep.subr.mxu0 0.0
    %287 = vmatpush1.msra.mxu0 0.0
    %288 = vmatprep.subr.mxu0 0.0
    %289 = vmatpush1.msra.mxu0 0.0
    %290 = vmatprep.subr.mxu0 0.0
    %291 = vmatpush1.msra.mxu0 0.0
    %292 = vmatprep.subr.mxu0 0.0
    %293 = vmatpush1.msra.mxu0 0.0
    %294 = vmatprep.subr.mxu0 0.0
    %295 = vmatpush1.msra.mxu0 0.0
    %296 = vmatprep.subr.mxu0 0.0
    %297 = vmatpush1.msra.mxu0 0.0
    %298 = vmatprep.subr.mxu0 0.0
    %299 = vmatpush1.msra.mxu0 0.0
    %300 = vmatprep.subr.mxu0 0.0
    %301 = vmatpush1.msra.mxu0 0.0
    %302 = vmatprep.subr.mxu0 0.0
    %303 = vmatpush1.msra.mxu0 0.0
    %304 = vmatprep.subr.mxu0 0.0
    %305 = vmatpush1.msra.mxu0 0.0
    %306 = vmatprep.subr.mxu0 0.0
    %307 = vmatpush1.msra.mxu0 0.0
    %308 = vmatprep.subr.mxu0 0.0
    %309 = vmatpush1.msra.mxu0 0.0
    %310 = vmatprep.subr.mxu0 0.0
    %311 = vmatpush1.msra.mxu0 0.0
    %312 = vmatprep.subr.mxu0 0.0
    %313 = vmatpush1.msra.mxu0 0.0
    %314 = vmatprep.subr.mxu0 0.0
    %315 = vmatpush1.msra.mxu0 0.0
    %316 = vmatprep.mubr.f32.mxu0 0.0
    %317 = vmatmul.mubr.f32.gmra.mrb[0].mxu0 %v18
    %v318 = vpop.f32.mrb[0].mxu0
    %v319 = vadd.f32 0.0, %v318
    %v320 = vpop.f32.mrb[0].mxu0
    %321 = vmatprep.mubr.f32.mxu0 0.0
    %322 = vmatmul.mubr.f32.gmra.mrb[0].mxu0 %v19
    %v323 = vpop.f32.mrb[0].mxu0
    %v324 = vadd.f32 0.0, %v323
    %v325 = vpop.f32.mrb[0].mxu0
    %326 = vmatprep.mubr.f32.mxu0 0.0
    %327 = vmatmul.mubr.f32.gmra.mrb[0].mxu0 %v20
    %v328 = vpop.f32.mrb[0].mxu0
    %v329 = vadd.f32 0.0, %v328
    %v330 = vpop.f32.mrb[0].mxu0
    %331 = vmatprep.mubr.f32.mxu0 0.0
    %332 = vmatmul.mubr.f32.gmra.mrb[0].mxu0 %v21
    %v333 = vpop.f32.mrb[0].mxu0
    %v334 = vadd.f32 0.0, %v333
    %v335 = vpop.f32.mrb[0].mxu0
    %336 = vdwg.mxu0
    %337 = vmatprep.subr.mxu0 0.0
    %338 = vmatpush1.msra.mxu0 %v54
    %339 = vmatprep.subr.mxu0 0.0
    %340 = vmatpush1.msra.mxu0 %v55
    %341 = vmatprep.subr.mxu0 0.0
    %342 = vmatpush1.msra.mxu0 %v56
    %343 = vmatprep.subr.mxu0 0.0
    %344 = vmatpush1.msra.mxu0 %v57
    %345 = vmatprep.subr.mxu0 0.0
    %346 = vmatpush1.msra.mxu0 %v58
    %347 = vmatprep.subr.mxu0 0.0
    %348 = vmatpush1.msra.mxu0 %v59
    %349 = vmatprep.subr.mxu0 0.0
    %350 = vmatpush1.msra.mxu0 %v60
    %351 = vmatprep.subr.mxu0 0.0
    %352 = vmatpush1.msra.mxu0 %v61
    %353 = vmatprep.subr.mxu0 0.0
    %354 = vmatpush1.msra.mxu0 %v62
    %355 = vmatprep.subr.mxu0 0.0
    %356 = vmatpush1.msra.mxu0 %v63
    %357 = vmatprep.subr.mxu0 0.0
    %358 = vmatpush1.msra.mxu0 %v64
    %359 = vmatprep.subr.mxu0 0.0
    %360 = vmatpush1.msra.mxu0 %v65
    %361 = vmatprep.subr.mxu0 0.0
    %362 = vmatpush1.msra.mxu0 %v66
    %363 = vmatprep.subr.mxu0 0.0
    %364 = vmatpush1.msra.mxu0 %v67
    %365 = vmatprep.subr.mxu0 0.0
    %366 = vmatpush1.msra.mxu0 %v68
    %367 = vmatprep.subr.mxu0 0.0
    %368 = vmatpush1.msra.mxu0 %v69
    %369 = vmatprep.subr.mxu0 0.0
    %370 = vmatpush1.msra.mxu0 0.0
    %371 = vmatprep.subr.mxu0 0.0
    %372 = vmatpush1.msra.mxu0 0.0
    %373 = vmatprep.subr.mxu0 0.0
    %374 = vmatpush1.msra.mxu0 0.0
    %375 = vmatprep.subr.mxu0 0.0
    %376 = vmatpush1.msra.mxu0 0.0
    %377 = vmatprep.subr.mxu0 0.0
    %378 = vmatpush1.msra.mxu0 0.0
    %379 = vmatprep.subr.mxu0 0.0
    %380 = vmatpush1.msra.mxu0 0.0
    %381 = vmatprep.subr.mxu0 0.0
    %382 = vmatpush1.msra.mxu0 0.0
    %383 = vmatprep.subr.mxu0 0.0
    %384 = vmatpush1.msra.mxu0 0.0
    %385 = vmatprep.subr.mxu0 0.0
    %386 = vmatpush1.msra.mxu0 0.0
    %387 = vmatprep.subr.mxu0 0.0
    %388 = vmatpush1.msra.mxu0 0.0
    %389 = vmatprep.subr.mxu0 0.0
    %390 = vmatpush1.msra.mxu0 0.0
    %391 = vmatprep.subr.mxu0 0.0
    %392 = vmatpush1.msra.mxu0 0.0
    %393 = vmatprep.subr.mxu0 0.0
    %394 = vmatpush1.msra.mxu0 0.0
    %395 = vmatprep.subr.mxu0 0.0
    %396 = vmatpush1.msra.mxu0 0.0
    %397 = vmatprep.subr.mxu0 0.0
    %398 = vmatpush1.msra.mxu0 0.0
    %399 = vmatprep.subr.mxu0 0.0
    %400 = vmatpush1.msra.mxu0 0.0
    %401 = vmatprep.mubr.f32.mxu0 0.0
    %402 = vmatmul.mubr.f32.gmra.mrb[0].mxu0 %v18
    %v403 = vpop.f32.mrb[0].mxu0
    %v404 = vadd.f32 0.0, %v403
    %v405 = vpop.f32.mrb[0].mxu0
    %406 = vmatprep.mubr.f32.mxu0 0.0
    %407 = vmatmul.mubr.f32.gmra.mrb[0].mxu0 %v19
    %v408 = vpop.f32.mrb[0].mxu0
    %v409 = vadd.f32 0.0, %v408
    %v410 = vpop.f32.mrb[0].mxu0
    %411 = vmatprep.mubr.f32.mxu0 0.0
    %412 = vmatmul.mubr.f32.gmra.mrb[0].mxu0 %v20
    %v413 = vpop.f32.mrb[0].mxu0
    %v414 = vadd.f32 0.0, %v413
    %v415 = vpop.f32.mrb[0].mxu0
    %416 = vmatprep.mubr.f32.mxu0 0.0
    %417 = vmatmul.mubr.f32.gmra.mrb[0].mxu0 %v21
    %v418 = vpop.f32.mrb[0].mxu0
    %v419 = vadd.f32 0.0, %v418
    %v420 = vpop.f32.mrb[0].mxu0
    %421 = vdwg.mxu0
    %422 = vmatprep.subr.mxu0 0.0
    %423 = vmatpush1.msra.mxu0 %v70
    %424 = vmatprep.subr.mxu0 0.0
    %425 = vmatpush1.msra.mxu0 %v71
    %426 = vmatprep.subr.mxu0 0.0
    %427 = vmatpush1.msra.mxu0 %v72
    %428 = vmatprep.subr.mxu0 0.0
    %429 = vmatpush1.msra.mxu0 %v73
    %430 = vmatprep.subr.mxu0 0.0
    %431 = vmatpush1.msra.mxu0 %v74
    %432 = vmatprep.subr.mxu0 0.0
    %433 = vmatpush1.msra.mxu0 %v75
    %434 = vmatprep.subr.mxu0 0.0
    %435 = vmatpush1.msra.mxu0 %v76
    %436 = vmatprep.subr.mxu0 0.0
    %437 = vmatpush1.msra.mxu0 %v77
    %438 = vmatprep.subr.mxu0 0.0
    %439 = vmatpush1.msra.mxu0 %v78
    %440 = vmatprep.subr.mxu0 0.0
    %441 = vmatpush1.msra.mxu0 %v79
    %442 = vmatprep.subr.mxu0 0.0
    %443 = vmatpush1.msra.mxu0 %v80
    %444 = vmatprep.subr.mxu0 0.0
    %445 = vmatpush1.msra.mxu0 %v81
    %446 = vmatprep.subr.mxu0 0.0
    %447 = vmatpush1.msra.mxu0 %v82
    %448 = vmatprep.subr.mxu0 0.0
    %449 = vmatpush1.msra.mxu0 %v83
    %450 = vmatprep.subr.mxu0 0.0
    %451 = vmatpush1.msra.mxu0 %v84
    %452 = vmatprep.subr.mxu0 0.0
    %453 = vmatpush1.msra.mxu0 %v85
    %454 = vmatprep.subr.mxu0 0.0
    %455 = vmatpush1.msra.mxu0 0.0
    %456 = vmatprep.subr.mxu0 0.0
    %457 = vmatpush1.msra.mxu0 0.0
    %458 = vmatprep.subr.mxu0 0.0
    %459 = vmatpush1.msra.mxu0 0.0
    %460 = vmatprep.subr.mxu0 0.0
    %461 = vmatpush1.msra.mxu0 0.0
    %462 = vmatprep.subr.mxu0 0.0
    %463 = vmatpush1.msra.mxu0 0.0
    %464 = vmatprep.subr.mxu0 0.0
    %465 = vmatpush1.msra.mxu0 0.0
    %466 = vmatprep.subr.mxu0 0.0
    %467 = vmatpush1.msra.mxu0 0.0
    %468 = vmatprep.subr.mxu0 0.0
    %469 = vmatpush1.msra.mxu0 0.0
    %470 = vmatprep.subr.mxu0 0.0
    %471 = vmatpush1.msra.mxu0 0.0
    %472 = vmatprep.subr.mxu0 0.0
    %473 = vmatpush1.msra.mxu0 0.0
    %474 = vmatprep.subr.mxu0 0.0
    %475 = vmatpush1.msra.mxu0 0.0
    %476 = vmatprep.subr.mxu0 0.0
    %477 = vmatpush1.msra.mxu0 0.0
    %478 = vmatprep.subr.mxu0 0.0
    %479 = vmatpush1.msra.mxu0 0.0
    %480 = vmatprep.subr.mxu0 0.0
    %481 = vmatpush1.msra.mxu0 0.0
    %482 = vmatprep.subr.mxu0 0.0
    %483 = vmatpush1.msra.mxu0 0.0
    %484 = vmatprep.subr.mxu0 0.0
    %485 = vmatpush1.msra.mxu0 0.0
    %486 = vmatprep.mubr.f32.mxu0 0.0
    %487 = vmatmul.mubr.f32.gmra.mrb[0].mxu0 %v18
    %v488 = vpop.f32.mrb[0].mxu0
    %v489 = vadd.f32 0.0, %v488
    %v490 = vpop.f32.mrb[0].mxu0
    %491 = vmatprep.mubr.f32.mxu0 0.0
    %492 = vmatmul.mubr.f32.gmra.mrb[0].mxu0 %v19
    %v493 = vpop.f32.mrb[0].mxu0
    %v494 = vadd.f32 0.0, %v493
    %v495 = vpop.f32.mrb[0].mxu0
    %496 = vmatprep.mubr.f32.mxu0 0.0
    %497 = vmatmul.mubr.f32.gmra.mrb[0].mxu0 %v20
    %v498 = vpop.f32.mrb[0].mxu0
    %v499 = vadd.f32 0.0, %v498
    %v500 = vpop.f32.mrb[0].mxu0
    %501 = vmatprep.mubr.f32.mxu0 0.0
    %502 = vmatmul.mubr.f32.gmra.mrb[0].mxu0 %v21
    %v503 = vpop.f32.mrb[0].mxu0
    %v504 = vadd.f32 0.0, %v503
    %v505 = vpop.f32.mrb[0].mxu0
    %506 = vdwg.mxu0
    %507 = vmatprep.subr.mxu0 0.0
    %508 = vmatpush1.msra.mxu0 %v86
    %509 = vmatprep.subr.mxu0 0.0
    %510 = vmatpush1.msra.mxu0 %v87
    %511 = vmatprep.subr.mxu0 0.0
    %512 = vmatpush1.msra.mxu0 %v88
    %513 = vmatprep.subr.mxu0 0.0
    %514 = vmatpush1.msra.mxu0 %v89
    %515 = vmatprep.subr.mxu0 0.0
    %516 = vmatpush1.msra.mxu0 %v90
    %517 = vmatprep.subr.mxu0 0.0
    %518 = vmatpush1.msra.mxu0 %v91
    %519 = vmatprep.subr.mxu0 0.0
    %520 = vmatpush1.msra.mxu0 %v92
    %521 = vmatprep.subr.mxu0 0.0
    %522 = vmatpush1.msra.mxu0 %v93
    %523 = vmatprep.subr.mxu0 0.0
    %524 = vmatpush1.msra.mxu0 %v94
    %525 = vmatprep.subr.mxu0 0.0
    %526 = vmatpush1.msra.mxu0 %v95
    %527 = vmatprep.subr.mxu0 0.0
    %528 = vmatpush1.msra.mxu0 %v96
    %529 = vmatprep.subr.mxu0 0.0
    %530 = vmatpush1.msra.mxu0 %v97
    %531 = vmatprep.subr.mxu0 0.0
    %532 = vmatpush1.msra.mxu0 %v98
    %533 = vmatprep.subr.mxu0 0.0
    %534 = vmatpush1.msra.mxu0 %v99
    %535 = vmatprep.subr.mxu0 0.0
    %536 = vmatpush1.msra.mxu0 %v100
    %537 = vmatprep.subr.mxu0 0.0
    %538 = vmatpush1.msra.mxu0 %v101
    %539 = vmatprep.subr.mxu0 0.0
    %540 = vmatpush1.msra.mxu0 0.0
    %541 = vmatprep.subr.mxu0 0.0
    %542 = vmatpush1.msra.mxu0 0.0
    %543 = vmatprep.subr.mxu0 0.0
    %544 = vmatpush1.msra.mxu0 0.0
    %545 = vmatprep.subr.mxu0 0.0
    %546 = vmatpush1.msra.mxu0 0.0
    %547 = vmatprep.subr.mxu0 0.0
    %548 = vmatpush1.msra.mxu0 0.0
    %549 = vmatprep.subr.mxu0 0.0
    %550 = vmatpush1.msra.mxu0 0.0
    %551 = vmatprep.subr.mxu0 0.0
    %552 = vmatpush1.msra.mxu0 0.0
    %553 = vmatprep.subr.mxu0 0.0
    %554 = vmatpush1.msra.mxu0 0.0
    %555 = vmatprep.subr.mxu0 0.0
    %556 = vmatpush1.msra.mxu0 0.0
    %557 = vmatprep.subr.mxu0 0.0
    %558 = vmatpush1.msra.mxu0 0.0
    %559 = vmatprep.subr.mxu0 0.0
    %560 = vmatpush1.msra.mxu0 0.0
    %561 = vmatprep.subr.mxu0 0.0
    %562 = vmatpush1.msra.mxu0 0.0
    %563 = vmatprep.subr.mxu0 0.0
    %564 = vmatpush1.msra.mxu0 0.0
    %565 = vmatprep.subr.mxu0 0.0
    %566 = vmatpush1.msra.mxu0 0.0
    %567 = vmatprep.subr.mxu0 0.0
    %568 = vmatpush1.msra.mxu0 0.0
    %569 = vmatprep.subr.mxu0 0.0
    %570 = vmatpush1.msra.mxu0 0.0
    %571 = vmatprep.mubr.f32.mxu0 0.0
    %572 = vmatmul.mubr.f32.gmra.mrb[0].mxu0 %v18
    %v573 = vpop.f32.mrb[0].mxu0
    %v574 = vadd.f32 0.0, %v573
    %v575 = vpop.f32.mrb[0].mxu0
    %576 = vmatprep.mubr.f32.mxu0 0.0
    %577 = vmatmul.mubr.f32.gmra.mrb[0].mxu0 %v19
    %v578 = vpop.f32.mrb[0].mxu0
    %v579 = vadd.f32 0.0, %v578
    %v580 = vpop.f32.mrb[0].mxu0
    %581 = vmatprep.mubr.f32.mxu0 0.0
    %582 = vmatmul.mubr.f32.gmra.mrb[0].mxu0 %v20
    %v583 = vpop.f32.mrb[0].mxu0
    %v584 = vadd.f32 0.0, %v583
    %v585 = vpop.f32.mrb[0].mxu0
    %586 = vmatprep.mubr.f32.mxu0 0.0
    %587 = vmatmul.mubr.f32.gmra.mrb[0].mxu0 %v21
    %v588 = vpop.f32.mrb[0].mxu0
    %v589 = vadd.f32 0.0, %v588
    %v590 = vpop.f32.mrb[0].mxu0
    %591 = vdwg.mxu0
    %592 = vmatprep.subr.mxu0 0.0
    %593 = vmatpush1.msra.mxu0 %v102
    %594 = vmatprep.subr.mxu0 0.0
    %595 = vmatpush1.msra.mxu0 %v103
    %596 = vmatprep.subr.mxu0 0.0
    %597 = vmatpush1.msra.mxu0 %v104
    %598 = vmatprep.subr.mxu0 0.0
    %599 = vmatpush1.msra.mxu0 %v105
    %600 = vmatprep.subr.mxu0 0.0
    %601 = vmatpush1.msra.mxu0 %v106
    %602 = vmatprep.subr.mxu0 0.0
    %603 = vmatpush1.msra.mxu0 %v107
    %604 = vmatprep.subr.mxu0 0.0
    %605 = vmatpush1.msra.mxu0 %v108
    %606 = vmatprep.subr.mxu0 0.0
    %607 = vmatpush1.msra.mxu0 %v109
    %608 = vmatprep.subr.mxu0 0.0
    %609 = vmatpush1.msra.mxu0 %v110
    %610 = vmatprep.subr.mxu0 0.0
    %611 = vmatpush1.msra.mxu0 %v111
    %612 = vmatprep.subr.mxu0 0.0
    %613 = vmatpush1.msra.mxu0 %v112
    %614 = vmatprep.subr.mxu0 0.0
    %615 = vmatpush1.msra.mxu0 %v113
    %616 = vmatprep.subr.mxu0 0.0
    %617 = vmatpush1.msra.mxu0 %v114
    %618 = vmatprep.subr.mxu0 0.0
    %619 = vmatpush1.msra.mxu0 %v115
    %620 = vmatprep.subr.mxu0 0.0
    %621 = vmatpush1.msra.mxu0 %v116
    %622 = vmatprep.subr.mxu0 0.0
    %623 = vmatpush1.msra.mxu0 %v117
    %624 = vmatprep.subr.mxu0 0.0
    %625 = vmatpush1.msra.mxu0 0.0
    %626 = vmatprep.subr.mxu0 0.0
    %627 = vmatpush1.msra.mxu0 0.0
    %628 = vmatprep.subr.mxu0 0.0
    %629 = vmatpush1.msra.mxu0 0.0
    %630 = vmatprep.subr.mxu0 0.0
    %631 = vmatpush1.msra.mxu0 0.0
    %632 = vmatprep.subr.mxu0 0.0
    %633 = vmatpush1.msra.mxu0 0.0
    %634 = vmatprep.subr.mxu0 0.0
    %635 = vmatpush1.msra.mxu0 0.0
    %636 = vmatprep.subr.mxu0 0.0
    %637 = vmatpush1.msra.mxu0 0.0
    %638 = vmatprep.subr.mxu0 0.0
    %639 = vmatpush1.msra.mxu0 0.0
    %640 = vmatprep.subr.mxu0 0.0
    %641 = vmatpush1.msra.mxu0 0.0
    %642 = vmatprep.subr.mxu0 0.0
    %643 = vmatpush1.msra.mxu0 0.0
    %644 = vmatprep.subr.mxu0 0.0
    %645 = vmatpush1.msra.mxu0 0.0
    %646 = vmatprep.subr.mxu0 0.0
    %647 = vmatpush1.msra.mxu0 0.0
    %648 = vmatprep.subr.mxu0 0.0
    %649 = vmatpush1.msra.mxu0 0.0
    %650 = vmatprep.subr.mxu0 0.0
    %651 = vmatpush1.msra.mxu0 0.0
    %652 = vmatprep.subr.mxu0 0.0
    %653 = vmatpush1.msra.mxu0 0.0
    %654 = vmatprep.subr.mxu0 0.0
    %655 = vmatpush1.msra.mxu0 0.0
    %656 = vmatprep.mubr.f32.mxu0 0.0
    %657 = vmatmul.mubr.f32.gmra.mrb[0].mxu0 %v18
    %v658 = vpop.f32.mrb[0].mxu0
    %v659 = vadd.f32 0.0, %v658
    %v660 = vpop.f32.mrb[0].mxu0
    %661 = vmatprep.mubr.f32.mxu0 0.0
    %662 = vmatmul.mubr.f32.gmra.mrb[0].mxu0 %v19
    %v663 = vpop.f32.mrb[0].mxu0
    %v664 = vadd.f32 0.0, %v663
    %v665 = vpop.f32.mrb[0].mxu0
    %666 = vmatprep.mubr.f32.mxu0 0.0
    %667 = vmatmul.mubr.f32.gmra.mrb[0].mxu0 %v20
    %v668 = vpop.f32.mrb[0].mxu0
    %v669 = vadd.f32 0.0, %v668
    %v670 = vpop.f32.mrb[0].mxu0
    %671 = vmatprep.mubr.f32.mxu0 0.0
    %672 = vmatmul.mubr.f32.gmra.mrb[0].mxu0 %v21
    %v673 = vpop.f32.mrb[0].mxu0
    %v674 = vadd.f32 0.0, %v673
    %v675 = vpop.f32.mrb[0].mxu0
    %676 = vdwg.mxu0
    %677 = vmatprep.subr.mxu0 0.0
    %678 = vmatpush1.msra.mxu0 %v118
    %679 = vmatprep.subr.mxu0 0.0
    %680 = vmatpush1.msra.mxu0 %v119
    %681 = vmatprep.subr.mxu0 0.0
    %682 = vmatpush1.msra.mxu0 %v120
    %683 = vmatprep.subr.mxu0 0.0
    %684 = vmatpush1.msra.mxu0 %v121
    %685 = vmatprep.subr.mxu0 0.0
    %686 = vmatpush1.msra.mxu0 %v122
    %687 = vmatprep.subr.mxu0 0.0
    %688 = vmatpush1.msra.mxu0 %v123
    %689 = vmatprep.subr.mxu0 0.0
    %690 = vmatpush1.msra.mxu0 %v124
    %691 = vmatprep.subr.mxu0 0.0
    %692 = vmatpush1.msra.mxu0 %v125
    %693 = vmatprep.subr.mxu0 0.0
    %694 = vmatpush1.msra.mxu0 %v126
    %695 = vmatprep.subr.mxu0 0.0
    %696 = vmatpush1.msra.mxu0 %v127
    %697 = vmatprep.subr.mxu0 0.0
    %698 = vmatpush1.msra.mxu0 %v128
    %699 = vmatprep.subr.mxu0 0.0
    %700 = vmatpush1.msra.mxu0 %v129
    %701 = vmatprep.subr.mxu0 0.0
    %702 = vmatpush1.msra.mxu0 %v130
    %703 = vmatprep.subr.mxu0 0.0
    %704 = vmatpush1.msra.mxu0 %v131
    %705 = vmatprep.subr.mxu0 0.0
    %706 = vmatpush1.msra.mxu0 %v132
    %707 = vmatprep.subr.mxu0 0.0
    %708 = vmatpush1.msra.mxu0 %v133
    %709 = vmatprep.subr.mxu0 0.0
    %710 = vmatpush1.msra.mxu0 0.0
    %711 = vmatprep.subr.mxu0 0.0
    %712 = vmatpush1.msra.mxu0 0.0
    %713 = vmatprep.subr.mxu0 0.0
    %714 = vmatpush1.msra.mxu0 0.0
    %715 = vmatprep.subr.mxu0 0.0
    %716 = vmatpush1.msra.mxu0 0.0
    %717 = vmatprep.subr.mxu0 0.0
    %718 = vmatpush1.msra.mxu0 0.0
    %719 = vmatprep.subr.mxu0 0.0
    %720 = vmatpush1.msra.mxu0 0.0
    %721 = vmatprep.subr.mxu0 0.0
    %722 = vmatpush1.msra.mxu0 0.0
    %723 = vmatprep.subr.mxu0 0.0
    %724 = vmatpush1.msra.mxu0 0.0
    %725 = vmatprep.subr.mxu0 0.0
    %726 = vmatpush1.msra.mxu0 0.0
    %727 = vmatprep.subr.mxu0 0.0
    %728 = vmatpush1.msra.mxu0 0.0
    %729 = vmatprep.subr.mxu0 0.0
    %730 = vmatpush1.msra.mxu0 0.0
    %731 = vmatprep.subr.mxu0 0.0
    %732 = vmatpush1.msra.mxu0 0.0
    %733 = vmatprep.subr.mxu0 0.0
    %734 = vmatpush1.msra.mxu0 0.0
    %735 = vmatprep.subr.mxu0 0.0
    %736 = vmatpush1.msra.mxu0 0.0
    %737 = vmatprep.subr.mxu0 0.0
    %738 = vmatpush1.msra.mxu0 0.0
    %739 = vmatprep.subr.mxu0 0.0
    %740 = vmatpush1.msra.mxu0 0.0
    %741 = vmatprep.mubr.f32.mxu0 0.0
    %742 = vmatmul.mubr.f32.gmra.mrb[0].mxu0 %v18
    %v743 = vpop.f32.mrb[0].mxu0
    %v744 = vadd.f32 0.0, %v743
    %v745 = vpop.f32.mrb[0].mxu0
    %746 = vmatprep.mubr.f32.mxu0 0.0
    %747 = vmatmul.mubr.f32.gmra.mrb[0].mxu0 %v19
    %v748 = vpop.f32.mrb[0].mxu0
    %v749 = vadd.f32 0.0, %v748
    %v750 = vpop.f32.mrb[0].mxu0
    %751 = vmatprep.mubr.f32.mxu0 0.0
    %752 = vmatmul.mubr.f32.gmra.mrb[0].mxu0 %v20
    %v753 = vpop.f32.mrb[0].mxu0
    %v754 = vadd.f32 0.0, %v753
    %v755 = vpop.f32.mrb[0].mxu0
    %756 = vmatprep.mubr.f32.mxu0 0.0
    %757 = vmatmul.mubr.f32.gmra.mrb[0].mxu0 %v21
    %v758 = vpop.f32.mrb[0].mxu0
    %v759 = vadd.f32 0.0, %v758
    %v760 = vpop.f32.mrb[0].mxu0
    %761 = vdwg.mxu0
    %762 = vmatprep.subr.mxu0 0.0
    %763 = vmatpush1.msra.mxu0 %v134
    %764 = vmatprep.subr.mxu0 0.0
    %765 = vmatpush1.msra.mxu0 %v135
    %766 = vmatprep.subr.mxu0 0.0
    %767 = vmatpush1.msra.mxu0 %v136
    %768 = vmatprep.subr.mxu0 0.0
    %769 = vmatpush1.msra.mxu0 %v137
    %770 = vmatprep.subr.mxu0 0.0
    %771 = vmatpush1.msra.mxu0 %v138
    %772 = vmatprep.subr.mxu0 0.0
    %773 = vmatpush1.msra.mxu0 %v139
    %774 = vmatprep.subr.mxu0 0.0
    %775 = vmatpush1.msra.mxu0 %v140
    %776 = vmatprep.subr.mxu0 0.0
    %777 = vmatpush1.msra.mxu0 %v141
    %778 = vmatprep.subr.mxu0 0.0
    %779 = vmatpush1.msra.mxu0 %v142
    %780 = vmatprep.subr.mxu0 0.0
    %781 = vmatpush1.msra.mxu0 %v143
    %782 = vmatprep.subr.mxu0 0.0
    %783 = vmatpush1.msra.mxu0 %v144
    %784 = vmatprep.subr.mxu0 0.0
    %785 = vmatpush1.msra.mxu0 %v145
    %786 = vmatprep.subr.mxu0 0.0
    %787 = vmatpush1.msra.mxu0 %v146
    %788 = vmatprep.subr.mxu0 0.0
    %789 = vmatpush1.msra.mxu0 %v147
    %790 = vmatprep.subr.mxu0 0.0
    %791 = vmatpush1.msra.mxu0 %v148
    %792 = vmatprep.subr.mxu0 0.0
    %793 = vmatpush1.msra.mxu0 %v149
    %794 = vmatprep.subr.mxu0 0.0
    %795 = vmatpush1.msra.mxu0 0.0
    %796 = vmatprep.subr.mxu0 0.0
    %797 = vmatpush1.msra.mxu0 0.0
    %798 = vmatprep.subr.mxu0 0.0
    %799 = vmatpush1.msra.mxu0 0.0
    %800 = vmatprep.subr.mxu0 0.0
    %801 = vmatpush1.msra.mxu0 0.0
    %802 = vmatprep.subr.mxu0 0.0
    %803 = vmatpush1.msra.mxu0 0.0
    %804 = vmatprep.subr.mxu0 0.0
    %805 = vmatpush1.msra.mxu0 0.0
    %806 = vmatprep.subr.mxu0 0.0
    %807 = vmatpush1.msra.mxu0 0.0
    %808 = vmatprep.subr.mxu0 0.0
    %809 = vmatpush1.msra.mxu0 0.0
    %810 = vmatprep.subr.mxu0 0.0
    %811 = vmatpush1.msra.mxu0 0.0
    %812 = vmatprep.subr.mxu0 0.0
    %813 = vmatpush1.msra.mxu0 0.0
    %814 = vmatprep.subr.mxu0 0.0
    %815 = vmatpush1.msra.mxu0 0.0
    %816 = vmatprep.subr.mxu0 0.0
    %817 = vmatpush1.msra.mxu0 0.0
    %818 = vmatprep.subr.mxu0 0.0
    %819 = vmatpush1.msra.mxu0 0.0
    %820 = vmatprep.subr.mxu0 0.0
    %821 = vmatpush1.msra.mxu0 0.0
    %822 = vmatprep.subr.mxu0 0.0
    %823 = vmatpush1.msra.mxu0 0.0
    %824 = vmatprep.subr.mxu0 0.0
    %825 = vmatpush1.msra.mxu0 0.0
    %826 = vmatprep.mubr.f32.mxu0 0.0
    %827 = vmatmul.mubr.f32.gmra.mrb[0].mxu0 %v18
    %v828 = vpop.f32.mrb[0].mxu0
    %v829 = vadd.f32 0.0, %v828
    %v830 = vpop.f32.mrb[0].mxu0
    %831 = vmatprep.mubr.f32.mxu0 0.0
    %832 = vmatmul.mubr.f32.gmra.mrb[0].mxu0 %v19
    %v833 = vpop.f32.mrb[0].mxu0
    %v834 = vadd.f32 0.0, %v833
    %v835 = vpop.f32.mrb[0].mxu0
    %836 = vmatprep.mubr.f32.mxu0 0.0
    %837 = vmatmul.mubr.f32.gmra.mrb[0].mxu0 %v20
    %v838 = vpop.f32.mrb[0].mxu0
    %v839 = vadd.f32 0.0, %v838
    %v840 = vpop.f32.mrb[0].mxu0
    %841 = vmatprep.mubr.f32.mxu0 0.0
    %842 = vmatmul.mubr.f32.gmra.mrb[0].mxu0 %v21
    %v843 = vpop.f32.mrb[0].mxu0
    %v844 = vadd.f32 0.0, %v843
    %v845 = vpop.f32.mrb[0].mxu0
    %846 = vdwg.mxu0
    %849 = vrot.lane.b32.xlu0 %v234, 112
    %v850 = vpop.permute.xlu0 %849
    %851 = vrot.lane.b32.xlu0 %v239, 112
    %v852 = vpop.permute.xlu0 %851
    %vm853 = vcmask 130048
    %v854 = vsel %vm853, %v234, 0
    %v856 = vsel %vm853, %v239, 0
    %v858 = vsel %vm853, %v850, 0
    %v860 = vsel %vm853, %v852, 0
    %862 = vmatprep.subr.mxu0 0.0
    %863 = vmatpush1.xpose.msra.mxu0 %v858
    %864 = vmatprep.subr.mxu0 0.0
    %865 = vmatpush1.xpose.msra.mxu0 %v860
    %866 = vmatprep.subr.mxu0 0.0
    %867 = vmatpush1.xpose.msra.mxu0 0.0
    %868 = vmatprep.subr.mxu0 0.0
    %869 = vmatpush1.xpose.msra.mxu0 0.0
    %870 = vmatprep.subr.mxu0 0.0
    %871 = vmatpush1.xpose.msra.mxu0 0.0
    %872 = vmatprep.subr.mxu0 0.0
    %873 = vmatpush1.xpose.msra.mxu0 0.0
    %874 = vmatprep.subr.mxu0 0.0
    %875 = vmatpush1.xpose.msra.mxu0 0.0
    %876 = vmatprep.subr.mxu0 0.0
    %877 = vmatpush1.xpose.msra.mxu0 0.0
    %878 = vmatprep.subr.mxu0 0.0
    %879 = vmatpush1.xpose.msra.mxu0 0.0
    %880 = vmatprep.subr.mxu0 0.0
    %881 = vmatpush1.xpose.msra.mxu0 0.0
    %882 = vmatprep.subr.mxu0 0.0
    %883 = vmatpush1.xpose.msra.mxu0 0.0
    %884 = vmatprep.subr.mxu0 0.0
    %885 = vmatpush1.xpose.msra.mxu0 0.0
    %886 = vmatprep.subr.mxu0 0.0
    %887 = vmatpush1.xpose.msra.mxu0 0.0
    %888 = vmatprep.subr.mxu0 0.0
    %889 = vmatpush1.xpose.msra.mxu0 0.0
    %890 = vmatprep.subr.mxu0 0.0
    %891 = vmatpush1.xpose.msra.mxu0 0.0
    %892 = vmatprep.subr.mxu0 0.0
    %893 = vmatpush1.xpose.msra.mxu0 0.0
    %894 = vmatprep.subr.mxu0 0.0
    %895 = vmatpush1.xpose.msra.mxu0 0.0
    %896 = vmatprep.subr.mxu0 0.0
    %897 = vmatpush1.xpose.msra.mxu0 0.0
    %898 = vmatprep.subr.mxu0 0.0
    %899 = vmatpush1.xpose.msra.mxu0 0.0
    %900 = vmatprep.subr.mxu0 0.0
    %901 = vmatpush1.xpose.msra.mxu0 0.0
    %902 = vmatprep.subr.mxu0 0.0
    %903 = vmatpush1.xpose.msra.mxu0 0.0
    %904 = vmatprep.subr.mxu0 0.0
    %905 = vmatpush1.xpose.msra.mxu0 0.0
    %906 = vmatprep.subr.mxu0 0.0
    %907 = vmatpush1.xpose.msra.mxu0 0.0
    %908 = vmatprep.subr.mxu0 0.0
    %909 = vmatpush1.xpose.msra.mxu0 0.0
    %910 = vmatprep.subr.mxu0 0.0
    %911 = vmatpush1.xpose.msra.mxu0 0.0
    %912 = vmatprep.subr.mxu0 0.0
    %913 = vmatpush1.xpose.msra.mxu0 0.0
    %914 = vmatprep.subr.mxu0 0.0
    %915 = vmatpush1.xpose.msra.mxu0 0.0
    %916 = vmatprep.subr.mxu0 0.0
    %917 = vmatpush1.xpose.msra.mxu0 0.0
    %918 = vmatprep.subr.mxu0 0.0
    %919 = vmatpush1.xpose.msra.mxu0 0.0
    %920 = vmatprep.subr.mxu0 0.0
    %921 = vmatpush1.xpose.msra.mxu0 0.0
    %922 = vmatprep.subr.mxu0 0.0
    %923 = vmatpush1.xpose.msra.mxu0 0.0
    %924 = vmatprep.subr.mxu0 0.0
    %925 = vmatpush1.xpose.msra.mxu0 0.0
    %926 = vmatprep.mubr.f32.mxu0 0.0
    %927 = vmatmul.mubr.f32.gmra.mrb[0].mxu0 %v854
    %v928 = vpop.f32.mrb[0].mxu0
    %v929 = vadd.f32 0.0, %v928
    %v930 = vpop.f32.mrb[0].mxu0
    %931 = vmatprep.mubr.f32.mxu0 0.0
    %932 = vmatmul.mubr.f32.gmra.mrb[0].mxu0 %v856
    %v933 = vpop.f32.mrb[0].mxu0
    %v934 = vadd.f32 0.0, %v933
    %v935 = vpop.f32.mrb[0].mxu0
    %936 = vdwg.mxu0
    %939 = vrot.lane.b32.xlu0 %v319, 112
    %v940 = vpop.permute.xlu0 %939
    %941 = vrot.lane.b32.xlu0 %v324, 112
    %v942 = vpop.permute.xlu0 %941
    %v943 = vsel %vm853, %v319, 0
    %v945 = vsel %vm853, %v324, 0
    %v947 = vsel %vm853, %v940, 0
    %v949 = vsel %vm853, %v942, 0
    %951 = vmatprep.subr.mxu0 0.0
    %952 = vmatpush1.xpose.msra.mxu0 %v947
    %953 = vmatprep.subr.mxu0 0.0
    %954 = vmatpush1.xpose.msra.mxu0 %v949
    %955 = vmatprep.subr.mxu0 0.0
    %956 = vmatpush1.xpose.msra.mxu0 0.0
    %957 = vmatprep.subr.mxu0 0.0
    %958 = vmatpush1.xpose.msra.mxu0 0.0
    %959 = vmatprep.subr.mxu0 0.0
    %960 = vmatpush1.xpose.msra.mxu0 0.0
    %961 = vmatprep.subr.mxu0 0.0
    %962 = vmatpush1.xpose.msra.mxu0 0.0
    %963 = vmatprep.subr.mxu0 0.0
    %964 = vmatpush1.xpose.msra.mxu0 0.0
    %965 = vmatprep.subr.mxu0 0.0
    %966 = vmatpush1.xpose.msra.mxu0 0.0
    %967 = vmatprep.subr.mxu0 0.0
    %968 = vmatpush1.xpose.msra.mxu0 0.0
    %969 = vmatprep.subr.mxu0 0.0
    %970 = vmatpush1.xpose.msra.mxu0 0.0
    %971 = vmatprep.subr.mxu0 0.0
    %972 = vmatpush1.xpose.msra.mxu0 0.0
    %973 = vmatprep.subr.mxu0 0.0
    %974 = vmatpush1.xpose.msra.mxu0 0.0
    %975 = vmatprep.subr.mxu0 0.0
    %976 = vmatpush1.xpose.msra.mxu0 0.0
    %977 = vmatprep.subr.mxu0 0.0
    %978 = vmatpush1.xpose.msra.mxu0 0.0
    %979 = vmatprep.subr.mxu0 0.0
    %980 = vmatpush1.xpose.msra.mxu0 0.0
    %981 = vmatprep.subr.mxu0 0.0
    %982 = vmatpush1.xpose.msra.mxu0 0.0
    %983 = vmatprep.subr.mxu0 0.0
    %984 = vmatpush1.xpose.msra.mxu0 0.0
    %985 = vmatprep.subr.mxu0 0.0
    %986 = vmatpush1.xpose.msra.mxu0 0.0
    %987 = vmatprep.subr.mxu0 0.0
    %988 = vmatpush1.xpose.msra.mxu0 0.0
    %989 = vmatprep.subr.mxu0 0.0
    %990 = vmatpush1.xpose.msra.mxu0 0.0
    %991 = vmatprep.subr.mxu0 0.0
    %992 = vmatpush1.xpose.msra.mxu0 0.0
    %993 = vmatprep.subr.mxu0 0.0
    %994 = vmatpush1.xpose.msra.mxu0 0.0
    %995 = vmatprep.subr.mxu0 0.0
    %996 = vmatpush1.xpose.msra.mxu0 0.0
    %997 = vmatprep.subr.mxu0 0.0
    %998 = vmatpush1.xpose.msra.mxu0 0.0
    %999 = vmatprep.subr.mxu0 0.0
    %1000 = vmatpush1.xpose.msra.mxu0 0.0
    %1001 = vmatprep.subr.mxu0 0.0
    %1002 = vmatpush1.xpose.msra.mxu0 0.0
    %1003 = vmatprep.subr.mxu0 0.0
    %1004 = vmatpush1.xpose.msra.mxu0 0.0
    %1005 = vmatprep.subr.mxu0 0.0
    %1006 = vmatpush1.xpose.msra.mxu0 0.0
    %1007 = vmatprep.subr.mxu0 0.0
    %1008 = vmatpush1.xpose.msra.mxu0 0.0
    %1009 = vmatprep.subr.mxu0 0.0
    %1010 = vmatpush1.xpose.msra.mxu0 0.0
    %1011 = vmatprep.subr.mxu0 0.0
    %1012 = vmatpush1.xpose.msra.mxu0 0.0
    %1013 = vmatprep.subr.mxu0 0.0
    %1014 = vmatpush1.xpose.msra.mxu0 0.0
    %1015 = vmatprep.mubr.f32.mxu0 0.0
    %1016 = vmatmul.mubr.f32.gmra.mrb[0].mxu0 %v943
    %v1017 = vpop.f32.mrb[0].mxu0
    %v1018 = vadd.f32 0.0, %v1017
    %v1019 = vpop.f32.mrb[0].mxu0
    %1020 = vmatprep.mubr.f32.mxu0 0.0
    %1021 = vmatmul.mubr.f32.gmra.mrb[0].mxu0 %v945
    %v1022 = vpop.f32.mrb[0].mxu0
    %v1023 = vadd.f32 0.0, %v1022
    %v1024 = vpop.f32.mrb[0].mxu0
    %1025 = vdwg.mxu0
    %1028 = vrot.lane.b32.xlu0 %v404, 112
    %v1029 = vpop.permute.xlu0 %1028
    %1030 = vrot.lane.b32.xlu0 %v409, 112
    %v1031 = vpop.permute.xlu0 %1030
    %v1032 = vsel %vm853, %v404, 0
    %v1034 = vsel %vm853, %v409, 0
    %v1036 = vsel %vm853, %v1029, 0
    %v1038 = vsel %vm853, %v1031, 0
    %1040 = vmatprep.subr.mxu0 0.0
    %1041 = vmatpush1.xpose.msra.mxu0 %v1036
    %1042 = vmatprep.subr.mxu0 0.0
    %1043 = vmatpush1.xpose.msra.mxu0 %v1038
    %1044 = vmatprep.subr.mxu0 0.0
    %1045 = vmatpush1.xpose.msra.mxu0 0.0
    %1046 = vmatprep.subr.mxu0 0.0
    %1047 = vmatpush1.xpose.msra.mxu0 0.0
    %1048 = vmatprep.subr.mxu0 0.0
    %1049 = vmatpush1.xpose.msra.mxu0 0.0
    %1050 = vmatprep.subr.mxu0 0.0
    %1051 = vmatpush1.xpose.msra.mxu0 0.0
    %1052 = vmatprep.subr.mxu0 0.0
    %1053 = vmatpush1.xpose.msra.mxu0 0.0
    %1054 = vmatprep.subr.mxu0 0.0
    %1055 = vmatpush1.xpose.msra.mxu0 0.0
    %1056 = vmatprep.subr.mxu0 0.0
    %1057 = vmatpush1.xpose.msra.mxu0 0.0
    %1058 = vmatprep.subr.mxu0 0.0
    %1059 = vmatpush1.xpose.msra.mxu0 0.0
    %1060 = vmatprep.subr.mxu0 0.0
    %1061 = vmatpush1.xpose.msra.mxu0 0.0
    %1062 = vmatprep.subr.mxu0 0.0
    %1063 = vmatpush1.xpose.msra.mxu0 0.0
    %1064 = vmatprep.subr.mxu0 0.0
    %1065 = vmatpush1.xpose.msra.mxu0 0.0
    %1066 = vmatprep.subr.mxu0 0.0
    %1067 = vmatpush1.xpose.msra.mxu0 0.0
    %1068 = vmatprep.subr.mxu0 0.0
    %1069 = vmatpush1.xpose.msra.mxu0 0.0
    %1070 = vmatprep.subr.mxu0 0.0
    %1071 = vmatpush1.xpose.msra.mxu0 0.0
    %1072 = vmatprep.subr.mxu0 0.0
    %1073 = vmatpush1.xpose.msra.mxu0 0.0
    %1074 = vmatprep.subr.mxu0 0.0
    %1075 = vmatpush1.xpose.msra.mxu0 0.0
    %1076 = vmatprep.subr.mxu0 0.0
    %1077 = vmatpush1.xpose.msra.mxu0 0.0
    %1078 = vmatprep.subr.mxu0 0.0
    %1079 = vmatpush1.xpose.msra.mxu0 0.0
    %1080 = vmatprep.subr.mxu0 0.0
    %1081 = vmatpush1.xpose.msra.mxu0 0.0
    %1082 = vmatprep.subr.mxu0 0.0
    %1083 = vmatpush1.xpose.msra.mxu0 0.0
    %1084 = vmatprep.subr.mxu0 0.0
    %1085 = vmatpush1.xpose.msra.mxu0 0.0
    %1086 = vmatprep.subr.mxu0 0.0
    %1087 = vmatpush1.xpose.msra.mxu0 0.0
    %1088 = vmatprep.subr.mxu0 0.0
    %1089 = vmatpush1.xpose.msra.mxu0 0.0
    %1090 = vmatprep.subr.mxu0 0.0
    %1091 = vmatpush1.xpose.msra.mxu0 0.0
    %1092 = vmatprep.subr.mxu0 0.0
    %1093 = vmatpush1.xpose.msra.mxu0 0.0
    %1094 = vmatprep.subr.mxu0 0.0
    %1095 = vmatpush1.xpose.msra.mxu0 0.0
    %1096 = vmatprep.subr.mxu0 0.0
    %1097 = vmatpush1.xpose.msra.mxu0 0.0
    %1098 = vmatprep.subr.mxu0 0.0
    %1099 = vmatpush1.xpose.msra.mxu0 0.0
    %1100 = vmatprep.subr.mxu0 0.0
    %1101 = vmatpush1.xpose.msra.mxu0 0.0
    %1102 = vmatprep.subr.mxu0 0.0
    %1103 = vmatpush1.xpose.msra.mxu0 0.0
    %1104 = vmatprep.mubr.f32.mxu0 0.0
    %1105 = vmatmul.mubr.f32.gmra.mrb[0].mxu0 %v1032
    %v1106 = vpop.f32.mrb[0].mxu0
    %v1107 = vadd.f32 0.0, %v1106
    %v1108 = vpop.f32.mrb[0].mxu0
    %1109 = vmatprep.mubr.f32.mxu0 0.0
    %1110 = vmatmul.mubr.f32.gmra.mrb[0].mxu0 %v1034
    %v1111 = vpop.f32.mrb[0].mxu0
    %v1112 = vadd.f32 0.0, %v1111
    %v1113 = vpop.f32.mrb[0].mxu0
    %1114 = vdwg.mxu0
    %1117 = vrot.lane.b32.xlu0 %v489, 112
    %v1118 = vpop.permute.xlu0 %1117
    %1119 = vrot.lane.b32.xlu0 %v494, 112
    %v1120 = vpop.permute.xlu0 %1119
    %v1121 = vsel %vm853, %v489, 0
    %v1123 = vsel %vm853, %v494, 0
    %v1125 = vsel %vm853, %v1118, 0
    %v1127 = vsel %vm853, %v1120, 0
    %1129 = vmatprep.subr.mxu0 0.0
    %1130 = vmatpush1.xpose.msra.mxu0 %v1125
    %1131 = vmatprep.subr.mxu0 0.0
    %1132 = vmatpush1.xpose.msra.mxu0 %v1127
    %1133 = vmatprep.subr.mxu0 0.0
    %1134 = vmatpush1.xpose.msra.mxu0 0.0
    %1135 = vmatprep.subr.mxu0 0.0
    %1136 = vmatpush1.xpose.msra.mxu0 0.0
    %1137 = vmatprep.subr.mxu0 0.0
    %1138 = vmatpush1.xpose.msra.mxu0 0.0
    %1139 = vmatprep.subr.mxu0 0.0
    %1140 = vmatpush1.xpose.msra.mxu0 0.0
    %1141 = vmatprep.subr.mxu0 0.0
    %1142 = vmatpush1.xpose.msra.mxu0 0.0
    %1143 = vmatprep.subr.mxu0 0.0
    %1144 = vmatpush1.xpose.msra.mxu0 0.0
    %1145 = vmatprep.subr.mxu0 0.0
    %1146 = vmatpush1.xpose.msra.mxu0 0.0
    %1147 = vmatprep.subr.mxu0 0.0
    %1148 = vmatpush1.xpose.msra.mxu0 0.0
    %1149 = vmatprep.subr.mxu0 0.0
    %1150 = vmatpush1.xpose.msra.mxu0 0.0
    %1151 = vmatprep.subr.mxu0 0.0
    %1152 = vmatpush1.xpose.msra.mxu0 0.0
    %1153 = vmatprep.subr.mxu0 0.0
    %1154 = vmatpush1.xpose.msra.mxu0 0.0
    %1155 = vmatprep.subr.mxu0 0.0
    %1156 = vmatpush1.xpose.msra.mxu0 0.0
    %1157 = vmatprep.subr.mxu0 0.0
    %1158 = vmatpush1.xpose.msra.mxu0 0.0
    %1159 = vmatprep.subr.mxu0 0.0
    %1160 = vmatpush1.xpose.msra.mxu0 0.0
    %1161 = vmatprep.subr.mxu0 0.0
    %1162 = vmatpush1.xpose.msra.mxu0 0.0
    %1163 = vmatprep.subr.mxu0 0.0
    %1164 = vmatpush1.xpose.msra.mxu0 0.0
    %1165 = vmatprep.subr.mxu0 0.0
    %1166 = vmatpush1.xpose.msra.mxu0 0.0
    %1167 = vmatprep.subr.mxu0 0.0
    %1168 = vmatpush1.xpose.msra.mxu0 0.0
    %1169 = vmatprep.subr.mxu0 0.0
    %1170 = vmatpush1.xpose.msra.mxu0 0.0
    %1171 = vmatprep.subr.mxu0 0.0
    %1172 = vmatpush1.xpose.msra.mxu0 0.0
    %1173 = vmatprep.subr.mxu0 0.0
    %1174 = vmatpush1.xpose.msra.mxu0 0.0
    %1175 = vmatprep.subr.mxu0 0.0
    %1176 = vmatpush1.xpose.msra.mxu0 0.0
    %1177 = vmatprep.subr.mxu0 0.0
    %1178 = vmatpush1.xpose.msra.mxu0 0.0
    %1179 = vmatprep.subr.mxu0 0.0
    %1180 = vmatpush1.xpose.msra.mxu0 0.0
    %1181 = vmatprep.subr.mxu0 0.0
    %1182 = vmatpush1.xpose.msra.mxu0 0.0
    %1183 = vmatprep.subr.mxu0 0.0
    %1184 = vmatpush1.xpose.msra.mxu0 0.0
    %1185 = vmatprep.subr.mxu0 0.0
    %1186 = vmatpush1.xpose.msra.mxu0 0.0
    %1187 = vmatprep.subr.mxu0 0.0
    %1188 = vmatpush1.xpose.msra.mxu0 0.0
    %1189 = vmatprep.subr.mxu0 0.0
    %1190 = vmatpush1.xpose.msra.mxu0 0.0
    %1191 = vmatprep.subr.mxu0 0.0
    %1192 = vmatpush1.xpose.msra.mxu0 0.0
    %1193 = vmatprep.mubr.f32.mxu0 0.0
    %1194 = vmatmul.mubr.f32.gmra.mrb[0].mxu0 %v1121
    %v1195 = vpop.f32.mrb[0].mxu0
    %v1196 = vadd.f32 0.0, %v1195
    %v1197 = vpop.f32.mrb[0].mxu0
    %1198 = vmatprep.mubr.f32.mxu0 0.0
    %1199 = vmatmul.mubr.f32.gmra.mrb[0].mxu0 %v1123
    %v1200 = vpop.f32.mrb[0].mxu0
    %v1201 = vadd.f32 0.0, %v1200
    %v1202 = vpop.f32.mrb[0].mxu0
    %1203 = vdwg.mxu0
    %1206 = vrot.lane.b32.xlu0 %v574, 112
    %v1207 = vpop.permute.xlu0 %1206
    %1208 = vrot.lane.b32.xlu0 %v579, 112
    %v1209 = vpop.permute.xlu0 %1208
    %v1210 = vsel %vm853, %v574, 0
    %v1212 = vsel %vm853, %v579, 0
    %v1214 = vsel %vm853, %v1207, 0
    %v1216 = vsel %vm853, %v1209, 0
    %1218 = vmatprep.subr.mxu0 0.0
    %1219 = vmatpush1.xpose.msra.mxu0 %v1214
    %1220 = vmatprep.subr.mxu0 0.0
    %1221 = vmatpush1.xpose.msra.mxu0 %v1216
    %1222 = vmatprep.subr.mxu0 0.0
    %1223 = vmatpush1.xpose.msra.mxu0 0.0
    %1224 = vmatprep.subr.mxu0 0.0
    %1225 = vmatpush1.xpose.msra.mxu0 0.0
    %1226 = vmatprep.subr.mxu0 0.0
    %1227 = vmatpush1.xpose.msra.mxu0 0.0
    %1228 = vmatprep.subr.mxu0 0.0
    %1229 = vmatpush1.xpose.msra.mxu0 0.0
    %1230 = vmatprep.subr.mxu0 0.0
    %1231 = vmatpush1.xpose.msra.mxu0 0.0
    %1232 = vmatprep.subr.mxu0 0.0
    %1233 = vmatpush1.xpose.msra.mxu0 0.0
    %1234 = vmatprep.subr.mxu0 0.0
    %1235 = vmatpush1.xpose.msra.mxu0 0.0
    %1236 = vmatprep.subr.mxu0 0.0
    %1237 = vmatpush1.xpose.msra.mxu0 0.0
    %1238 = vmatprep.subr.mxu0 0.0
    %1239 = vmatpush1.xpose.msra.mxu0 0.0
    %1240 = vmatprep.subr.mxu0 0.0
    %1241 = vmatpush1.xpose.msra.mxu0 0.0
    %1242 = vmatprep.subr.mxu0 0.0
    %1243 = vmatpush1.xpose.msra.mxu0 0.0
    %1244 = vmatprep.subr.mxu0 0.0
    %1245 = vmatpush1.xpose.msra.mxu0 0.0
    %1246 = vmatprep.subr.mxu0 0.0
    %1247 = vmatpush1.xpose.msra.mxu0 0.0
    %1248 = vmatprep.subr.mxu0 0.0
    %1249 = vmatpush1.xpose.msra.mxu0 0.0
    %1250 = vmatprep.subr.mxu0 0.0
    %1251 = vmatpush1.xpose.msra.mxu0 0.0
    %1252 = vmatprep.subr.mxu0 0.0
    %1253 = vmatpush1.xpose.msra.mxu0 0.0
    %1254 = vmatprep.subr.mxu0 0.0
    %1255 = vmatpush1.xpose.msra.mxu0 0.0
    %1256 = vmatprep.subr.mxu0 0.0
    %1257 = vmatpush1.xpose.msra.mxu0 0.0
    %1258 = vmatprep.subr.mxu0 0.0
    %1259 = vmatpush1.xpose.msra.mxu0 0.0
    %1260 = vmatprep.subr.mxu0 0.0
    %1261 = vmatpush1.xpose.msra.mxu0 0.0
    %1262 = vmatprep.subr.mxu0 0.0
    %1263 = vmatpush1.xpose.msra.mxu0 0.0
    %1264 = vmatprep.subr.mxu0 0.0
    %1265 = vmatpush1.xpose.msra.mxu0 0.0
    %1266 = vmatprep.subr.mxu0 0.0
    %1267 = vmatpush1.xpose.msra.mxu0 0.0
    %1268 = vmatprep.subr.mxu0 0.0
    %1269 = vmatpush1.xpose.msra.mxu0 0.0
    %1270 = vmatprep.subr.mxu0 0.0
    %1271 = vmatpush1.xpose.msra.mxu0 0.0
    %1272 = vmatprep.subr.mxu0 0.0
    %1273 = vmatpush1.xpose.msra.mxu0 0.0
    %1274 = vmatprep.subr.mxu0 0.0
    %1275 = vmatpush1.xpose.msra.mxu0 0.0
    %1276 = vmatprep.subr.mxu0 0.0
    %1277 = vmatpush1.xpose.msra.mxu0 0.0
    %1278 = vmatprep.subr.mxu0 0.0
    %1279 = vmatpush1.xpose.msra.mxu0 0.0
    %1280 = vmatprep.subr.mxu0 0.0
    %1281 = vmatpush1.xpose.msra.mxu0 0.0
    %1282 = vmatprep.mubr.f32.mxu0 0.0
    %1283 = vmatmul.mubr.f32.gmra.mrb[0].mxu0 %v1210
    %v1284 = vpop.f32.mrb[0].mxu0
    %v1285 = vadd.f32 0.0, %v1284
    %v1286 = vpop.f32.mrb[0].mxu0
    %1287 = vmatprep.mubr.f32.mxu0 0.0
    %1288 = vmatmul.mubr.f32.gmra.mrb[0].mxu0 %v1212
    %v1289 = vpop.f32.mrb[0].mxu0
    %v1290 = vadd.f32 0.0, %v1289
    %v1291 = vpop.f32.mrb[0].mxu0
    %1292 = vdwg.mxu0
    %1295 = vrot.lane.b32.xlu0 %v659, 112
    %v1296 = vpop.permute.xlu0 %1295
    %1297 = vrot.lane.b32.xlu0 %v664, 112
    %v1298 = vpop.permute.xlu0 %1297
    %v1299 = vsel %vm853, %v659, 0
    %v1301 = vsel %vm853, %v664, 0
    %v1303 = vsel %vm853, %v1296, 0
    %v1305 = vsel %vm853, %v1298, 0
    %1307 = vmatprep.subr.mxu0 0.0
    %1308 = vmatpush1.xpose.msra.mxu0 %v1303
    %1309 = vmatprep.subr.mxu0 0.0
    %1310 = vmatpush1.xpose.msra.mxu0 %v1305
    %1311 = vmatprep.subr.mxu0 0.0
    %1312 = vmatpush1.xpose.msra.mxu0 0.0
    %1313 = vmatprep.subr.mxu0 0.0
    %1314 = vmatpush1.xpose.msra.mxu0 0.0
    %1315 = vmatprep.subr.mxu0 0.0
    %1316 = vmatpush1.xpose.msra.mxu0 0.0
    %1317 = vmatprep.subr.mxu0 0.0
    %1318 = vmatpush1.xpose.msra.mxu0 0.0
    %1319 = vmatprep.subr.mxu0 0.0
    %1320 = vmatpush1.xpose.msra.mxu0 0.0
    %1321 = vmatprep.subr.mxu0 0.0
    %1322 = vmatpush1.xpose.msra.mxu0 0.0
    %1323 = vmatprep.subr.mxu0 0.0
    %1324 = vmatpush1.xpose.msra.mxu0 0.0
    %1325 = vmatprep.subr.mxu0 0.0
    %1326 = vmatpush1.xpose.msra.mxu0 0.0
    %1327 = vmatprep.subr.mxu0 0.0
    %1328 = vmatpush1.xpose.msra.mxu0 0.0
    %1329 = vmatprep.subr.mxu0 0.0
    %1330 = vmatpush1.xpose.msra.mxu0 0.0
    %1331 = vmatprep.subr.mxu0 0.0
    %1332 = vmatpush1.xpose.msra.mxu0 0.0
    %1333 = vmatprep.subr.mxu0 0.0
    %1334 = vmatpush1.xpose.msra.mxu0 0.0
    %1335 = vmatprep.subr.mxu0 0.0
    %1336 = vmatpush1.xpose.msra.mxu0 0.0
    %1337 = vmatprep.subr.mxu0 0.0
    %1338 = vmatpush1.xpose.msra.mxu0 0.0
    %1339 = vmatprep.subr.mxu0 0.0
    %1340 = vmatpush1.xpose.msra.mxu0 0.0
    %1341 = vmatprep.subr.mxu0 0.0
    %1342 = vmatpush1.xpose.msra.mxu0 0.0
    %1343 = vmatprep.subr.mxu0 0.0
    %1344 = vmatpush1.xpose.msra.mxu0 0.0
    %1345 = vmatprep.subr.mxu0 0.0
    %1346 = vmatpush1.xpose.msra.mxu0 0.0
    %1347 = vmatprep.subr.mxu0 0.0
    %1348 = vmatpush1.xpose.msra.mxu0 0.0
    %1349 = vmatprep.subr.mxu0 0.0
    %1350 = vmatpush1.xpose.msra.mxu0 0.0
    %1351 = vmatprep.subr.mxu0 0.0
    %1352 = vmatpush1.xpose.msra.mxu0 0.0
    %1353 = vmatprep.subr.mxu0 0.0
    %1354 = vmatpush1.xpose.msra.mxu0 0.0
    %1355 = vmatprep.subr.mxu0 0.0
    %1356 = vmatpush1.xpose.msra.mxu0 0.0
    %1357 = vmatprep.subr.mxu0 0.0
    %1358 = vmatpush1.xpose.msra.mxu0 0.0
    %1359 = vmatprep.subr.mxu0 0.0
    %1360 = vmatpush1.xpose.msra.mxu0 0.0
    %1361 = vmatprep.subr.mxu0 0.0
    %1362 = vmatpush1.xpose.msra.mxu0 0.0
    %1363 = vmatprep.subr.mxu0 0.0
    %1364 = vmatpush1.xpose.msra.mxu0 0.0
    %1365 = vmatprep.subr.mxu0 0.0
    %1366 = vmatpush1.xpose.msra.mxu0 0.0
    %1367 = vmatprep.subr.mxu0 0.0
    %1368 = vmatpush1.xpose.msra.mxu0 0.0
    %1369 = vmatprep.subr.mxu0 0.0
    %1370 = vmatpush1.xpose.msra.mxu0 0.0
    %1371 = vmatprep.mubr.f32.mxu0 0.0
    %1372 = vmatmul.mubr.f32.gmra.mrb[0].mxu0 %v1299
    %v1373 = vpop.f32.mrb[0].mxu0
    %v1374 = vadd.f32 0.0, %v1373
    %v1375 = vpop.f32.mrb[0].mxu0
    %1376 = vmatprep.mubr.f32.mxu0 0.0
    %1377 = vmatmul.mubr.f32.gmra.mrb[0].mxu0 %v1301
    %v1378 = vpop.f32.mrb[0].mxu0
    %v1379 = vadd.f32 0.0, %v1378
    %v1380 = vpop.f32.mrb[0].mxu0
    %1381 = vdwg.mxu0
    %1384 = vrot.lane.b32.xlu0 %v744, 112
    %v1385 = vpop.permute.xlu0 %1384
    %1386 = vrot.lane.b32.xlu0 %v749, 112
    %v1387 = vpop.permute.xlu0 %1386
    %v1388 = vsel %vm853, %v744, 0
    %v1390 = vsel %vm853, %v749, 0
    %v1392 = vsel %vm853, %v1385, 0
    %v1394 = vsel %vm853, %v1387, 0
    %1396 = vmatprep.subr.mxu0 0.0
    %1397 = vmatpush1.xpose.msra.mxu0 %v1392
    %1398 = vmatprep.subr.mxu0 0.0
    %1399 = vmatpush1.xpose.msra.mxu0 %v1394
    %1400 = vmatprep.subr.mxu0 0.0
    %1401 = vmatpush1.xpose.msra.mxu0 0.0
    %1402 = vmatprep.subr.mxu0 0.0
    %1403 = vmatpush1.xpose.msra.mxu0 0.0
    %1404 = vmatprep.subr.mxu0 0.0
    %1405 = vmatpush1.xpose.msra.mxu0 0.0
    %1406 = vmatprep.subr.mxu0 0.0
    %1407 = vmatpush1.xpose.msra.mxu0 0.0
    %1408 = vmatprep.subr.mxu0 0.0
    %1409 = vmatpush1.xpose.msra.mxu0 0.0
    %1410 = vmatprep.subr.mxu0 0.0
    %1411 = vmatpush1.xpose.msra.mxu0 0.0
    %1412 = vmatprep.subr.mxu0 0.0
    %1413 = vmatpush1.xpose.msra.mxu0 0.0
    %1414 = vmatprep.subr.mxu0 0.0
    %1415 = vmatpush1.xpose.msra.mxu0 0.0
    %1416 = vmatprep.subr.mxu0 0.0
    %1417 = vmatpush1.xpose.msra.mxu0 0.0
    %1418 = vmatprep.subr.mxu0 0.0
    %1419 = vmatpush1.xpose.msra.mxu0 0.0
    %1420 = vmatprep.subr.mxu0 0.0
    %1421 = vmatpush1.xpose.msra.mxu0 0.0
    %1422 = vmatprep.subr.mxu0 0.0
    %1423 = vmatpush1.xpose.msra.mxu0 0.0
    %1424 = vmatprep.subr.mxu0 0.0
    %1425 = vmatpush1.xpose.msra.mxu0 0.0
    %1426 = vmatprep.subr.mxu0 0.0
    %1427 = vmatpush1.xpose.msra.mxu0 0.0
    %1428 = vmatprep.subr.mxu0 0.0
    %1429 = vmatpush1.xpose.msra.mxu0 0.0
    %1430 = vmatprep.subr.mxu0 0.0
    %1431 = vmatpush1.xpose.msra.mxu0 0.0
    %1432 = vmatprep.subr.mxu0 0.0
    %1433 = vmatpush1.xpose.msra.mxu0 0.0
    %1434 = vmatprep.subr.mxu0 0.0
    %1435 = vmatpush1.xpose.msra.mxu0 0.0
    %1436 = vmatprep.subr.mxu0 0.0
    %1437 = vmatpush1.xpose.msra.mxu0 0.0
    %1438 = vmatprep.subr.mxu0 0.0
    %1439 = vmatpush1.xpose.msra.mxu0 0.0
    %1440 = vmatprep.subr.mxu0 0.0
    %1441 = vmatpush1.xpose.msra.mxu0 0.0
    %1442 = vmatprep.subr.mxu0 0.0
    %1443 = vmatpush1.xpose.msra.mxu0 0.0
    %1444 = vmatprep.subr.mxu0 0.0
    %1445 = vmatpush1.xpose.msra.mxu0 0.0
    %1446 = vmatprep.subr.mxu0 0.0
    %1447 = vmatpush1.xpose.msra.mxu0 0.0
    %1448 = vmatprep.subr.mxu0 0.0
    %1449 = vmatpush1.xpose.msra.mxu0 0.0
    %1450 = vmatprep.subr.mxu0 0.0
    %1451 = vmatpush1.xpose.msra.mxu0 0.0
    %1452 = vmatprep.subr.mxu0 0.0
    %1453 = vmatpush1.xpose.msra.mxu0 0.0
    %1454 = vmatprep.subr.mxu0 0.0
    %1455 = vmatpush1.xpose.msra.mxu0 0.0
    %1456 = vmatprep.subr.mxu0 0.0
    %1457 = vmatpush1.xpose.msra.mxu0 0.0
    %1458 = vmatprep.subr.mxu0 0.0
    %1459 = vmatpush1.xpose.msra.mxu0 0.0
    %1460 = vmatprep.mubr.f32.mxu0 0.0
    %1461 = vmatmul.mubr.f32.gmra.mrb[0].mxu0 %v1388
    %v1462 = vpop.f32.mrb[0].mxu0
    %v1463 = vadd.f32 0.0, %v1462
    %v1464 = vpop.f32.mrb[0].mxu0
    %1465 = vmatprep.mubr.f32.mxu0 0.0
    %1466 = vmatmul.mubr.f32.gmra.mrb[0].mxu0 %v1390
    %v1467 = vpop.f32.mrb[0].mxu0
    %v1468 = vadd.f32 0.0, %v1467
    %v1469 = vpop.f32.mrb[0].mxu0
    %1470 = vdwg.mxu0
    %1473 = vrot.lane.b32.xlu0 %v829, 112
    %v1474 = vpop.permute.xlu0 %1473
    %1475 = vrot.lane.b32.xlu0 %v834, 112
    %v1476 = vpop.permute.xlu0 %1475
    %v1477 = vsel %vm853, %v829, 0
    %v1479 = vsel %vm853, %v834, 0
    %v1481 = vsel %vm853, %v1474, 0
    %v1483 = vsel %vm853, %v1476, 0
    %1485 = vmatprep.subr.mxu0 0.0
    %1486 = vmatpush1.xpose.msra.mxu0 %v1481
    %1487 = vmatprep.subr.mxu0 0.0
    %1488 = vmatpush1.xpose.msra.mxu0 %v1483
    %1489 = vmatprep.subr.mxu0 0.0
    %1490 = vmatpush1.xpose.msra.mxu0 0.0
    %1491 = vmatprep.subr.mxu0 0.0
    %1492 = vmatpush1.xpose.msra.mxu0 0.0
    %1493 = vmatprep.subr.mxu0 0.0
    %1494 = vmatpush1.xpose.msra.mxu0 0.0
    %1495 = vmatprep.subr.mxu0 0.0
    %1496 = vmatpush1.xpose.msra.mxu0 0.0
    %1497 = vmatprep.subr.mxu0 0.0
    %1498 = vmatpush1.xpose.msra.mxu0 0.0
    %1499 = vmatprep.subr.mxu0 0.0
    %1500 = vmatpush1.xpose.msra.mxu0 0.0
    %1501 = vmatprep.subr.mxu0 0.0
    %1502 = vmatpush1.xpose.msra.mxu0 0.0
    %1503 = vmatprep.subr.mxu0 0.0
    %1504 = vmatpush1.xpose.msra.mxu0 0.0
    %1505 = vmatprep.subr.mxu0 0.0
    %1506 = vmatpush1.xpose.msra.mxu0 0.0
    %1507 = vmatprep.subr.mxu0 0.0
    %1508 = vmatpush1.xpose.msra.mxu0 0.0
    %1509 = vmatprep.subr.mxu0 0.0
    %1510 = vmatpush1.xpose.msra.mxu0 0.0
    %1511 = vmatprep.subr.mxu0 0.0
    %1512 = vmatpush1.xpose.msra.mxu0 0.0
    %1513 = vmatprep.subr.mxu0 0.0
    %1514 = vmatpush1.xpose.msra.mxu0 0.0
    %1515 = vmatprep.subr.mxu0 0.0
    %1516 = vmatpush1.xpose.msra.mxu0 0.0
    %1517 = vmatprep.subr.mxu0 0.0
    %1518 = vmatpush1.xpose.msra.mxu0 0.0
    %1519 = vmatprep.subr.mxu0 0.0
    %1520 = vmatpush1.xpose.msra.mxu0 0.0
    %1521 = vmatprep.subr.mxu0 0.0
    %1522 = vmatpush1.xpose.msra.mxu0 0.0
    %1523 = vmatprep.subr.mxu0 0.0
    %1524 = vmatpush1.xpose.msra.mxu0 0.0
    %1525 = vmatprep.subr.mxu0 0.0
    %1526 = vmatpush1.xpose.msra.mxu0 0.0
    %1527 = vmatprep.subr.mxu0 0.0
    %1528 = vmatpush1.xpose.msra.mxu0 0.0
    %1529 = vmatprep.subr.mxu0 0.0
    %1530 = vmatpush1.xpose.msra.mxu0 0.0
    %1531 = vmatprep.subr.mxu0 0.0
    %1532 = vmatpush1.xpose.msra.mxu0 0.0
    %1533 = vmatprep.subr.mxu0 0.0
    %1534 = vmatpush1.xpose.msra.mxu0 0.0
    %1535 = vmatprep.subr.mxu0 0.0
    %1536 = vmatpush1.xpose.msra.mxu0 0.0
    %1537 = vmatprep.subr.mxu0 0.0
    %1538 = vmatpush1.xpose.msra.mxu0 0.0
    %1539 = vmatprep.subr.mxu0 0.0
    %1540 = vmatpush1.xpose.msra.mxu0 0.0
    %1541 = vmatprep.subr.mxu0 0.0
    %1542 = vmatpush1.xpose.msra.mxu0 0.0
    %1543 = vmatprep.subr.mxu0 0.0
    %1544 = vmatpush1.xpose.msra.mxu0 0.0
    %1545 = vmatprep.subr.mxu0 0.0
    %1546 = vmatpush1.xpose.msra.mxu0 0.0
    %1547 = vmatprep.subr.mxu0 0.0
    %1548 = vmatpush1.xpose.msra.mxu0 0.0
    %1549 = vmatprep.mubr.f32.mxu0 0.0
    %1550 = vmatmul.mubr.f32.gmra.mrb[0].mxu0 %v1477
    %v1551 = vpop.f32.mrb[0].mxu0
    %v1552 = vadd.f32 0.0, %v1551
    %v1553 = vpop.f32.mrb[0].mxu0
    %1554 = vmatprep.mubr.f32.mxu0 0.0
    %1555 = vmatmul.mubr.f32.gmra.mrb[0].mxu0 %v1479
    %v1556 = vpop.f32.mrb[0].mxu0
    %v1557 = vadd.f32 0.0, %v1556
    %v1558 = vpop.f32.mrb[0].mxu0
    %1559 = vdwg.mxu0
    %v1560 = vmul.f32 %v929, 0.25
    %v1561 = vmul.f32 %v934, 0.25
    %v1562 = vmul.f32 %v1018, 0.25
    %v1563 = vmul.f32 %v1023, 0.25
    %v1564 = vmul.f32 %v1107, 0.25
    %v1565 = vmul.f32 %v1112, 0.25
    %v1566 = vmul.f32 %v1196, 0.25
    %v1567 = vmul.f32 %v1201, 0.25
    %v1568 = vmul.f32 %v1285, 0.25
    %v1569 = vmul.f32 %v1290, 0.25
    %v1570 = vmul.f32 %v1374, 0.25
    %v1571 = vmul.f32 %v1379, 0.25
    %v1572 = vmul.f32 %v1463, 0.25
    %v1573 = vmul.f32 %v1468, 0.25
    %v1574 = vmul.f32 %v1552, 0.25
    %v1575 = vmul.f32 %v1557, 0.25
    %v1576 = vsel %vm853, %v1560, -inf
    %1577 = vmax.xlane.f32.xlu0 %v1576
    %v1578 = vpop.xlane.xlu0 %1577
    %v1579 = vsel %vm853, %v1561, -inf
    %1580 = vmax.xlane.f32.xlu0 %v1579
    %v1581 = vpop.xlane.xlu0 %1580
    %v1582 = vsel %vm853, %v1562, -inf
    %1583 = vmax.xlane.f32.xlu0 %v1582
    %v1584 = vpop.xlane.xlu0 %1583
    %v1585 = vsel %vm853, %v1563, -inf
    %1586 = vmax.xlane.f32.xlu0 %v1585
    %v1587 = vpop.xlane.xlu0 %1586
    %v1588 = vsel %vm853, %v1564, -inf
    %1589 = vmax.xlane.f32.xlu0 %v1588
    %v1590 = vpop.xlane.xlu0 %1589
    %v1591 = vsel %vm853, %v1565, -inf
    %1592 = vmax.xlane.f32.xlu0 %v1591
    %v1593 = vpop.xlane.xlu0 %1592
    %v1594 = vsel %vm853, %v1566, -inf
    %1595 = vmax.xlane.f32.xlu0 %v1594
    %v1596 = vpop.xlane.xlu0 %1595
    %v1597 = vsel %vm853, %v1567, -inf
    %1598 = vmax.xlane.f32.xlu0 %v1597
    %v1599 = vpop.xlane.xlu0 %1598
    %v1600 = vsel %vm853, %v1568, -inf
    %1601 = vmax.xlane.f32.xlu0 %v1600
    %v1602 = vpop.xlane.xlu0 %1601
    %v1603 = vsel %vm853, %v1569, -inf
    %1604 = vmax.xlane.f32.xlu0 %v1603
    %v1605 = vpop.xlane.xlu0 %1604
    %v1606 = vsel %vm853, %v1570, -inf
    %1607 = vmax.xlane.f32.xlu0 %v1606
    %v1608 = vpop.xlane.xlu0 %1607
    %v1609 = vsel %vm853, %v1571, -inf
    %1610 = vmax.xlane.f32.xlu0 %v1609
    %v1611 = vpop.xlane.xlu0 %1610
    %v1612 = vsel %vm853, %v1572, -inf
    %1613 = vmax.xlane.f32.xlu0 %v1612
    %v1614 = vpop.xlane.xlu0 %1613
    %v1615 = vsel %vm853, %v1573, -inf
    %1616 = vmax.xlane.f32.xlu0 %v1615
    %v1617 = vpop.xlane.xlu0 %1616
    %v1618 = vsel %vm853, %v1574, -inf
    %1619 = vmax.xlane.f32.xlu0 %v1618
    %v1620 = vpop.xlane.xlu0 %1619
    %v1621 = vsel %vm853, %v1575, -inf
    %1622 = vmax.xlane.f32.xlu0 %v1621
    %v1623 = vpop.xlane.xlu0 %1622
    %v1624 = vsub.f32 %v1560, %v1578
    %v1625 = vsub.f32 %v1561, %v1581
    %v1626 = vsub.f32 %v1562, %v1584
    %v1627 = vsub.f32 %v1563, %v1587
    %v1628 = vsub.f32 %v1564, %v1590
    %v1629 = vsub.f32 %v1565, %v1593
    %v1630 = vsub.f32 %v1566, %v1596
    %v1631 = vsub.f32 %v1567, %v1599
    %v1632 = vsub.f32 %v1568, %v1602
    %v1633 = vsub.f32 %v1569, %v1605
    %v1634 = vsub.f32 %v1570, %v1608
    %v1635 = vsub.f32 %v1571, %v1611
    %v1636 = vsub.f32 %v1572, %v1614
    %v1637 = vsub.f32 %v1573, %v1617
    %v1638 = vsub.f32 %v1574, %v1620
    %v1639 = vsub.f32 %v1575, %v1623
    %v1640 = vmul.f32 %v1624, 1.442695
    %v1641 = vpow.pop %v1640
    %v1642 = vmul.f32 %v1625, 1.442695
    %v1643 = vpow.pop %v1642
    %v1644 = vmul.f32 %v1626, 1.442695
    %v1645 = vpow.pop %v1644
    %v1646 = vmul.f32 %v1627, 1.442695
    %v1647 = vpow.pop %v1646
    %v1648 = vmul.f32 %v1628, 1.442695
    %v1649 = vpow.pop %v1648
    %v1650 = vmul.f32 %v1629, 1.442695
    %v1651 = vpow.pop %v1650
    %v1652 = vmul.f32 %v1630, 1.442695
    %v1653 = vpow.pop %v1652
    %v1654 = vmul.f32 %v1631, 1.442695
    %v1655 = vpow.pop %v1654
    %v1656 = vmul.f32 %v1632, 1.442695
    %v1657 = vpow.pop %v1656
    %v1658 = vmul.f32 %v1633, 1.442695
    %v1659 = vpow.pop %v1658
    %v1660 = vmul.f32 %v1634, 1.442695
    %v1661 = vpow.pop %v1660
    %v1662 = vmul.f32 %v1635, 1.442695
    %v1663 = vpow.pop %v1662
    %v1664 = vmul.f32 %v1636, 1.442695
    %v1665 = vpow.pop %v1664
    %v1666 = vmul.f32 %v1637, 1.442695
    %v1667 = vpow.pop %v1666
    %v1668 = vmul.f32 %v1638, 1.442695
    %v1669 = vpow.pop %v1668
    %v1670 = vmul.f32 %v1639, 1.442695
    %v1671 = vpow.pop %v1670
    %v1672 = vsel %vm853, %v1641, 0.0
    %1673 = vadd.xlane.f32.xlu0 %v1672
    %v1674 = vpop.xlane.xlu0 %1673
    %v1675 = vsel %vm853, %v1643, 0.0
    %1676 = vadd.xlane.f32.xlu0 %v1675
    %v1677 = vpop.xlane.xlu0 %1676
    %v1678 = vsel %vm853, %v1645, 0.0
    %1679 = vadd.xlane.f32.xlu0 %v1678
    %v1680 = vpop.xlane.xlu0 %1679
    %v1681 = vsel %vm853, %v1647, 0.0
    %1682 = vadd.xlane.f32.xlu0 %v1681
    %v1683 = vpop.xlane.xlu0 %1682
    %v1684 = vsel %vm853, %v1649, 0.0
    %1685 = vadd.xlane.f32.xlu0 %v1684
    %v1686 = vpop.xlane.xlu0 %1685
    %v1687 = vsel %vm853, %v1651, 0.0
    %1688 = vadd.xlane.f32.xlu0 %v1687
    %v1689 = vpop.xlane.xlu0 %1688
    %v1690 = vsel %vm853, %v1653, 0.0
    %1691 = vadd.xlane.f32.xlu0 %v1690
    %v1692 = vpop.xlane.xlu0 %1691
    %v1693 = vsel %vm853, %v1655, 0.0
    %1694 = vadd.xlane.f32.xlu0 %v1693
    %v1695 = vpop.xlane.xlu0 %1694
    %v1696 = vsel %vm853, %v1657, 0.0
    %1697 = vadd.xlane.f32.xlu0 %v1696
    %v1698 = vpop.xlane.xlu0 %1697
    %v1699 = vsel %vm853, %v1659, 0.0
    %1700 = vadd.xlane.f32.xlu0 %v1699
    %v1701 = vpop.xlane.xlu0 %1700
    %v1702 = vsel %vm853, %v1661, 0.0
    %1703 = vadd.xlane.f32.xlu0 %v1702
    %v1704 = vpop.xlane.xlu0 %1703
    %v1705 = vsel %vm853, %v1663, 0.0
    %1706 = vadd.xlane.f32.xlu0 %v1705
    %v1707 = vpop.xlane.xlu0 %1706
    %v1708 = vsel %vm853, %v1665, 0.0
    %1709 = vadd.xlane.f32.xlu0 %v1708
    %v1710 = vpop.xlane.xlu0 %1709
    %v1711 = vsel %vm853, %v1667, 0.0
    %1712 = vadd.xlane.f32.xlu0 %v1711
    %v1713 = vpop.xlane.xlu0 %1712
    %v1714 = vsel %vm853, %v1669, 0.0
    %1715 = vadd.xlane.f32.xlu0 %v1714
    %v1716 = vpop.xlane.xlu0 %1715
    %v1717 = vsel %vm853, %v1671, 0.0
    %1718 = vadd.xlane.f32.xlu0 %v1717
    %v1719 = vpop.xlane.xlu0 %1718
    %v1720 = vrcp.pop %v1674
    %v1721 = vmul.f32 %v1641, %v1720
    %v1722 = vrcp.pop %v1677
    %v1723 = vmul.f32 %v1643, %v1722
    %v1724 = vrcp.pop %v1680
    %v1725 = vmul.f32 %v1645, %v1724
    %v1726 = vrcp.pop %v1683
    %v1727 = vmul.f32 %v1647, %v1726
    %v1728 = vrcp.pop %v1686
    %v1729 = vmul.f32 %v1649, %v1728
    %v1730 = vrcp.pop %v1689
    %v1731 = vmul.f32 %v1651, %v1730
    %v1732 = vrcp.pop %v1692
    %v1733 = vmul.f32 %v1653, %v1732
    %v1734 = vrcp.pop %v1695
    %v1735 = vmul.f32 %v1655, %v1734
    %v1736 = vrcp.pop %v1698
    %v1737 = vmul.f32 %v1657, %v1736
    %v1738 = vrcp.pop %v1701
    %v1739 = vmul.f32 %v1659, %v1738
    %v1740 = vrcp.pop %v1704
    %v1741 = vmul.f32 %v1661, %v1740
    %v1742 = vrcp.pop %v1707
    %v1743 = vmul.f32 %v1663, %v1742
    %v1744 = vrcp.pop %v1710
    %v1745 = vmul.f32 %v1665, %v1744
    %v1746 = vrcp.pop %v1713
    %v1747 = vmul.f32 %v1667, %v1746
    %v1748 = vrcp.pop %v1716
    %v1749 = vmul.f32 %v1669, %v1748
    %v1750 = vrcp.pop %v1719
    %v1751 = vmul.f32 %v1671, %v1750
    %1752 = vrot.lane.b32.xlu0 %v234, 96
    %v1753 = vpop.permute.xlu0 %1752
    %1754 = vrot.lane.b32.xlu0 %v239, 96
    %v1755 = vpop.permute.xlu0 %1754
    %v1759 = vsel %vm853, %v1721, 0
    %v1762 = vsel %vm853, %v1723, 0
    %1764 = vmatprep.subr.mxu0 0.0
    %1765 = vmatpush1.msra.mxu0 %v1753
    %1766 = vmatprep.subr.mxu0 0.0
    %1767 = vmatpush1.msra.mxu0 %v1755
    %1768 = vmatprep.subr.mxu0 0.0
    %1769 = vmatpush1.msra.mxu0 0.0
    %1770 = vmatprep.subr.mxu0 0.0
    %1771 = vmatpush1.msra.mxu0 0.0
    %1772 = vmatprep.subr.mxu0 0.0
    %1773 = vmatpush1.msra.mxu0 0.0
    %1774 = vmatprep.subr.mxu0 0.0
    %1775 = vmatpush1.msra.mxu0 0.0
    %1776 = vmatprep.subr.mxu0 0.0
    %1777 = vmatpush1.msra.mxu0 0.0
    %1778 = vmatprep.subr.mxu0 0.0
    %1779 = vmatpush1.msra.mxu0 0.0
    %1780 = vmatprep.subr.mxu0 0.0
    %1781 = vmatpush1.msra.mxu0 0.0
    %1782 = vmatprep.subr.mxu0 0.0
    %1783 = vmatpush1.msra.mxu0 0.0
    %1784 = vmatprep.subr.mxu0 0.0
    %1785 = vmatpush1.msra.mxu0 0.0
    %1786 = vmatprep.subr.mxu0 0.0
    %1787 = vmatpush1.msra.mxu0 0.0
    %1788 = vmatprep.subr.mxu0 0.0
    %1789 = vmatpush1.msra.mxu0 0.0
    %1790 = vmatprep.subr.mxu0 0.0
    %1791 = vmatpush1.msra.mxu0 0.0
    %1792 = vmatprep.subr.mxu0 0.0
    %1793 = vmatpush1.msra.mxu0 0.0
    %1794 = vmatprep.subr.mxu0 0.0
    %1795 = vmatpush1.msra.mxu0 0.0
    %1796 = vmatprep.subr.mxu0 0.0
    %1797 = vmatpush1.msra.mxu0 0.0
    %1798 = vmatprep.subr.mxu0 0.0
    %1799 = vmatpush1.msra.mxu0 0.0
    %1800 = vmatprep.subr.mxu0 0.0
    %1801 = vmatpush1.msra.mxu0 0.0
    %1802 = vmatprep.subr.mxu0 0.0
    %1803 = vmatpush1.msra.mxu0 0.0
    %1804 = vmatprep.subr.mxu0 0.0
    %1805 = vmatpush1.msra.mxu0 0.0
    %1806 = vmatprep.subr.mxu0 0.0
    %1807 = vmatpush1.msra.mxu0 0.0
    %1808 = vmatprep.subr.mxu0 0.0
    %1809 = vmatpush1.msra.mxu0 0.0
    %1810 = vmatprep.subr.mxu0 0.0
    %1811 = vmatpush1.msra.mxu0 0.0
    %1812 = vmatprep.subr.mxu0 0.0
    %1813 = vmatpush1.msra.mxu0 0.0
    %1814 = vmatprep.subr.mxu0 0.0
    %1815 = vmatpush1.msra.mxu0 0.0
    %1816 = vmatprep.subr.mxu0 0.0
    %1817 = vmatpush1.msra.mxu0 0.0
    %1818 = vmatprep.subr.mxu0 0.0
    %1819 = vmatpush1.msra.mxu0 0.0
    %1820 = vmatprep.subr.mxu0 0.0
    %1821 = vmatpush1.msra.mxu0 0.0
    %1822 = vmatprep.subr.mxu0 0.0
    %1823 = vmatpush1.msra.mxu0 0.0
    %1824 = vmatprep.subr.mxu0 0.0
    %1825 = vmatpush1.msra.mxu0 0.0
    %1826 = vmatprep.subr.mxu0 0.0
    %1827 = vmatpush1.msra.mxu0 0.0
    %1828 = vmatprep.mubr.f32.mxu0 0.0
    %1829 = vmatmul.mubr.f32.gmra.mrb[0].mxu0 %v1759
    %v1830 = vpop.f32.mrb[0].mxu0
    %v1831 = vadd.f32 0.0, %v1830
    %v1832 = vpop.f32.mrb[0].mxu0
    %1833 = vmatprep.mubr.f32.mxu0 0.0
    %1834 = vmatmul.mubr.f32.gmra.mrb[0].mxu0 %v1762
    %v1835 = vpop.f32.mrb[0].mxu0
    %v1836 = vadd.f32 0.0, %v1835
    %v1837 = vpop.f32.mrb[0].mxu0
    %1838 = vdwg.mxu0
    %1839 = vrot.lane.b32.xlu0 %v319, 96
    %v1840 = vpop.permute.xlu0 %1839
    %1841 = vrot.lane.b32.xlu0 %v324, 96
    %v1842 = vpop.permute.xlu0 %1841
    %v1846 = vsel %vm853, %v1725, 0
    %v1849 = vsel %vm853, %v1727, 0
    %1851 = vmatprep.subr.mxu0 0.0
    %1852 = vmatpush1.msra.mxu0 %v1840
    %1853 = vmatprep.subr.mxu0 0.0
    %1854 = vmatpush1.msra.mxu0 %v1842
    %1855 = vmatprep.subr.mxu0 0.0
    %1856 = vmatpush1.msra.mxu0 0.0
    %1857 = vmatprep.subr.mxu0 0.0
    %1858 = vmatpush1.msra.mxu0 0.0
    %1859 = vmatprep.subr.mxu0 0.0
    %1860 = vmatpush1.msra.mxu0 0.0
    %1861 = vmatprep.subr.mxu0 0.0
    %1862 = vmatpush1.msra.mxu0 0.0
    %1863 = vmatprep.subr.mxu0 0.0
    %1864 = vmatpush1.msra.mxu0 0.0
    %1865 = vmatprep.subr.mxu0 0.0
    %1866 = vmatpush1.msra.mxu0 0.0
    %1867 = vmatprep.subr.mxu0 0.0
    %1868 = vmatpush1.msra.mxu0 0.0
    %1869 = vmatprep.subr.mxu0 0.0
    %1870 = vmatpush1.msra.mxu0 0.0
    %1871 = vmatprep.subr.mxu0 0.0
    %1872 = vmatpush1.msra.mxu0 0.0
    %1873 = vmatprep.subr.mxu0 0.0
    %1874 = vmatpush1.msra.mxu0 0.0
    %1875 = vmatprep.subr.mxu0 0.0
    %1876 = vmatpush1.msra.mxu0 0.0
    %1877 = vmatprep.subr.mxu0 0.0
    %1878 = vmatpush1.msra.mxu0 0.0
    %1879 = vmatprep.subr.mxu0 0.0
    %1880 = vmatpush1.msra.mxu0 0.0
    %1881 = vmatprep.subr.mxu0 0.0
    %1882 = vmatpush1.msra.mxu0 0.0
    %1883 = vmatprep.subr.mxu0 0.0
    %1884 = vmatpush1.msra.mxu0 0.0
    %1885 = vmatprep.subr.mxu0 0.0
    %1886 = vmatpush1.msra.mxu0 0.0
    %1887 = vmatprep.subr.mxu0 0.0
    %1888 = vmatpush1.msra.mxu0 0.0
    %1889 = vmatprep.subr.mxu0 0.0
    %1890 = vmatpush1.msra.mxu0 0.0
    %1891 = vmatprep.subr.mxu0 0.0
    %1892 = vmatpush1.msra.mxu0 0.0
    %1893 = vmatprep.subr.mxu0 0.0
    %1894 = vmatpush1.msra.mxu0 0.0
    %1895 = vmatprep.subr.mxu0 0.0
    %1896 = vmatpush1.msra.mxu0 0.0
    %1897 = vmatprep.subr.mxu0 0.0
    %1898 = vmatpush1.msra.mxu0 0.0
    %1899 = vmatprep.subr.mxu0 0.0
    %1900 = vmatpush1.msra.mxu0 0.0
    %1901 = vmatprep.subr.mxu0 0.0
    %1902 = vmatpush1.msra.mxu0 0.0
    %1903 = vmatprep.subr.mxu0 0.0
    %1904 = vmatpush1.msra.mxu0 0.0
    %1905 = vmatprep.subr.mxu0 0.0
    %1906 = vmatpush1.msra.mxu0 0.0
    %1907 = vmatprep.subr.mxu0 0.0
    %1908 = vmatpush1.msra.mxu0 0.0
    %1909 = vmatprep.subr.mxu0 0.0
    %1910 = vmatpush1.msra.mxu0 0.0
    %1911 = vmatprep.subr.mxu0 0.0
    %1912 = vmatpush1.msra.mxu0 0.0
    %1913 = vmatprep.subr.mxu0 0.0
    %1914 = vmatpush1.msra.mxu0 0.0
    %1915 = vmatprep.mubr.f32.mxu0 0.0
    %1916 = vmatmul.mubr.f32.gmra.mrb[0].mxu0 %v1846
    %v1917 = vpop.f32.mrb[0].mxu0
    %v1918 = vadd.f32 0.0, %v1917
    %v1919 = vpop.f32.mrb[0].mxu0
    %1920 = vmatprep.mubr.f32.mxu0 0.0
    %1921 = vmatmul.mubr.f32.gmra.mrb[0].mxu0 %v1849
    %v1922 = vpop.f32.mrb[0].mxu0
    %v1923 = vadd.f32 0.0, %v1922
    %v1924 = vpop.f32.mrb[0].mxu0
    %1925 = vdwg.mxu0
    %1926 = vrot.lane.b32.xlu0 %v404, 96
    %v1927 = vpop.permute.xlu0 %1926
    %1928 = vrot.lane.b32.xlu0 %v409, 96
    %v1929 = vpop.permute.xlu0 %1928
    %v1933 = vsel %vm853, %v1729, 0
    %v1936 = vsel %vm853, %v1731, 0
    %1938 = vmatprep.subr.mxu0 0.0
    %1939 = vmatpush1.msra.mxu0 %v1927
    %1940 = vmatprep.subr.mxu0 0.0
    %1941 = vmatpush1.msra.mxu0 %v1929
    %1942 = vmatprep.subr.mxu0 0.0
    %1943 = vmatpush1.msra.mxu0 0.0
    %1944 = vmatprep.subr.mxu0 0.0
    %1945 = vmatpush1.msra.mxu0 0.0
    %1946 = vmatprep.subr.mxu0 0.0
    %1947 = vmatpush1.msra.mxu0 0.0
    %1948 = vmatprep.subr.mxu0 0.0
    %1949 = vmatpush1.msra.mxu0 0.0
    %1950 = vmatprep.subr.mxu0 0.0
    %1951 = vmatpush1.msra.mxu0 0.0
    %1952 = vmatprep.subr.mxu0 0.0
    %1953 = vmatpush1.msra.mxu0 0.0
    %1954 = vmatprep.subr.mxu0 0.0
    %1955 = vmatpush1.msra.mxu0 0.0
    %1956 = vmatprep.subr.mxu0 0.0
    %1957 = vmatpush1.msra.mxu0 0.0
    %1958 = vmatprep.subr.mxu0 0.0
    %1959 = vmatpush1.msra.mxu0 0.0
    %1960 = vmatprep.subr.mxu0 0.0
    %1961 = vmatpush1.msra.mxu0 0.0
    %1962 = vmatprep.subr.mxu0 0.0
    %1963 = vmatpush1.msra.mxu0 0.0
    %1964 = vmatprep.subr.mxu0 0.0
    %1965 = vmatpush1.msra.mxu0 0.0
    %1966 = vmatprep.subr.mxu0 0.0
    %1967 = vmatpush1.msra.mxu0 0.0
    %1968 = vmatprep.subr.mxu0 0.0
    %1969 = vmatpush1.msra.mxu0 0.0
    %1970 = vmatprep.subr.mxu0 0.0
    %1971 = vmatpush1.msra.mxu0 0.0
    %1972 = vmatprep.subr.mxu0 0.0
    %1973 = vmatpush1.msra.mxu0 0.0
    %1974 = vmatprep.subr.mxu0 0.0
    %1975 = vmatpush1.msra.mxu0 0.0
    %1976 = vmatprep.subr.mxu0 0.0
    %1977 = vmatpush1.msra.mxu0 0.0
    %1978 = vmatprep.subr.mxu0 0.0
    %1979 = vmatpush1.msra.mxu0 0.0
    %1980 = vmatprep.subr.mxu0 0.0
    %1981 = vmatpush1.msra.mxu0 0.0
    %1982 = vmatprep.subr.mxu0 0.0
    %1983 = vmatpush1.msra.mxu0 0.0
    %1984 = vmatprep.subr.mxu0 0.0
    %1985 = vmatpush1.msra.mxu0 0.0
    %1986 = vmatprep.subr.mxu0 0.0
    %1987 = vmatpush1.msra.mxu0 0.0
    %1988 = vmatprep.subr.mxu0 0.0
    %1989 = vmatpush1.msra.mxu0 0.0
    %1990 = vmatprep.subr.mxu0 0.0
    %1991 = vmatpush1.msra.mxu0 0.0
    %1992 = vmatprep.subr.mxu0 0.0
    %1993 = vmatpush1.msra.mxu0 0.0
    %1994 = vmatprep.subr.mxu0 0.0
    %1995 = vmatpush1.msra.mxu0 0.0
    %1996 = vmatprep.subr.mxu0 0.0
    %1997 = vmatpush1.msra.mxu0 0.0
    %1998 = vmatprep.subr.mxu0 0.0
    %1999 = vmatpush1.msra.mxu0 0.0
    %2000 = vmatprep.subr.mxu0 0.0
    %2001 = vmatpush1.msra.mxu0 0.0
    %2002 = vmatprep.mubr.f32.mxu0 0.0
    %2003 = vmatmul.mubr.f32.gmra.mrb[0].mxu0 %v1933
    %v2004 = vpop.f32.mrb[0].mxu0
    %v2005 = vadd.f32 0.0, %v2004
    %v2006 = vpop.f32.mrb[0].mxu0
    %2007 = vmatprep.mubr.f32.mxu0 0.0
    %2008 = vmatmul.mubr.f32.gmra.mrb[0].mxu0 %v1936
    %v2009 = vpop.f32.mrb[0].mxu0
    %v2010 = vadd.f32 0.0, %v2009
    %v2011 = vpop.f32.mrb[0].mxu0
    %2012 = vdwg.mxu0
    %2013 = vrot.lane.b32.xlu0 %v489, 96
    %v2014 = vpop.permute.xlu0 %2013
    %2015 = vrot.lane.b32.xlu0 %v494, 96
    %v2016 = vpop.permute.xlu0 %2015
    %v2020 = vsel %vm853, %v1733, 0
    %v2023 = vsel %vm853, %v1735, 0
    %2025 = vmatprep.subr.mxu0 0.0
    %2026 = vmatpush1.msra.mxu0 %v2014
    %2027 = vmatprep.subr.mxu0 0.0
    %2028 = vmatpush1.msra.mxu0 %v2016
    %2029 = vmatprep.subr.mxu0 0.0
    %2030 = vmatpush1.msra.mxu0 0.0
    %2031 = vmatprep.subr.mxu0 0.0
    %2032 = vmatpush1.msra.mxu0 0.0
    %2033 = vmatprep.subr.mxu0 0.0
    %2034 = vmatpush1.msra.mxu0 0.0
    %2035 = vmatprep.subr.mxu0 0.0
    %2036 = vmatpush1.msra.mxu0 0.0
    %2037 = vmatprep.subr.mxu0 0.0
    %2038 = vmatpush1.msra.mxu0 0.0
    %2039 = vmatprep.subr.mxu0 0.0
    %2040 = vmatpush1.msra.mxu0 0.0
    %2041 = vmatprep.subr.mxu0 0.0
    %2042 = vmatpush1.msra.mxu0 0.0
    %2043 = vmatprep.subr.mxu0 0.0
    %2044 = vmatpush1.msra.mxu0 0.0
    %2045 = vmatprep.subr.mxu0 0.0
    %2046 = vmatpush1.msra.mxu0 0.0
    %2047 = vmatprep.subr.mxu0 0.0
    %2048 = vmatpush1.msra.mxu0 0.0
    %2049 = vmatprep.subr.mxu0 0.0
    %2050 = vmatpush1.msra.mxu0 0.0
    %2051 = vmatprep.subr.mxu0 0.0
    %2052 = vmatpush1.msra.mxu0 0.0
    %2053 = vmatprep.subr.mxu0 0.0
    %2054 = vmatpush1.msra.mxu0 0.0
    %2055 = vmatprep.subr.mxu0 0.0
    %2056 = vmatpush1.msra.mxu0 0.0
    %2057 = vmatprep.subr.mxu0 0.0
    %2058 = vmatpush1.msra.mxu0 0.0
    %2059 = vmatprep.subr.mxu0 0.0
    %2060 = vmatpush1.msra.mxu0 0.0
    %2061 = vmatprep.subr.mxu0 0.0
    %2062 = vmatpush1.msra.mxu0 0.0
    %2063 = vmatprep.subr.mxu0 0.0
    %2064 = vmatpush1.msra.mxu0 0.0
    %2065 = vmatprep.subr.mxu0 0.0
    %2066 = vmatpush1.msra.mxu0 0.0
    %2067 = vmatprep.subr.mxu0 0.0
    %2068 = vmatpush1.msra.mxu0 0.0
    %2069 = vmatprep.subr.mxu0 0.0
    %2070 = vmatpush1.msra.mxu0 0.0
    %2071 = vmatprep.subr.mxu0 0.0
    %2072 = vmatpush1.msra.mxu0 0.0
    %2073 = vmatprep.subr.mxu0 0.0
    %2074 = vmatpush1.msra.mxu0 0.0
    %2075 = vmatprep.subr.mxu0 0.0
    %2076 = vmatpush1.msra.mxu0 0.0
    %2077 = vmatprep.subr.mxu0 0.0
    %2078 = vmatpush1.msra.mxu0 0.0
    %2079 = vmatprep.subr.mxu0 0.0
    %2080 = vmatpush1.msra.mxu0 0.0
    %2081 = vmatprep.subr.mxu0 0.0
    %2082 = vmatpush1.msra.mxu0 0.0
    %2083 = vmatprep.subr.mxu0 0.0
    %2084 = vmatpush1.msra.mxu0 0.0
    %2085 = vmatprep.subr.mxu0 0.0
    %2086 = vmatpush1.msra.mxu0 0.0
    %2087 = vmatprep.subr.mxu0 0.0
    %2088 = vmatpush1.msra.mxu0 0.0
    %2089 = vmatprep.mubr.f32.mxu0 0.0
    %2090 = vmatmul.mubr.f32.gmra.mrb[0].mxu0 %v2020
    %v2091 = vpop.f32.mrb[0].mxu0
    %v2092 = vadd.f32 0.0, %v2091
    %v2093 = vpop.f32.mrb[0].mxu0
    %2094 = vmatprep.mubr.f32.mxu0 0.0
    %2095 = vmatmul.mubr.f32.gmra.mrb[0].mxu0 %v2023
    %v2096 = vpop.f32.mrb[0].mxu0
    %v2097 = vadd.f32 0.0, %v2096
    %v2098 = vpop.f32.mrb[0].mxu0
    %2099 = vdwg.mxu0
    %2100 = vrot.lane.b32.xlu0 %v574, 96
    %v2101 = vpop.permute.xlu0 %2100
    %2102 = vrot.lane.b32.xlu0 %v579, 96
    %v2103 = vpop.permute.xlu0 %2102
    %v2107 = vsel %vm853, %v1737, 0
    %v2110 = vsel %vm853, %v1739, 0
    %2112 = vmatprep.subr.mxu0 0.0
    %2113 = vmatpush1.msra.mxu0 %v2101
    %2114 = vmatprep.subr.mxu0 0.0
    %2115 = vmatpush1.msra.mxu0 %v2103
    %2116 = vmatprep.subr.mxu0 0.0
    %2117 = vmatpush1.msra.mxu0 0.0
    %2118 = vmatprep.subr.mxu0 0.0
    %2119 = vmatpush1.msra.mxu0 0.0
    %2120 = vmatprep.subr.mxu0 0.0
    %2121 = vmatpush1.msra.mxu0 0.0
    %2122 = vmatprep.subr.mxu0 0.0
    %2123 = vmatpush1.msra.mxu0 0.0
    %2124 = vmatprep.subr.mxu0 0.0
    %2125 = vmatpush1.msra.mxu0 0.0
    %2126 = vmatprep.subr.mxu0 0.0
    %2127 = vmatpush1.msra.mxu0 0.0
    %2128 = vmatprep.subr.mxu0 0.0
    %2129 = vmatpush1.msra.mxu0 0.0
    %2130 = vmatprep.subr.mxu0 0.0
    %2131 = vmatpush1.msra.mxu0 0.0
    %2132 = vmatprep.subr.mxu0 0.0
    %2133 = vmatpush1.msra.mxu0 0.0
    %2134 = vmatprep.subr.mxu0 0.0
    %2135 = vmatpush1.msra.mxu0 0.0
    %2136 = vmatprep.subr.mxu0 0.0
    %2137 = vmatpush1.msra.mxu0 0.0
    %2138 = vmatprep.subr.mxu0 0.0
    %2139 = vmatpush1.msra.mxu0 0.0
    %2140 = vmatprep.subr.mxu0 0.0
    %2141 = vmatpush1.msra.mxu0 0.0
    %2142 = vmatprep.subr.mxu0 0.0
    %2143 = vmatpush1.msra.mxu0 0.0
    %2144 = vmatprep.subr.mxu0 0.0
    %2145 = vmatpush1.msra.mxu0 0.0
    %2146 = vmatprep.subr.mxu0 0.0
    %2147 = vmatpush1.msra.mxu0 0.0
    %2148 = vmatprep.subr.mxu0 0.0
    %2149 = vmatpush1.msra.mxu0 0.0
    %2150 = vmatprep.subr.mxu0 0.0
    %2151 = vmatpush1.msra.mxu0 0.0
    %2152 = vmatprep.subr.mxu0 0.0
    %2153 = vmatpush1.msra.mxu0 0.0
    %2154 = vmatprep.subr.mxu0 0.0
    %2155 = vmatpush1.msra.mxu0 0.0
    %2156 = vmatprep.subr.mxu0 0.0
    %2157 = vmatpush1.msra.mxu0 0.0
    %2158 = vmatprep.subr.mxu0 0.0
    %2159 = vmatpush1.msra.mxu0 0.0
    %2160 = vmatprep.subr.mxu0 0.0
    %2161 = vmatpush1.msra.mxu0 0.0
    %2162 = vmatprep.subr.mxu0 0.0
    %2163 = vmatpush1.msra.mxu0 0.0
    %2164 = vmatprep.subr.mxu0 0.0
    %2165 = vmatpush1.msra.mxu0 0.0
    %2166 = vmatprep.subr.mxu0 0.0
    %2167 = vmatpush1.msra.mxu0 0.0
    %2168 = vmatprep.subr.mxu0 0.0
    %2169 = vmatpush1.msra.mxu0 0.0
    %2170 = vmatprep.subr.mxu0 0.0
    %2171 = vmatpush1.msra.mxu0 0.0
    %2172 = vmatprep.subr.mxu0 0.0
    %2173 = vmatpush1.msra.mxu0 0.0
    %2174 = vmatprep.subr.mxu0 0.0
    %2175 = vmatpush1.msra.mxu0 0.0
    %2176 = vmatprep.mubr.f32.mxu0 0.0
    %2177 = vmatmul.mubr.f32.gmra.mrb[0].mxu0 %v2107
    %v2178 = vpop.f32.mrb[0].mxu0
    %v2179 = vadd.f32 0.0, %v2178
    %v2180 = vpop.f32.mrb[0].mxu0
    %2181 = vmatprep.mubr.f32.mxu0 0.0
    %2182 = vmatmul.mubr.f32.gmra.mrb[0].mxu0 %v2110
    %v2183 = vpop.f32.mrb[0].mxu0
    %v2184 = vadd.f32 0.0, %v2183
    %v2185 = vpop.f32.mrb[0].mxu0
    %2186 = vdwg.mxu0
    %2187 = vrot.lane.b32.xlu0 %v659, 96
    %v2188 = vpop.permute.xlu0 %2187
    %2189 = vrot.lane.b32.xlu0 %v664, 96
    %v2190 = vpop.permute.xlu0 %2189
    %v2194 = vsel %vm853, %v1741, 0
    %v2197 = vsel %vm853, %v1743, 0
    %2199 = vmatprep.subr.mxu0 0.0
    %2200 = vmatpush1.msra.mxu0 %v2188
    %2201 = vmatprep.subr.mxu0 0.0
    %2202 = vmatpush1.msra.mxu0 %v2190
    %2203 = vmatprep.subr.mxu0 0.0
    %2204 = vmatpush1.msra.mxu0 0.0
    %2205 = vmatprep.subr.mxu0 0.0
    %2206 = vmatpush1.msra.mxu0 0.0
    %2207 = vmatprep.subr.mxu0 0.0
    %2208 = vmatpush1.msra.mxu0 0.0
    %2209 = vmatprep.subr.mxu0 0.0
    %2210 = vmatpush1.msra.mxu0 0.0
    %2211 = vmatprep.subr.mxu0 0.0
    %2212 = vmatpush1.msra.mxu0 0.0
    %2213 = vmatprep.subr.mxu0 0.0
    %2214 = vmatpush1.msra.mxu0 0.0
    %2215 = vmatprep.subr.mxu0 0.0
    %2216 = vmatpush1.msra.mxu0 0.0
    %2217 = vmatprep.subr.mxu0 0.0
    %2218 = vmatpush1.msra.mxu0 0.0
    %2219 = vmatprep.subr.mxu0 0.0
    %2220 = vmatpush1.msra.mxu0 0.0
    %2221 = vmatprep.subr.mxu0 0.0
    %2222 = vmatpush1.msra.mxu0 0.0
    %2223 = vmatprep.subr.mxu0 0.0
    %2224 = vmatpush1.msra.mxu0 0.0
    %2225 = vmatprep.subr.mxu0 0.0
    %2226 = vmatpush1.msra.mxu0 0.0
    %2227 = vmatprep.subr.mxu0 0.0
    %2228 = vmatpush1.msra.mxu0 0.0
    %2229 = vmatprep.subr.mxu0 0.0
    %2230 = vmatpush1.msra.mxu0 0.0
    %2231 = vmatprep.subr.mxu0 0.0
    %2232 = vmatpush1.msra.mxu0 0.0
    %2233 = vmatprep.subr.mxu0 0.0
    %2234 = vmatpush1.msra.mxu0 0.0
    %2235 = vmatprep.subr.mxu0 0.0
    %2236 = vmatpush1.msra.mxu0 0.0
    %2237 = vmatprep.subr.mxu0 0.0
    %2238 = vmatpush1.msra.mxu0 0.0
    %2239 = vmatprep.subr.mxu0 0.0
    %2240 = vmatpush1.msra.mxu0 0.0
    %2241 = vmatprep.subr.mxu0 0.0
    %2242 = vmatpush1.msra.mxu0 0.0
    %2243 = vmatprep.subr.mxu0 0.0
    %2244 = vmatpush1.msra.mxu0 0.0
    %2245 = vmatprep.subr.mxu0 0.0
    %2246 = vmatpush1.msra.mxu0 0.0
    %2247 = vmatprep.subr.mxu0 0.0
    %2248 = vmatpush1.msra.mxu0 0.0
    %2249 = vmatprep.subr.mxu0 0.0
    %2250 = vmatpush1.msra.mxu0 0.0
    %2251 = vmatprep.subr.mxu0 0.0
    %2252 = vmatpush1.msra.mxu0 0.0
    %2253 = vmatprep.subr.mxu0 0.0
    %2254 = vmatpush1.msra.mxu0 0.0
    %2255 = vmatprep.subr.mxu0 0.0
    %2256 = vmatpush1.msra.mxu0 0.0
    %2257 = vmatprep.subr.mxu0 0.0
    %2258 = vmatpush1.msra.mxu0 0.0
    %2259 = vmatprep.subr.mxu0 0.0
    %2260 = vmatpush1.msra.mxu0 0.0
    %2261 = vmatprep.subr.mxu0 0.0
    %2262 = vmatpush1.msra.mxu0 0.0
    %2263 = vmatprep.mubr.f32.mxu0 0.0
    %2264 = vmatmul.mubr.f32.gmra.mrb[0].mxu0 %v2194
    %v2265 = vpop.f32.mrb[0].mxu0
    %v2266 = vadd.f32 0.0, %v2265
    %v2267 = vpop.f32.mrb[0].mxu0
    %2268 = vmatprep.mubr.f32.mxu0 0.0
    %2269 = vmatmul.mubr.f32.gmra.mrb[0].mxu0 %v2197
    %v2270 = vpop.f32.mrb[0].mxu0
    %v2271 = vadd.f32 0.0, %v2270
    %v2272 = vpop.f32.mrb[0].mxu0
    %2273 = vdwg.mxu0
    %2274 = vrot.lane.b32.xlu0 %v744, 96
    %v2275 = vpop.permute.xlu0 %2274
    %2276 = vrot.lane.b32.xlu0 %v749, 96
    %v2277 = vpop.permute.xlu0 %2276
    %v2281 = vsel %vm853, %v1745, 0
    %v2284 = vsel %vm853, %v1747, 0
    %2286 = vmatprep.subr.mxu0 0.0
    %2287 = vmatpush1.msra.mxu0 %v2275
    %2288 = vmatprep.subr.mxu0 0.0
    %2289 = vmatpush1.msra.mxu0 %v2277
    %2290 = vmatprep.subr.mxu0 0.0
    %2291 = vmatpush1.msra.mxu0 0.0
    %2292 = vmatprep.subr.mxu0 0.0
    %2293 = vmatpush1.msra.mxu0 0.0
    %2294 = vmatprep.subr.mxu0 0.0
    %2295 = vmatpush1.msra.mxu0 0.0
    %2296 = vmatprep.subr.mxu0 0.0
    %2297 = vmatpush1.msra.mxu0 0.0
    %2298 = vmatprep.subr.mxu0 0.0
    %2299 = vmatpush1.msra.mxu0 0.0
    %2300 = vmatprep.subr.mxu0 0.0
    %2301 = vmatpush1.msra.mxu0 0.0
    %2302 = vmatprep.subr.mxu0 0.0
    %2303 = vmatpush1.msra.mxu0 0.0
    %2304 = vmatprep.subr.mxu0 0.0
    %2305 = vmatpush1.msra.mxu0 0.0
    %2306 = vmatprep.subr.mxu0 0.0
    %2307 = vmatpush1.msra.mxu0 0.0
    %2308 = vmatprep.subr.mxu0 0.0
    %2309 = vmatpush1.msra.mxu0 0.0
    %2310 = vmatprep.subr.mxu0 0.0
    %2311 = vmatpush1.msra.mxu0 0.0
    %2312 = vmatprep.subr.mxu0 0.0
    %2313 = vmatpush1.msra.mxu0 0.0
    %2314 = vmatprep.subr.mxu0 0.0
    %2315 = vmatpush1.msra.mxu0 0.0
    %2316 = vmatprep.subr.mxu0 0.0
    %2317 = vmatpush1.msra.mxu0 0.0
    %2318 = vmatprep.subr.mxu0 0.0
    %2319 = vmatpush1.msra.mxu0 0.0
    %2320 = vmatprep.subr.mxu0 0.0
    %2321 = vmatpush1.msra.mxu0 0.0
    %2322 = vmatprep.subr.mxu0 0.0
    %2323 = vmatpush1.msra.mxu0 0.0
    %2324 = vmatprep.subr.mxu0 0.0
    %2325 = vmatpush1.msra.mxu0 0.0
    %2326 = vmatprep.subr.mxu0 0.0
    %2327 = vmatpush1.msra.mxu0 0.0
    %2328 = vmatprep.subr.mxu0 0.0
    %2329 = vmatpush1.msra.mxu0 0.0
    %2330 = vmatprep.subr.mxu0 0.0
    %2331 = vmatpush1.msra.mxu0 0.0
    %2332 = vmatprep.subr.mxu0 0.0
    %2333 = vmatpush1.msra.mxu0 0.0
    %2334 = vmatprep.subr.mxu0 0.0
    %2335 = vmatpush1.msra.mxu0 0.0
    %2336 = vmatprep.subr.mxu0 0.0
    %2337 = vmatpush1.msra.mxu0 0.0
    %2338 = vmatprep.subr.mxu0 0.0
    %2339 = vmatpush1.msra.mxu0 0.0
    %2340 = vmatprep.subr.mxu0 0.0
    %2341 = vmatpush1.msra.mxu0 0.0
    %2342 = vmatprep.subr.mxu0 0.0
    %2343 = vmatpush1.msra.mxu0 0.0
    %2344 = vmatprep.subr.mxu0 0.0
    %2345 = vmatpush1.msra.mxu0 0.0
    %2346 = vmatprep.subr.mxu0 0.0
    %2347 = vmatpush1.msra.mxu0 0.0
    %2348 = vmatprep.subr.mxu0 0.0
    %2349 = vmatpush1.msra.mxu0 0.0
    %2350 = vmatprep.mubr.f32.mxu0 0.0
    %2351 = vmatmul.mubr.f32.gmra.mrb[0].mxu0 %v2281
    %v2352 = vpop.f32.mrb[0].mxu0
    %v2353 = vadd.f32 0.0, %v2352
    %v2354 = vpop.f32.mrb[0].mxu0
    %2355 = vmatprep.mubr.f32.mxu0 0.0
    %2356 = vmatmul.mubr.f32.gmra.mrb[0].mxu0 %v2284
    %v2357 = vpop.f32.mrb[0].mxu0
    %v2358 = vadd.f32 0.0, %v2357
    %v2359 = vpop.f32.mrb[0].mxu0
    %2360 = vdwg.mxu0
    %2361 = vrot.lane.b32.xlu0 %v829, 96
    %v2362 = vpop.permute.xlu0 %2361
    %2363 = vrot.lane.b32.xlu0 %v834, 96
    %v2364 = vpop.permute.xlu0 %2363
    %v2368 = vsel %vm853, %v1749, 0
    %v2371 = vsel %vm853, %v1751, 0
    %2373 = vmatprep.subr.mxu0 0.0
    %2374 = vmatpush1.msra.mxu0 %v2362
    %2375 = vmatprep.subr.mxu0 0.0
    %2376 = vmatpush1.msra.mxu0 %v2364
    %2377 = vmatprep.subr.mxu0 0.0
    %2378 = vmatpush1.msra.mxu0 0.0
    %2379 = vmatprep.subr.mxu0 0.0
    %2380 = vmatpush1.msra.mxu0 0.0
    %2381 = vmatprep.subr.mxu0 0.0
    %2382 = vmatpush1.msra.mxu0 0.0
    %2383 = vmatprep.subr.mxu0 0.0
    %2384 = vmatpush1.msra.mxu0 0.0
    %2385 = vmatprep.subr.mxu0 0.0
    %2386 = vmatpush1.msra.mxu0 0.0
    %2387 = vmatprep.subr.mxu0 0.0
    %2388 = vmatpush1.msra.mxu0 0.0
    %2389 = vmatprep.subr.mxu0 0.0
    %2390 = vmatpush1.msra.mxu0 0.0
    %2391 = vmatprep.subr.mxu0 0.0
    %2392 = vmatpush1.msra.mxu0 0.0
    %2393 = vmatprep.subr.mxu0 0.0
    %2394 = vmatpush1.msra.mxu0 0.0
    %2395 = vmatprep.subr.mxu0 0.0
    %2396 = vmatpush1.msra.mxu0 0.0
    %2397 = vmatprep.subr.mxu0 0.0
    %2398 = vmatpush1.msra.mxu0 0.0
    %2399 = vmatprep.subr.mxu0 0.0
    %2400 = vmatpush1.msra.mxu0 0.0
    %2401 = vmatprep.subr.mxu0 0.0
    %2402 = vmatpush1.msra.mxu0 0.0
    %2403 = vmatprep.subr.mxu0 0.0
    %2404 = vmatpush1.msra.mxu0 0.0
    %2405 = vmatprep.subr.mxu0 0.0
    %2406 = vmatpush1.msra.mxu0 0.0
    %2407 = vmatprep.subr.mxu0 0.0
    %2408 = vmatpush1.msra.mxu0 0.0
    %2409 = vmatprep.subr.mxu0 0.0
    %2410 = vmatpush1.msra.mxu0 0.0
    %2411 = vmatprep.subr.mxu0 0.0
    %2412 = vmatpush1.msra.mxu0 0.0
    %2413 = vmatprep.subr.mxu0 0.0
    %2414 = vmatpush1.msra.mxu0 0.0
    %2415 = vmatprep.subr.mxu0 0.0
    %2416 = vmatpush1.msra.mxu0 0.0
    %2417 = vmatprep.subr.mxu0 0.0
    %2418 = vmatpush1.msra.mxu0 0.0
    %2419 = vmatprep.subr.mxu0 0.0
    %2420 = vmatpush1.msra.mxu0 0.0
    %2421 = vmatprep.subr.mxu0 0.0
    %2422 = vmatpush1.msra.mxu0 0.0
    %2423 = vmatprep.subr.mxu0 0.0
    %2424 = vmatpush1.msra.mxu0 0.0
    %2425 = vmatprep.subr.mxu0 0.0
    %2426 = vmatpush1.msra.mxu0 0.0
    %2427 = vmatprep.subr.mxu0 0.0
    %2428 = vmatpush1.msra.mxu0 0.0
    %2429 = vmatprep.subr.mxu0 0.0
    %2430 = vmatpush1.msra.mxu0 0.0
    %2431 = vmatprep.subr.mxu0 0.0
    %2432 = vmatpush1.msra.mxu0 0.0
    %2433 = vmatprep.subr.mxu0 0.0
    %2434 = vmatpush1.msra.mxu0 0.0
    %2435 = vmatprep.subr.mxu0 0.0
    %2436 = vmatpush1.msra.mxu0 0.0
    %2437 = vmatprep.mubr.f32.mxu0 0.0
    %2438 = vmatmul.mubr.f32.gmra.mrb[0].mxu0 %v2368
    %v2439 = vpop.f32.mrb[0].mxu0
    %v2440 = vadd.f32 0.0, %v2439
    %v2441 = vpop.f32.mrb[0].mxu0
    %2442 = vmatprep.mubr.f32.mxu0 0.0
    %2443 = vmatmul.mubr.f32.gmra.mrb[0].mxu0 %v2371
    %v2444 = vpop.f32.mrb[0].mxu0
    %v2445 = vadd.f32 0.0, %v2444
    %v2446 = vpop.f32.mrb[0].mxu0
    %2447 = vdwg.mxu0
    %v2449 = vsel %vm853, %v1831, 0
    %v2452 = vsel %vm853, %v1836, 0
    %2454 = vmatprep.subr.mxu0 0.0
    %2455 = vmatpush1.msra.mxu0 %v150
    %2456 = vmatprep.subr.mxu0 0.0
    %2457 = vmatpush1.msra.mxu0 %v151
    %2458 = vmatprep.subr.mxu0 0.0
    %2459 = vmatpush1.msra.mxu0 0.0
    %2460 = vmatprep.subr.mxu0 0.0
    %2461 = vmatpush1.msra.mxu0 0.0
    %2462 = vmatprep.subr.mxu0 0.0
    %2463 = vmatpush1.msra.mxu0 0.0
    %2464 = vmatprep.subr.mxu0 0.0
    %2465 = vmatpush1.msra.mxu0 0.0
    %2466 = vmatprep.subr.mxu0 0.0
    %2467 = vmatpush1.msra.mxu0 0.0
    %2468 = vmatprep.subr.mxu0 0.0
    %2469 = vmatpush1.msra.mxu0 0.0
    %2470 = vmatprep.subr.mxu0 0.0
    %2471 = vmatpush1.msra.mxu0 0.0
    %2472 = vmatprep.subr.mxu0 0.0
    %2473 = vmatpush1.msra.mxu0 0.0
    %2474 = vmatprep.subr.mxu0 0.0
    %2475 = vmatpush1.msra.mxu0 0.0
    %2476 = vmatprep.subr.mxu0 0.0
    %2477 = vmatpush1.msra.mxu0 0.0
    %2478 = vmatprep.subr.mxu0 0.0
    %2479 = vmatpush1.msra.mxu0 0.0
    %2480 = vmatprep.subr.mxu0 0.0
    %2481 = vmatpush1.msra.mxu0 0.0
    %2482 = vmatprep.subr.mxu0 0.0
    %2483 = vmatpush1.msra.mxu0 0.0
    %2484 = vmatprep.subr.mxu0 0.0
    %2485 = vmatpush1.msra.mxu0 0.0
    %2486 = vmatprep.subr.mxu0 0.0
    %2487 = vmatpush1.msra.mxu0 0.0
    %2488 = vmatprep.subr.mxu0 0.0
    %2489 = vmatpush1.msra.mxu0 0.0
    %2490 = vmatprep.subr.mxu0 0.0
    %2491 = vmatpush1.msra.mxu0 0.0
    %2492 = vmatprep.subr.mxu0 0.0
    %2493 = vmatpush1.msra.mxu0 0.0
    %2494 = vmatprep.subr.mxu0 0.0
    %2495 = vmatpush1.msra.mxu0 0.0
    %2496 = vmatprep.subr.mxu0 0.0
    %2497 = vmatpush1.msra.mxu0 0.0
    %2498 = vmatprep.subr.mxu0 0.0
    %2499 = vmatpush1.msra.mxu0 0.0
    %2500 = vmatprep.subr.mxu0 0.0
    %2501 = vmatpush1.msra.mxu0 0.0
    %2502 = vmatprep.subr.mxu0 0.0
    %2503 = vmatpush1.msra.mxu0 0.0
    %2504 = vmatprep.subr.mxu0 0.0
    %2505 = vmatpush1.msra.mxu0 0.0
    %2506 = vmatprep.subr.mxu0 0.0
    %2507 = vmatpush1.msra.mxu0 0.0
    %2508 = vmatprep.subr.mxu0 0.0
    %2509 = vmatpush1.msra.mxu0 0.0
    %2510 = vmatprep.subr.mxu0 0.0
    %2511 = vmatpush1.msra.mxu0 0.0
    %2512 = vmatprep.subr.mxu0 0.0
    %2513 = vmatpush1.msra.mxu0 0.0
    %2514 = vmatprep.subr.mxu0 0.0
    %2515 = vmatpush1.msra.mxu0 0.0
    %2516 = vmatprep.subr.mxu0 0.0
    %2517 = vmatpush1.msra.mxu0 0.0
    %2518 = vmatprep.mubr.f32.mxu0 0.0
    %2519 = vmatmul.mubr.f32.gmra.mrb[0].mxu0 %v2449
    %v2520 = vpop.f32.mrb[0].mxu0
    %v2521 = vadd.f32 0.0, %v2520
    %v2522 = vpop.f32.mrb[0].mxu0
    %2523 = vmatprep.mubr.f32.mxu0 0.0
    %2524 = vmatmul.mubr.f32.gmra.mrb[0].mxu0 %v2452
    %v2525 = vpop.f32.mrb[0].mxu0
    %v2526 = vadd.f32 0.0, %v2525
    %v2527 = vpop.f32.mrb[0].mxu0
    %2528 = vdwg.mxu0
    %v2530 = vsel %vm853, %v1918, 0
    %v2533 = vsel %vm853, %v1923, 0
    %2535 = vmatprep.subr.mxu0 0.0
    %2536 = vmatpush1.msra.mxu0 %v152
    %2537 = vmatprep.subr.mxu0 0.0
    %2538 = vmatpush1.msra.mxu0 %v153
    %2539 = vmatprep.subr.mxu0 0.0
    %2540 = vmatpush1.msra.mxu0 0.0
    %2541 = vmatprep.subr.mxu0 0.0
    %2542 = vmatpush1.msra.mxu0 0.0
    %2543 = vmatprep.subr.mxu0 0.0
    %2544 = vmatpush1.msra.mxu0 0.0
    %2545 = vmatprep.subr.mxu0 0.0
    %2546 = vmatpush1.msra.mxu0 0.0
    %2547 = vmatprep.subr.mxu0 0.0
    %2548 = vmatpush1.msra.mxu0 0.0
    %2549 = vmatprep.subr.mxu0 0.0
    %2550 = vmatpush1.msra.mxu0 0.0
    %2551 = vmatprep.subr.mxu0 0.0
    %2552 = vmatpush1.msra.mxu0 0.0
    %2553 = vmatprep.subr.mxu0 0.0
    %2554 = vmatpush1.msra.mxu0 0.0
    %2555 = vmatprep.subr.mxu0 0.0
    %2556 = vmatpush1.msra.mxu0 0.0
    %2557 = vmatprep.subr.mxu0 0.0
    %2558 = vmatpush1.msra.mxu0 0.0
    %2559 = vmatprep.subr.mxu0 0.0
    %2560 = vmatpush1.msra.mxu0 0.0
    %2561 = vmatprep.subr.mxu0 0.0
    %2562 = vmatpush1.msra.mxu0 0.0
    %2563 = vmatprep.subr.mxu0 0.0
    %2564 = vmatpush1.msra.mxu0 0.0
    %2565 = vmatprep.subr.mxu0 0.0
    %2566 = vmatpush1.msra.mxu0 0.0
    %2567 = vmatprep.subr.mxu0 0.0
    %2568 = vmatpush1.msra.mxu0 0.0
    %2569 = vmatprep.subr.mxu0 0.0
    %2570 = vmatpush1.msra.mxu0 0.0
    %2571 = vmatprep.subr.mxu0 0.0
    %2572 = vmatpush1.msra.mxu0 0.0
    %2573 = vmatprep.subr.mxu0 0.0
    %2574 = vmatpush1.msra.mxu0 0.0
    %2575 = vmatprep.subr.mxu0 0.0
    %2576 = vmatpush1.msra.mxu0 0.0
    %2577 = vmatprep.subr.mxu0 0.0
    %2578 = vmatpush1.msra.mxu0 0.0
    %2579 = vmatprep.subr.mxu0 0.0
    %2580 = vmatpush1.msra.mxu0 0.0
    %2581 = vmatprep.subr.mxu0 0.0
    %2582 = vmatpush1.msra.mxu0 0.0
    %2583 = vmatprep.subr.mxu0 0.0
    %2584 = vmatpush1.msra.mxu0 0.0
    %2585 = vmatprep.subr.mxu0 0.0
    %2586 = vmatpush1.msra.mxu0 0.0
    %2587 = vmatprep.subr.mxu0 0.0
    %2588 = vmatpush1.msra.mxu0 0.0
    %2589 = vmatprep.subr.mxu0 0.0
    %2590 = vmatpush1.msra.mxu0 0.0
    %2591 = vmatprep.subr.mxu0 0.0
    %2592 = vmatpush1.msra.mxu0 0.0
    %2593 = vmatprep.subr.mxu0 0.0
    %2594 = vmatpush1.msra.mxu0 0.0
    %2595 = vmatprep.subr.mxu0 0.0
    %2596 = vmatpush1.msra.mxu0 0.0
    %2597 = vmatprep.subr.mxu0 0.0
    %2598 = vmatpush1.msra.mxu0 0.0
    %2599 = vmatprep.mubr.f32.mxu0 0.0
    %2600 = vmatmul.mubr.f32.gmra.mrb[0].mxu0 %v2530
    %v2601 = vpop.f32.mrb[0].mxu0
    %v2602 = vadd.f32 0.0, %v2601
    %v2603 = vpop.f32.mrb[0].mxu0
    %2604 = vmatprep.mubr.f32.mxu0 0.0
    %2605 = vmatmul.mubr.f32.gmra.mrb[0].mxu0 %v2533
    %v2606 = vpop.f32.mrb[0].mxu0
    %v2607 = vadd.f32 0.0, %v2606
    %v2608 = vpop.f32.mrb[0].mxu0
    %2609 = vdwg.mxu0
    %v2611 = vsel %vm853, %v2005, 0
    %v2614 = vsel %vm853, %v2010, 0
    %2616 = vmatprep.subr.mxu0 0.0
    %2617 = vmatpush1.msra.mxu0 %v154
    %2618 = vmatprep.subr.mxu0 0.0
    %2619 = vmatpush1.msra.mxu0 %v155
    %2620 = vmatprep.subr.mxu0 0.0
    %2621 = vmatpush1.msra.mxu0 0.0
    %2622 = vmatprep.subr.mxu0 0.0
    %2623 = vmatpush1.msra.mxu0 0.0
    %2624 = vmatprep.subr.mxu0 0.0
    %2625 = vmatpush1.msra.mxu0 0.0
    %2626 = vmatprep.subr.mxu0 0.0
    %2627 = vmatpush1.msra.mxu0 0.0
    %2628 = vmatprep.subr.mxu0 0.0
    %2629 = vmatpush1.msra.mxu0 0.0
    %2630 = vmatprep.subr.mxu0 0.0
    %2631 = vmatpush1.msra.mxu0 0.0
    %2632 = vmatprep.subr.mxu0 0.0
    %2633 = vmatpush1.msra.mxu0 0.0
    %2634 = vmatprep.subr.mxu0 0.0
    %2635 = vmatpush1.msra.mxu0 0.0
    %2636 = vmatprep.subr.mxu0 0.0
    %2637 = vmatpush1.msra.mxu0 0.0
    %2638 = vmatprep.subr.mxu0 0.0
    %2639 = vmatpush1.msra.mxu0 0.0
    %2640 = vmatprep.subr.mxu0 0.0
    %2641 = vmatpush1.msra.mxu0 0.0
    %2642 = vmatprep.subr.mxu0 0.0
    %2643 = vmatpush1.msra.mxu0 0.0
    %2644 = vmatprep.subr.mxu0 0.0
    %2645 = vmatpush1.msra.mxu0 0.0
    %2646 = vmatprep.subr.mxu0 0.0
    %2647 = vmatpush1.msra.mxu0 0.0
    %2648 = vmatprep.subr.mxu0 0.0
    %2649 = vmatpush1.msra.mxu0 0.0
    %2650 = vmatprep.subr.mxu0 0.0
    %2651 = vmatpush1.msra.mxu0 0.0
    %2652 = vmatprep.subr.mxu0 0.0
    %2653 = vmatpush1.msra.mxu0 0.0
    %2654 = vmatprep.subr.mxu0 0.0
    %2655 = vmatpush1.msra.mxu0 0.0
    %2656 = vmatprep.subr.mxu0 0.0
    %2657 = vmatpush1.msra.mxu0 0.0
    %2658 = vmatprep.subr.mxu0 0.0
    %2659 = vmatpush1.msra.mxu0 0.0
    %2660 = vmatprep.subr.mxu0 0.0
    %2661 = vmatpush1.msra.mxu0 0.0
    %2662 = vmatprep.subr.mxu0 0.0
    %2663 = vmatpush1.msra.mxu0 0.0
    %2664 = vmatprep.subr.mxu0 0.0
    %2665 = vmatpush1.msra.mxu0 0.0
    %2666 = vmatprep.subr.mxu0 0.0
    %2667 = vmatpush1.msra.mxu0 0.0
    %2668 = vmatprep.subr.mxu0 0.0
    %2669 = vmatpush1.msra.mxu0 0.0
    %2670 = vmatprep.subr.mxu0 0.0
    %2671 = vmatpush1.msra.mxu0 0.0
    %2672 = vmatprep.subr.mxu0 0.0
    %2673 = vmatpush1.msra.mxu0 0.0
    %2674 = vmatprep.subr.mxu0 0.0
    %2675 = vmatpush1.msra.mxu0 0.0
    %2676 = vmatprep.subr.mxu0 0.0
    %2677 = vmatpush1.msra.mxu0 0.0
    %2678 = vmatprep.subr.mxu0 0.0
    %2679 = vmatpush1.msra.mxu0 0.0
    %2680 = vmatprep.mubr.f32.mxu0 0.0
    %2681 = vmatmul.mubr.f32.gmra.mrb[0].mxu0 %v2611
    %v2682 = vpop.f32.mrb[0].mxu0
    %v2683 = vadd.f32 0.0, %v2682
    %v2684 = vpop.f32.mrb[0].mxu0
    %2685 = vmatprep.mubr.f32.mxu0 0.0
    %2686 = vmatmul.mubr.f32.gmra.mrb[0].mxu0 %v2614
    %v2687 = vpop.f32.mrb[0].mxu0
    %v2688 = vadd.f32 0.0, %v2687
    %v2689 = vpop.f32.mrb[0].mxu0
    %2690 = vdwg.mxu0
    %v2692 = vsel %vm853, %v2092, 0
    %v2695 = vsel %vm853, %v2097, 0
    %2697 = vmatprep.subr.mxu0 0.0
    %2698 = vmatpush1.msra.mxu0 %v156
    %2699 = vmatprep.subr.mxu0 0.0
    %2700 = vmatpush1.msra.mxu0 %v157
    %2701 = vmatprep.subr.mxu0 0.0
    %2702 = vmatpush1.msra.mxu0 0.0
    %2703 = vmatprep.subr.mxu0 0.0
    %2704 = vmatpush1.msra.mxu0 0.0
    %2705 = vmatprep.subr.mxu0 0.0
    %2706 = vmatpush1.msra.mxu0 0.0
    %2707 = vmatprep.subr.mxu0 0.0
    %2708 = vmatpush1.msra.mxu0 0.0
    %2709 = vmatprep.subr.mxu0 0.0
    %2710 = vmatpush1.msra.mxu0 0.0
    %2711 = vmatprep.subr.mxu0 0.0
    %2712 = vmatpush1.msra.mxu0 0.0
    %2713 = vmatprep.subr.mxu0 0.0
    %2714 = vmatpush1.msra.mxu0 0.0
    %2715 = vmatprep.subr.mxu0 0.0
    %2716 = vmatpush1.msra.mxu0 0.0
    %2717 = vmatprep.subr.mxu0 0.0
    %2718 = vmatpush1.msra.mxu0 0.0
    %2719 = vmatprep.subr.mxu0 0.0
    %2720 = vmatpush1.msra.mxu0 0.0
    %2721 = vmatprep.subr.mxu0 0.0
    %2722 = vmatpush1.msra.mxu0 0.0
    %2723 = vmatprep.subr.mxu0 0.0
    %2724 = vmatpush1.msra.mxu0 0.0
    %2725 = vmatprep.subr.mxu0 0.0
    %2726 = vmatpush1.msra.mxu0 0.0
    %2727 = vmatprep.subr.mxu0 0.0
    %2728 = vmatpush1.msra.mxu0 0.0
    %2729 = vmatprep.subr.mxu0 0.0
    %2730 = vmatpush1.msra.mxu0 0.0
    %2731 = vmatprep.subr.mxu0 0.0
    %2732 = vmatpush1.msra.mxu0 0.0
    %2733 = vmatprep.subr.mxu0 0.0
    %2734 = vmatpush1.msra.mxu0 0.0
    %2735 = vmatprep.subr.mxu0 0.0
    %2736 = vmatpush1.msra.mxu0 0.0
    %2737 = vmatprep.subr.mxu0 0.0
    %2738 = vmatpush1.msra.mxu0 0.0
    %2739 = vmatprep.subr.mxu0 0.0
    %2740 = vmatpush1.msra.mxu0 0.0
    %2741 = vmatprep.subr.mxu0 0.0
    %2742 = vmatpush1.msra.mxu0 0.0
    %2743 = vmatprep.subr.mxu0 0.0
    %2744 = vmatpush1.msra.mxu0 0.0
    %2745 = vmatprep.subr.mxu0 0.0
    %2746 = vmatpush1.msra.mxu0 0.0
    %2747 = vmatprep.subr.mxu0 0.0
    %2748 = vmatpush1.msra.mxu0 0.0
    %2749 = vmatprep.subr.mxu0 0.0
    %2750 = vmatpush1.msra.mxu0 0.0
    %2751 = vmatprep.subr.mxu0 0.0
    %2752 = vmatpush1.msra.mxu0 0.0
    %2753 = vmatprep.subr.mxu0 0.0
    %2754 = vmatpush1.msra.mxu0 0.0
    %2755 = vmatprep.subr.mxu0 0.0
    %2756 = vmatpush1.msra.mxu0 0.0
    %2757 = vmatprep.subr.mxu0 0.0
    %2758 = vmatpush1.msra.mxu0 0.0
    %2759 = vmatprep.subr.mxu0 0.0
    %2760 = vmatpush1.msra.mxu0 0.0
    %2761 = vmatprep.mubr.f32.mxu0 0.0
    %2762 = vmatmul.mubr.f32.gmra.mrb[0].mxu0 %v2692
    %v2763 = vpop.f32.mrb[0].mxu0
    %v2764 = vadd.f32 0.0, %v2763
    %v2765 = vpop.f32.mrb[0].mxu0
    %2766 = vmatprep.mubr.f32.mxu0 0.0
    %2767 = vmatmul.mubr.f32.gmra.mrb[0].mxu0 %v2695
    %v2768 = vpop.f32.mrb[0].mxu0
    %v2769 = vadd.f32 0.0, %v2768
    %v2770 = vpop.f32.mrb[0].mxu0
    %2771 = vdwg.mxu0
    %v2773 = vsel %vm853, %v2179, 0
    %v2776 = vsel %vm853, %v2184, 0
    %2778 = vmatprep.subr.mxu0 0.0
    %2779 = vmatpush1.msra.mxu0 %v158
    %2780 = vmatprep.subr.mxu0 0.0
    %2781 = vmatpush1.msra.mxu0 %v159
    %2782 = vmatprep.subr.mxu0 0.0
    %2783 = vmatpush1.msra.mxu0 0.0
    %2784 = vmatprep.subr.mxu0 0.0
    %2785 = vmatpush1.msra.mxu0 0.0
    %2786 = vmatprep.subr.mxu0 0.0
    %2787 = vmatpush1.msra.mxu0 0.0
    %2788 = vmatprep.subr.mxu0 0.0
    %2789 = vmatpush1.msra.mxu0 0.0
    %2790 = vmatprep.subr.mxu0 0.0
    %2791 = vmatpush1.msra.mxu0 0.0
    %2792 = vmatprep.subr.mxu0 0.0
    %2793 = vmatpush1.msra.mxu0 0.0
    %2794 = vmatprep.subr.mxu0 0.0
    %2795 = vmatpush1.msra.mxu0 0.0
    %2796 = vmatprep.subr.mxu0 0.0
    %2797 = vmatpush1.msra.mxu0 0.0
    %2798 = vmatprep.subr.mxu0 0.0
    %2799 = vmatpush1.msra.mxu0 0.0
    %2800 = vmatprep.subr.mxu0 0.0
    %2801 = vmatpush1.msra.mxu0 0.0
    %2802 = vmatprep.subr.mxu0 0.0
    %2803 = vmatpush1.msra.mxu0 0.0
    %2804 = vmatprep.subr.mxu0 0.0
    %2805 = vmatpush1.msra.mxu0 0.0
    %2806 = vmatprep.subr.mxu0 0.0
    %2807 = vmatpush1.msra.mxu0 0.0
    %2808 = vmatprep.subr.mxu0 0.0
    %2809 = vmatpush1.msra.mxu0 0.0
    %2810 = vmatprep.subr.mxu0 0.0
    %2811 = vmatpush1.msra.mxu0 0.0
    %2812 = vmatprep.subr.mxu0 0.0
    %2813 = vmatpush1.msra.mxu0 0.0
    %2814 = vmatprep.subr.mxu0 0.0
    %2815 = vmatpush1.msra.mxu0 0.0
    %2816 = vmatprep.subr.mxu0 0.0
    %2817 = vmatpush1.msra.mxu0 0.0
    %2818 = vmatprep.subr.mxu0 0.0
    %2819 = vmatpush1.msra.mxu0 0.0
    %2820 = vmatprep.subr.mxu0 0.0
    %2821 = vmatpush1.msra.mxu0 0.0
    %2822 = vmatprep.subr.mxu0 0.0
    %2823 = vmatpush1.msra.mxu0 0.0
    %2824 = vmatprep.subr.mxu0 0.0
    %2825 = vmatpush1.msra.mxu0 0.0
    %2826 = vmatprep.subr.mxu0 0.0
    %2827 = vmatpush1.msra.mxu0 0.0
    %2828 = vmatprep.subr.mxu0 0.0
    %2829 = vmatpush1.msra.mxu0 0.0
    %2830 = vmatprep.subr.mxu0 0.0
    %2831 = vmatpush1.msra.mxu0 0.0
    %2832 = vmatprep.subr.mxu0 0.0
    %2833 = vmatpush1.msra.mxu0 0.0
    %2834 = vmatprep.subr.mxu0 0.0
    %2835 = vmatpush1.msra.mxu0 0.0
    %2836 = vmatprep.subr.mxu0 0.0
    %2837 = vmatpush1.msra.mxu0 0.0
    %2838 = vmatprep.subr.mxu0 0.0
    %2839 = vmatpush1.msra.mxu0 0.0
    %2840 = vmatprep.subr.mxu0 0.0
    %2841 = vmatpush1.msra.mxu0 0.0
    %2842 = vmatprep.mubr.f32.mxu0 0.0
    %2843 = vmatmul.mubr.f32.gmra.mrb[0].mxu0 %v2773
    %v2844 = vpop.f32.mrb[0].mxu0
    %v2845 = vadd.f32 0.0, %v2844
    %v2846 = vpop.f32.mrb[0].mxu0
    %2847 = vmatprep.mubr.f32.mxu0 0.0
    %2848 = vmatmul.mubr.f32.gmra.mrb[0].mxu0 %v2776
    %v2849 = vpop.f32.mrb[0].mxu0
    %v2850 = vadd.f32 0.0, %v2849
    %v2851 = vpop.f32.mrb[0].mxu0
    %2852 = vdwg.mxu0
    %v2854 = vsel %vm853, %v2266, 0
    %v2857 = vsel %vm853, %v2271, 0
    %2859 = vmatprep.subr.mxu0 0.0
    %2860 = vmatpush1.msra.mxu0 %v160
    %2861 = vmatprep.subr.mxu0 0.0
    %2862 = vmatpush1.msra.mxu0 %v161
    %2863 = vmatprep.subr.mxu0 0.0
    %2864 = vmatpush1.msra.mxu0 0.0
    %2865 = vmatprep.subr.mxu0 0.0
    %2866 = vmatpush1.msra.mxu0 0.0
    %2867 = vmatprep.subr.mxu0 0.0
    %2868 = vmatpush1.msra.mxu0 0.0
    %2869 = vmatprep.subr.mxu0 0.0
    %2870 = vmatpush1.msra.mxu0 0.0
    %2871 = vmatprep.subr.mxu0 0.0
    %2872 = vmatpush1.msra.mxu0 0.0
    %2873 = vmatprep.subr.mxu0 0.0
    %2874 = vmatpush1.msra.mxu0 0.0
    %2875 = vmatprep.subr.mxu0 0.0
    %2876 = vmatpush1.msra.mxu0 0.0
    %2877 = vmatprep.subr.mxu0 0.0
    %2878 = vmatpush1.msra.mxu0 0.0
    %2879 = vmatprep.subr.mxu0 0.0
    %2880 = vmatpush1.msra.mxu0 0.0
    %2881 = vmatprep.subr.mxu0 0.0
    %2882 = vmatpush1.msra.mxu0 0.0
    %2883 = vmatprep.subr.mxu0 0.0
    %2884 = vmatpush1.msra.mxu0 0.0
    %2885 = vmatprep.subr.mxu0 0.0
    %2886 = vmatpush1.msra.mxu0 0.0
    %2887 = vmatprep.subr.mxu0 0.0
    %2888 = vmatpush1.msra.mxu0 0.0
    %2889 = vmatprep.subr.mxu0 0.0
    %2890 = vmatpush1.msra.mxu0 0.0
    %2891 = vmatprep.subr.mxu0 0.0
    %2892 = vmatpush1.msra.mxu0 0.0
    %2893 = vmatprep.subr.mxu0 0.0
    %2894 = vmatpush1.msra.mxu0 0.0
    %2895 = vmatprep.subr.mxu0 0.0
    %2896 = vmatpush1.msra.mxu0 0.0
    %2897 = vmatprep.subr.mxu0 0.0
    %2898 = vmatpush1.msra.mxu0 0.0
    %2899 = vmatprep.subr.mxu0 0.0
    %2900 = vmatpush1.msra.mxu0 0.0
    %2901 = vmatprep.subr.mxu0 0.0
    %2902 = vmatpush1.msra.mxu0 0.0
    %2903 = vmatprep.subr.mxu0 0.0
    %2904 = vmatpush1.msra.mxu0 0.0
    %2905 = vmatprep.subr.mxu0 0.0
    %2906 = vmatpush1.msra.mxu0 0.0
    %2907 = vmatprep.subr.mxu0 0.0
    %2908 = vmatpush1.msra.mxu0 0.0
    %2909 = vmatprep.subr.mxu0 0.0
    %2910 = vmatpush1.msra.mxu0 0.0
    %2911 = vmatprep.subr.mxu0 0.0
    %2912 = vmatpush1.msra.mxu0 0.0
    %2913 = vmatprep.subr.mxu0 0.0
    %2914 = vmatpush1.msra.mxu0 0.0
    %2915 = vmatprep.subr.mxu0 0.0
    %2916 = vmatpush1.msra.mxu0 0.0
    %2917 = vmatprep.subr.mxu0 0.0
    %2918 = vmatpush1.msra.mxu0 0.0
    %2919 = vmatprep.subr.mxu0 0.0
    %2920 = vmatpush1.msra.mxu0 0.0
    %2921 = vmatprep.subr.mxu0 0.0
    %2922 = vmatpush1.msra.mxu0 0.0
    %2923 = vmatprep.mubr.f32.mxu0 0.0
    %2924 = vmatmul.mubr.f32.gmra.mrb[0].mxu0 %v2854
    %v2925 = vpop.f32.mrb[0].mxu0
    %v2926 = vadd.f32 0.0, %v2925
    %v2927 = vpop.f32.mrb[0].mxu0
    %2928 = vmatprep.mubr.f32.mxu0 0.0
    %2929 = vmatmul.mubr.f32.gmra.mrb[0].mxu0 %v2857
    %v2930 = vpop.f32.mrb[0].mxu0
    %v2931 = vadd.f32 0.0, %v2930
    %v2932 = vpop.f32.mrb[0].mxu0
    %2933 = vdwg.mxu0
    %v2935 = vsel %vm853, %v2353, 0
    %v2938 = vsel %vm853, %v2358, 0
    %2940 = vmatprep.subr.mxu0 0.0
    %2941 = vmatpush1.msra.mxu0 %v162
    %2942 = vmatprep.subr.mxu0 0.0
    %2943 = vmatpush1.msra.mxu0 %v163
    %2944 = vmatprep.subr.mxu0 0.0
    %2945 = vmatpush1.msra.mxu0 0.0
    %2946 = vmatprep.subr.mxu0 0.0
    %2947 = vmatpush1.msra.mxu0 0.0
    %2948 = vmatprep.subr.mxu0 0.0
    %2949 = vmatpush1.msra.mxu0 0.0
    %2950 = vmatprep.subr.mxu0 0.0
    %2951 = vmatpush1.msra.mxu0 0.0
    %2952 = vmatprep.subr.mxu0 0.0
    %2953 = vmatpush1.msra.mxu0 0.0
    %2954 = vmatprep.subr.mxu0 0.0
    %2955 = vmatpush1.msra.mxu0 0.0
    %2956 = vmatprep.subr.mxu0 0.0
    %2957 = vmatpush1.msra.mxu0 0.0
    %2958 = vmatprep.subr.mxu0 0.0
    %2959 = vmatpush1.msra.mxu0 0.0
    %2960 = vmatprep.subr.mxu0 0.0
    %2961 = vmatpush1.msra.mxu0 0.0
    %2962 = vmatprep.subr.mxu0 0.0
    %2963 = vmatpush1.msra.mxu0 0.0
    %2964 = vmatprep.subr.mxu0 0.0
    %2965 = vmatpush1.msra.mxu0 0.0
    %2966 = vmatprep.subr.mxu0 0.0
    %2967 = vmatpush1.msra.mxu0 0.0
    %2968 = vmatprep.subr.mxu0 0.0
    %2969 = vmatpush1.msra.mxu0 0.0
    %2970 = vmatprep.subr.mxu0 0.0
    %2971 = vmatpush1.msra.mxu0 0.0
    %2972 = vmatprep.subr.mxu0 0.0
    %2973 = vmatpush1.msra.mxu0 0.0
    %2974 = vmatprep.subr.mxu0 0.0
    %2975 = vmatpush1.msra.mxu0 0.0
    %2976 = vmatprep.subr.mxu0 0.0
    %2977 = vmatpush1.msra.mxu0 0.0
    %2978 = vmatprep.subr.mxu0 0.0
    %2979 = vmatpush1.msra.mxu0 0.0
    %2980 = vmatprep.subr.mxu0 0.0
    %2981 = vmatpush1.msra.mxu0 0.0
    %2982 = vmatprep.subr.mxu0 0.0
    %2983 = vmatpush1.msra.mxu0 0.0
    %2984 = vmatprep.subr.mxu0 0.0
    %2985 = vmatpush1.msra.mxu0 0.0
    %2986 = vmatprep.subr.mxu0 0.0
    %2987 = vmatpush1.msra.mxu0 0.0
    %2988 = vmatprep.subr.mxu0 0.0
    %2989 = vmatpush1.msra.mxu0 0.0
    %2990 = vmatprep.subr.mxu0 0.0
    %2991 = vmatpush1.msra.mxu0 0.0
    %2992 = vmatprep.subr.mxu0 0.0
    %2993 = vmatpush1.msra.mxu0 0.0
    %2994 = vmatprep.subr.mxu0 0.0
    %2995 = vmatpush1.msra.mxu0 0.0
    %2996 = vmatprep.subr.mxu0 0.0
    %2997 = vmatpush1.msra.mxu0 0.0
    %2998 = vmatprep.subr.mxu0 0.0
    %2999 = vmatpush1.msra.mxu0 0.0
    %3000 = vmatprep.subr.mxu0 0.0
    %3001 = vmatpush1.msra.mxu0 0.0
    %3002 = vmatprep.subr.mxu0 0.0
    %3003 = vmatpush1.msra.mxu0 0.0
    %3004 = vmatprep.mubr.f32.mxu0 0.0
    %3005 = vmatmul.mubr.f32.gmra.mrb[0].mxu0 %v2935
    %v3006 = vpop.f32.mrb[0].mxu0
    %v3007 = vadd.f32 0.0, %v3006
    %v3008 = vpop.f32.mrb[0].mxu0
    %3009 = vmatprep.mubr.f32.mxu0 0.0
    %3010 = vmatmul.mubr.f32.gmra.mrb[0].mxu0 %v2938
    %v3011 = vpop.f32.mrb[0].mxu0
    %v3012 = vadd.f32 0.0, %v3011
    %v3013 = vpop.f32.mrb[0].mxu0
    %3014 = vdwg.mxu0
    %v3016 = vsel %vm853, %v2440, 0
    %v3019 = vsel %vm853, %v2445, 0
    %3021 = vmatprep.subr.mxu0 0.0
    %3022 = vmatpush1.msra.mxu0 %v164
    %3023 = vmatprep.subr.mxu0 0.0
    %3024 = vmatpush1.msra.mxu0 %v165
    %3025 = vmatprep.subr.mxu0 0.0
    %3026 = vmatpush1.msra.mxu0 0.0
    %3027 = vmatprep.subr.mxu0 0.0
    %3028 = vmatpush1.msra.mxu0 0.0
    %3029 = vmatprep.subr.mxu0 0.0
    %3030 = vmatpush1.msra.mxu0 0.0
    %3031 = vmatprep.subr.mxu0 0.0
    %3032 = vmatpush1.msra.mxu0 0.0
    %3033 = vmatprep.subr.mxu0 0.0
    %3034 = vmatpush1.msra.mxu0 0.0
    %3035 = vmatprep.subr.mxu0 0.0
    %3036 = vmatpush1.msra.mxu0 0.0
    %3037 = vmatprep.subr.mxu0 0.0
    %3038 = vmatpush1.msra.mxu0 0.0
    %3039 = vmatprep.subr.mxu0 0.0
    %3040 = vmatpush1.msra.mxu0 0.0
    %3041 = vmatprep.subr.mxu0 0.0
    %3042 = vmatpush1.msra.mxu0 0.0
    %3043 = vmatprep.subr.mxu0 0.0
    %3044 = vmatpush1.msra.mxu0 0.0
    %3045 = vmatprep.subr.mxu0 0.0
    %3046 = vmatpush1.msra.mxu0 0.0
    %3047 = vmatprep.subr.mxu0 0.0
    %3048 = vmatpush1.msra.mxu0 0.0
    %3049 = vmatprep.subr.mxu0 0.0
    %3050 = vmatpush1.msra.mxu0 0.0
    %3051 = vmatprep.subr.mxu0 0.0
    %3052 = vmatpush1.msra.mxu0 0.0
    %3053 = vmatprep.subr.mxu0 0.0
    %3054 = vmatpush1.msra.mxu0 0.0
    %3055 = vmatprep.subr.mxu0 0.0
    %3056 = vmatpush1.msra.mxu0 0.0
    %3057 = vmatprep.subr.mxu0 0.0
    %3058 = vmatpush1.msra.mxu0 0.0
    %3059 = vmatprep.subr.mxu0 0.0
    %3060 = vmatpush1.msra.mxu0 0.0
    %3061 = vmatprep.subr.mxu0 0.0
    %3062 = vmatpush1.msra.mxu0 0.0
    %3063 = vmatprep.subr.mxu0 0.0
    %3064 = vmatpush1.msra.mxu0 0.0
    %3065 = vmatprep.subr.mxu0 0.0
    %3066 = vmatpush1.msra.mxu0 0.0
    %3067 = vmatprep.subr.mxu0 0.0
    %3068 = vmatpush1.msra.mxu0 0.0
    %3069 = vmatprep.subr.mxu0 0.0
    %3070 = vmatpush1.msra.mxu0 0.0
    %3071 = vmatprep.subr.mxu0 0.0
    %3072 = vmatpush1.msra.mxu0 0.0
    %3073 = vmatprep.subr.mxu0 0.0
    %3074 = vmatpush1.msra.mxu0 0.0
    %3075 = vmatprep.subr.mxu0 0.0
    %3076 = vmatpush1.msra.mxu0 0.0
    %3077 = vmatprep.subr.mxu0 0.0
    %3078 = vmatpush1.msra.mxu0 0.0
    %3079 = vmatprep.subr.mxu0 0.0
    %3080 = vmatpush1.msra.mxu0 0.0
    %3081 = vmatprep.subr.mxu0 0.0
    %3082 = vmatpush1.msra.mxu0 0.0
    %3083 = vmatprep.subr.mxu0 0.0
    %3084 = vmatpush1.msra.mxu0 0.0
    %3085 = vmatprep.mubr.f32.mxu0 0.0
    %3086 = vmatmul.mubr.f32.gmra.mrb[0].mxu0 %v3016
    %v3087 = vpop.f32.mrb[0].mxu0
    %v3088 = vadd.f32 0.0, %v3087
    %v3089 = vpop.f32.mrb[0].mxu0
    %3090 = vmatprep.mubr.f32.mxu0 0.0
    %3091 = vmatmul.mubr.f32.gmra.mrb[0].mxu0 %v3019
    %v3092 = vpop.f32.mrb[0].mxu0
    %v3093 = vadd.f32 0.0, %v3092
    %v3094 = vpop.f32.mrb[0].mxu0
    %3095 = vdwg.mxu0
    %v3096 = vadd.f32 %v2521, %v2602
    %v3097 = vadd.f32 %v3096, %v2683
    %v3098 = vadd.f32 %v3097, %v2764
    %v3099 = vadd.f32 %v3098, %v2845
    %v3100 = vadd.f32 %v3099, %v2926
    %v3101 = vadd.f32 %v3100, %v3007
    %v3102 = vadd.f32 %v3101, %v3088
    %v3103 = vadd.f32 %v2526, %v2607
    %v3104 = vadd.f32 %v3103, %v2688
    %v3105 = vadd.f32 %v3104, %v2769
    %v3106 = vadd.f32 %v3105, %v2850
    %v3107 = vadd.f32 %v3106, %v2931
    %v3108 = vadd.f32 %v3107, %v3012
    %v3109 = vadd.f32 %v3108, %v3093
    %v3111 = vlaneseq
    %v3112 = vshrl.u32 %v3111, 7
    %v3113 = vsub.s32 0, %v3112
    %v3114 = vrot.slane %v166, %v3113
    %v3116 = vadd.f32 %v3102, %v3114
    %v3117 = vadd.f32 %v3109, %v3114
    %3118 = vst [vmem:[#allocation2] sm:$0xff] %v3116
    %3119 = vst [vmem:[#allocation2 + $0x8] sm:$0xff] %v3117
    %3122 = vrot.lane.b32.xlu0 %v244, 112
    %v3123 = vpop.permute.xlu0 %3122
    %3124 = vrot.lane.b32.xlu0 %v249, 112
    %v3125 = vpop.permute.xlu0 %3124
    %v3126 = vsel %vm853, %v244, 0
    %v3128 = vsel %vm853, %v249, 0
    %v3130 = vsel %vm853, %v3123, 0
    %v3132 = vsel %vm853, %v3125, 0
    %3134 = vmatprep.subr.mxu0 0.0
    %3135 = vmatpush1.xpose.msra.mxu0 %v3130
    %3136 = vmatprep.subr.mxu0 0.0
    %3137 = vmatpush1.xpose.msra.mxu0 %v3132
    %3138 = vmatprep.subr.mxu0 0.0
    %3139 = vmatpush1.xpose.msra.mxu0 0.0
    %3140 = vmatprep.subr.mxu0 0.0
    %3141 = vmatpush1.xpose.msra.mxu0 0.0
    %3142 = vmatprep.subr.mxu0 0.0
    %3143 = vmatpush1.xpose.msra.mxu0 0.0
    %3144 = vmatprep.subr.mxu0 0.0
    %3145 = vmatpush1.xpose.msra.mxu0 0.0
    %3146 = vmatprep.subr.mxu0 0.0
    %3147 = vmatpush1.xpose.msra.mxu0 0.0
    %3148 = vmatprep.subr.mxu0 0.0
    %3149 = vmatpush1.xpose.msra.mxu0 0.0
    %3150 = vmatprep.subr.mxu0 0.0
    %3151 = vmatpush1.xpose.msra.mxu0 0.0
    %3152 = vmatprep.subr.mxu0 0.0
    %3153 = vmatpush1.xpose.msra.mxu0 0.0
    %3154 = vmatprep.subr.mxu0 0.0
    %3155 = vmatpush1.xpose.msra.mxu0 0.0
    %3156 = vmatprep.subr.mxu0 0.0
    %3157 = vmatpush1.xpose.msra.mxu0 0.0
    %3158 = vmatprep.subr.mxu0 0.0
    %3159 = vmatpush1.xpose.msra.mxu0 0.0
    %3160 = vmatprep.subr.mxu0 0.0
    %3161 = vmatpush1.xpose.msra.mxu0 0.0
    %3162 = vmatprep.subr.mxu0 0.0
    %3163 = vmatpush1.xpose.msra.mxu0 0.0
    %3164 = vmatprep.subr.mxu0 0.0
    %3165 = vmatpush1.xpose.msra.mxu0 0.0
    %3166 = vmatprep.subr.mxu0 0.0
    %3167 = vmatpush1.xpose.msra.mxu0 0.0
    %3168 = vmatprep.subr.mxu0 0.0
    %3169 = vmatpush1.xpose.msra.mxu0 0.0
    %3170 = vmatprep.subr.mxu0 0.0
    %3171 = vmatpush1.xpose.msra.mxu0 0.0
    %3172 = vmatprep.subr.mxu0 0.0
    %3173 = vmatpush1.xpose.msra.mxu0 0.0
    %3174 = vmatprep.subr.mxu0 0.0
    %3175 = vmatpush1.xpose.msra.mxu0 0.0
    %3176 = vmatprep.subr.mxu0 0.0
    %3177 = vmatpush1.xpose.msra.mxu0 0.0
    %3178 = vmatprep.subr.mxu0 0.0
    %3179 = vmatpush1.xpose.msra.mxu0 0.0
    %3180 = vmatprep.subr.mxu0 0.0
    %3181 = vmatpush1.xpose.msra.mxu0 0.0
    %3182 = vmatprep.subr.mxu0 0.0
    %3183 = vmatpush1.xpose.msra.mxu0 0.0
    %3184 = vmatprep.subr.mxu0 0.0
    %3185 = vmatpush1.xpose.msra.mxu0 0.0
    %3186 = vmatprep.subr.mxu0 0.0
    %3187 = vmatpush1.xpose.msra.mxu0 0.0
    %3188 = vmatprep.subr.mxu0 0.0
    %3189 = vmatpush1.xpose.msra.mxu0 0.0
    %3190 = vmatprep.subr.mxu0 0.0
    %3191 = vmatpush1.xpose.msra.mxu0 0.0
    %3192 = vmatprep.subr.mxu0 0.0
    %3193 = vmatpush1.xpose.msra.mxu0 0.0
    %3194 = vmatprep.subr.mxu0 0.0
    %3195 = vmatpush1.xpose.msra.mxu0 0.0
    %3196 = vmatprep.subr.mxu0 0.0
    %3197 = vmatpush1.xpose.msra.mxu0 0.0
    %3198 = vmatprep.mubr.f32.mxu0 0.0
    %3199 = vmatmul.mubr.f32.gmra.mrb[0].mxu0 %v3126
    %v3200 = vpop.f32.mrb[0].mxu0
    %v3201 = vadd.f32 0.0, %v3200
    %v3202 = vpop.f32.mrb[0].mxu0
    %3203 = vmatprep.mubr.f32.mxu0 0.0
    %3204 = vmatmul.mubr.f32.gmra.mrb[0].mxu0 %v3128
    %v3205 = vpop.f32.mrb[0].mxu0
    %v3206 = vadd.f32 0.0, %v3205
    %v3207 = vpop.f32.mrb[0].mxu0
    %3208 = vdwg.mxu0
    %3211 = vrot.lane.b32.xlu0 %v329, 112
    %v3212 = vpop.permute.xlu0 %3211
    %3213 = vrot.lane.b32.xlu0 %v334, 112
    %v3214 = vpop.permute.xlu0 %3213
    %v3215 = vsel %vm853, %v329, 0
    %v3217 = vsel %vm853, %v334, 0
    %v3219 = vsel %vm853, %v3212, 0
    %v3221 = vsel %vm853, %v3214, 0
    %3223 = vmatprep.subr.mxu0 0.0
    %3224 = vmatpush1.xpose.msra.mxu0 %v3219
    %3225 = vmatprep.subr.mxu0 0.0
    %3226 = vmatpush1.xpose.msra.mxu0 %v3221
    %3227 = vmatprep.subr.mxu0 0.0
    %3228 = vmatpush1.xpose.msra.mxu0 0.0
    %3229 = vmatprep.subr.mxu0 0.0
    %3230 = vmatpush1.xpose.msra.mxu0 0.0
    %3231 = vmatprep.subr.mxu0 0.0
    %3232 = vmatpush1.xpose.msra.mxu0 0.0
    %3233 = vmatprep.subr.mxu0 0.0
    %3234 = vmatpush1.xpose.msra.mxu0 0.0
    %3235 = vmatprep.subr.mxu0 0.0
    %3236 = vmatpush1.xpose.msra.mxu0 0.0
    %3237 = vmatprep.subr.mxu0 0.0
    %3238 = vmatpush1.xpose.msra.mxu0 0.0
    %3239 = vmatprep.subr.mxu0 0.0
    %3240 = vmatpush1.xpose.msra.mxu0 0.0
    %3241 = vmatprep.subr.mxu0 0.0
    %3242 = vmatpush1.xpose.msra.mxu0 0.0
    %3243 = vmatprep.subr.mxu0 0.0
    %3244 = vmatpush1.xpose.msra.mxu0 0.0
    %3245 = vmatprep.subr.mxu0 0.0
    %3246 = vmatpush1.xpose.msra.mxu0 0.0
    %3247 = vmatprep.subr.mxu0 0.0
    %3248 = vmatpush1.xpose.msra.mxu0 0.0
    %3249 = vmatprep.subr.mxu0 0.0
    %3250 = vmatpush1.xpose.msra.mxu0 0.0
    %3251 = vmatprep.subr.mxu0 0.0
    %3252 = vmatpush1.xpose.msra.mxu0 0.0
    %3253 = vmatprep.subr.mxu0 0.0
    %3254 = vmatpush1.xpose.msra.mxu0 0.0
    %3255 = vmatprep.subr.mxu0 0.0
    %3256 = vmatpush1.xpose.msra.mxu0 0.0
    %3257 = vmatprep.subr.mxu0 0.0
    %3258 = vmatpush1.xpose.msra.mxu0 0.0
    %3259 = vmatprep.subr.mxu0 0.0
    %3260 = vmatpush1.xpose.msra.mxu0 0.0
    %3261 = vmatprep.subr.mxu0 0.0
    %3262 = vmatpush1.xpose.msra.mxu0 0.0
    %3263 = vmatprep.subr.mxu0 0.0
    %3264 = vmatpush1.xpose.msra.mxu0 0.0
    %3265 = vmatprep.subr.mxu0 0.0
    %3266 = vmatpush1.xpose.msra.mxu0 0.0
    %3267 = vmatprep.subr.mxu0 0.0
    %3268 = vmatpush1.xpose.msra.mxu0 0.0
    %3269 = vmatprep.subr.mxu0 0.0
    %3270 = vmatpush1.xpose.msra.mxu0 0.0
    %3271 = vmatprep.subr.mxu0 0.0
    %3272 = vmatpush1.xpose.msra.mxu0 0.0
    %3273 = vmatprep.subr.mxu0 0.0
    %3274 = vmatpush1.xpose.msra.mxu0 0.0
    %3275 = vmatprep.subr.mxu0 0.0
    %3276 = vmatpush1.xpose.msra.mxu0 0.0
    %3277 = vmatprep.subr.mxu0 0.0
    %3278 = vmatpush1.xpose.msra.mxu0 0.0
    %3279 = vmatprep.subr.mxu0 0.0
    %3280 = vmatpush1.xpose.msra.mxu0 0.0
    %3281 = vmatprep.subr.mxu0 0.0
    %3282 = vmatpush1.xpose.msra.mxu0 0.0
    %3283 = vmatprep.subr.mxu0 0.0
    %3284 = vmatpush1.xpose.msra.mxu0 0.0
    %3285 = vmatprep.subr.mxu0 0.0
    %3286 = vmatpush1.xpose.msra.mxu0 0.0
    %3287 = vmatprep.mubr.f32.mxu0 0.0
    %3288 = vmatmul.mubr.f32.gmra.mrb[0].mxu0 %v3215
    %v3289 = vpop.f32.mrb[0].mxu0
    %v3290 = vadd.f32 0.0, %v3289
    %v3291 = vpop.f32.mrb[0].mxu0
    %3292 = vmatprep.mubr.f32.mxu0 0.0
    %3293 = vmatmul.mubr.f32.gmra.mrb[0].mxu0 %v3217
    %v3294 = vpop.f32.mrb[0].mxu0
    %v3295 = vadd.f32 0.0, %v3294
    %v3296 = vpop.f32.mrb[0].mxu0
    %3297 = vdwg.mxu0
    %3300 = vrot.lane.b32.xlu0 %v414, 112
    %v3301 = vpop.permute.xlu0 %3300
    %3302 = vrot.lane.b32.xlu0 %v419, 112
    %v3303 = vpop.permute.xlu0 %3302
    %v3304 = vsel %vm853, %v414, 0
    %v3306 = vsel %vm853, %v419, 0
    %v3308 = vsel %vm853, %v3301, 0
    %v3310 = vsel %vm853, %v3303, 0
    %3312 = vmatprep.subr.mxu0 0.0
    %3313 = vmatpush1.xpose.msra.mxu0 %v3308
    %3314 = vmatprep.subr.mxu0 0.0
    %3315 = vmatpush1.xpose.msra.mxu0 %v3310
    %3316 = vmatprep.subr.mxu0 0.0
    %3317 = vmatpush1.xpose.msra.mxu0 0.0
    %3318 = vmatprep.subr.mxu0 0.0
    %3319 = vmatpush1.xpose.msra.mxu0 0.0
    %3320 = vmatprep.subr.mxu0 0.0
    %3321 = vmatpush1.xpose.msra.mxu0 0.0
    %3322 = vmatprep.subr.mxu0 0.0
    %3323 = vmatpush1.xpose.msra.mxu0 0.0
    %3324 = vmatprep.subr.mxu0 0.0
    %3325 = vmatpush1.xpose.msra.mxu0 0.0
    %3326 = vmatprep.subr.mxu0 0.0
    %3327 = vmatpush1.xpose.msra.mxu0 0.0
    %3328 = vmatprep.subr.mxu0 0.0
    %3329 = vmatpush1.xpose.msra.mxu0 0.0
    %3330 = vmatprep.subr.mxu0 0.0
    %3331 = vmatpush1.xpose.msra.mxu0 0.0
    %3332 = vmatprep.subr.mxu0 0.0
    %3333 = vmatpush1.xpose.msra.mxu0 0.0
    %3334 = vmatprep.subr.mxu0 0.0
    %3335 = vmatpush1.xpose.msra.mxu0 0.0
    %3336 = vmatprep.subr.mxu0 0.0
    %3337 = vmatpush1.xpose.msra.mxu0 0.0
    %3338 = vmatprep.subr.mxu0 0.0
    %3339 = vmatpush1.xpose.msra.mxu0 0.0
    %3340 = vmatprep.subr.mxu0 0.0
    %3341 = vmatpush1.xpose.msra.mxu0 0.0
    %3342 = vmatprep.subr.mxu0 0.0
    %3343 = vmatpush1.xpose.msra.mxu0 0.0
    %3344 = vmatprep.subr.mxu0 0.0
    %3345 = vmatpush1.xpose.msra.mxu0 0.0
    %3346 = vmatprep.subr.mxu0 0.0
    %3347 = vmatpush1.xpose.msra.mxu0 0.0
    %3348 = vmatprep.subr.mxu0 0.0
    %3349 = vmatpush1.xpose.msra.mxu0 0.0
    %3350 = vmatprep.subr.mxu0 0.0
    %3351 = vmatpush1.xpose.msra.mxu0 0.0
    %3352 = vmatprep.subr.mxu0 0.0
    %3353 = vmatpush1.xpose.msra.mxu0 0.0
    %3354 = vmatprep.subr.mxu0 0.0
    %3355 = vmatpush1.xpose.msra.mxu0 0.0
    %3356 = vmatprep.subr.mxu0 0.0
    %3357 = vmatpush1.xpose.msra.mxu0 0.0
    %3358 = vmatprep.subr.mxu0 0.0
    %3359 = vmatpush1.xpose.msra.mxu0 0.0
    %3360 = vmatprep.subr.mxu0 0.0
    %3361 = vmatpush1.xpose.msra.mxu0 0.0
    %3362 = vmatprep.subr.mxu0 0.0
    %3363 = vmatpush1.xpose.msra.mxu0 0.0
    %3364 = vmatprep.subr.mxu0 0.0
    %3365 = vmatpush1.xpose.msra.mxu0 0.0
    %3366 = vmatprep.subr.mxu0 0.0
    %3367 = vmatpush1.xpose.msra.mxu0 0.0
    %3368 = vmatprep.subr.mxu0 0.0
    %3369 = vmatpush1.xpose.msra.mxu0 0.0
    %3370 = vmatprep.subr.mxu0 0.0
    %3371 = vmatpush1.xpose.msra.mxu0 0.0
    %3372 = vmatprep.subr.mxu0 0.0
    %3373 = vmatpush1.xpose.msra.mxu0 0.0
    %3374 = vmatprep.subr.mxu0 0.0
    %3375 = vmatpush1.xpose.msra.mxu0 0.0
    %3376 = vmatprep.mubr.f32.mxu0 0.0
    %3377 = vmatmul.mubr.f32.gmra.mrb[0].mxu0 %v3304
    %v3378 = vpop.f32.mrb[0].mxu0
    %v3379 = vadd.f32 0.0, %v3378
    %v3380 = vpop.f32.mrb[0].mxu0
    %3381 = vmatprep.mubr.f32.mxu0 0.0
    %3382 = vmatmul.mubr.f32.gmra.mrb[0].mxu0 %v3306
    %v3383 = vpop.f32.mrb[0].mxu0
    %v3384 = vadd.f32 0.0, %v3383
    %v3385 = vpop.f32.mrb[0].mxu0
    %3386 = vdwg.mxu0
    %3389 = vrot.lane.b32.xlu0 %v499, 112
    %v3390 = vpop.permute.xlu0 %3389
    %3391 = vrot.lane.b32.xlu0 %v504, 112
    %v3392 = vpop.permute.xlu0 %3391
    %v3393 = vsel %vm853, %v499, 0
    %v3395 = vsel %vm853, %v504, 0
    %v3397 = vsel %vm853, %v3390, 0
    %v3399 = vsel %vm853, %v3392, 0
    %3401 = vmatprep.subr.mxu0 0.0
    %3402 = vmatpush1.xpose.msra.mxu0 %v3397
    %3403 = vmatprep.subr.mxu0 0.0
    %3404 = vmatpush1.xpose.msra.mxu0 %v3399
    %3405 = vmatprep.subr.mxu0 0.0
    %3406 = vmatpush1.xpose.msra.mxu0 0.0
    %3407 = vmatprep.subr.mxu0 0.0
    %3408 = vmatpush1.xpose.msra.mxu0 0.0
    %3409 = vmatprep.subr.mxu0 0.0
    %3410 = vmatpush1.xpose.msra.mxu0 0.0
    %3411 = vmatprep.subr.mxu0 0.0
    %3412 = vmatpush1.xpose.msra.mxu0 0.0
    %3413 = vmatprep.subr.mxu0 0.0
    %3414 = vmatpush1.xpose.msra.mxu0 0.0
    %3415 = vmatprep.subr.mxu0 0.0
    %3416 = vmatpush1.xpose.msra.mxu0 0.0
    %3417 = vmatprep.subr.mxu0 0.0
    %3418 = vmatpush1.xpose.msra.mxu0 0.0
    %3419 = vmatprep.subr.mxu0 0.0
    %3420 = vmatpush1.xpose.msra.mxu0 0.0
    %3421 = vmatprep.subr.mxu0 0.0
    %3422 = vmatpush1.xpose.msra.mxu0 0.0
    %3423 = vmatprep.subr.mxu0 0.0
    %3424 = vmatpush1.xpose.msra.mxu0 0.0
    %3425 = vmatprep.subr.mxu0 0.0
    %3426 = vmatpush1.xpose.msra.mxu0 0.0
    %3427 = vmatprep.subr.mxu0 0.0
    %3428 = vmatpush1.xpose.msra.mxu0 0.0
    %3429 = vmatprep.subr.mxu0 0.0
    %3430 = vmatpush1.xpose.msra.mxu0 0.0
    %3431 = vmatprep.subr.mxu0 0.0
    %3432 = vmatpush1.xpose.msra.mxu0 0.0
    %3433 = vmatprep.subr.mxu0 0.0
    %3434 = vmatpush1.xpose.msra.mxu0 0.0
    %3435 = vmatprep.subr.mxu0 0.0
    %3436 = vmatpush1.xpose.msra.mxu0 0.0
    %3437 = vmatprep.subr.mxu0 0.0
    %3438 = vmatpush1.xpose.msra.mxu0 0.0
    %3439 = vmatprep.subr.mxu0 0.0
    %3440 = vmatpush1.xpose.msra.mxu0 0.0
    %3441 = vmatprep.subr.mxu0 0.0
    %3442 = vmatpush1.xpose.msra.mxu0 0.0
    %3443 = vmatprep.subr.mxu0 0.0
    %3444 = vmatpush1.xpose.msra.mxu0 0.0
    %3445 = vmatprep.subr.mxu0 0.0
    %3446 = vmatpush1.xpose.msra.mxu0 0.0
    %3447 = vmatprep.subr.mxu0 0.0
    %3448 = vmatpush1.xpose.msra.mxu0 0.0
    %3449 = vmatprep.subr.mxu0 0.0
    %3450 = vmatpush1.xpose.msra.mxu0 0.0
    %3451 = vmatprep.subr.mxu0 0.0
    %3452 = vmatpush1.xpose.msra.mxu0 0.0
    %3453 = vmatprep.subr.mxu0 0.0
    %3454 = vmatpush1.xpose.msra.mxu0 0.0
    %3455 = vmatprep.subr.mxu0 0.0
    %3456 = vmatpush1.xpose.msra.mxu0 0.0
    %3457 = vmatprep.subr.mxu0 0.0
    %3458 = vmatpush1.xpose.msra.mxu0 0.0
    %3459 = vmatprep.subr.mxu0 0.0
    %3460 = vmatpush1.xpose.msra.mxu0 0.0
    %3461 = vmatprep.subr.mxu0 0.0
    %3462 = vmatpush1.xpose.msra.mxu0 0.0
    %3463 = vmatprep.subr.mxu0 0.0
    %3464 = vmatpush1.xpose.msra.mxu0 0.0
    %3465 = vmatprep.mubr.f32.mxu0 0.0
    %3466 = vmatmul.mubr.f32.gmra.mrb[0].mxu0 %v3393
    %v3467 = vpop.f32.mrb[0].mxu0
    %v3468 = vadd.f32 0.0, %v3467
    %v3469 = vpop.f32.mrb[0].mxu0
    %3470 = vmatprep.mubr.f32.mxu0 0.0
    %3471 = vmatmul.mubr.f32.gmra.mrb[0].mxu0 %v3395
    %v3472 = vpop.f32.mrb[0].mxu0
    %v3473 = vadd.f32 0.0, %v3472
    %v3474 = vpop.f32.mrb[0].mxu0
    %3475 = vdwg.mxu0
    %3478 = vrot.lane.b32.xlu0 %v584, 112
    %v3479 = vpop.permute.xlu0 %3478
    %3480 = vrot.lane.b32.xlu0 %v589, 112
    %v3481 = vpop.permute.xlu0 %3480
    %v3482 = vsel %vm853, %v584, 0
    %v3484 = vsel %vm853, %v589, 0
    %v3486 = vsel %vm853, %v3479, 0
    %v3488 = vsel %vm853, %v3481, 0
    %3490 = vmatprep.subr.mxu0 0.0
    %3491 = vmatpush1.xpose.msra.mxu0 %v3486
    %3492 = vmatprep.subr.mxu0 0.0
    %3493 = vmatpush1.xpose.msra.mxu0 %v3488
    %3494 = vmatprep.subr.mxu0 0.0
    %3495 = vmatpush1.xpose.msra.mxu0 0.0
    %3496 = vmatprep.subr.mxu0 0.0
    %3497 = vmatpush1.xpose.msra.mxu0 0.0
    %3498 = vmatprep.subr.mxu0 0.0
    %3499 = vmatpush1.xpose.msra.mxu0 0.0
    %3500 = vmatprep.subr.mxu0 0.0
    %3501 = vmatpush1.xpose.msra.mxu0 0.0
    %3502 = vmatprep.subr.mxu0 0.0
    %3503 = vmatpush1.xpose.msra.mxu0 0.0
    %3504 = vmatprep.subr.mxu0 0.0
    %3505 = vmatpush1.xpose.msra.mxu0 0.0
    %3506 = vmatprep.subr.mxu0 0.0
    %3507 = vmatpush1.xpose.msra.mxu0 0.0
    %3508 = vmatprep.subr.mxu0 0.0
    %3509 = vmatpush1.xpose.msra.mxu0 0.0
    %3510 = vmatprep.subr.mxu0 0.0
    %3511 = vmatpush1.xpose.msra.mxu0 0.0
    %3512 = vmatprep.subr.mxu0 0.0
    %3513 = vmatpush1.xpose.msra.mxu0 0.0
    %3514 = vmatprep.subr.mxu0 0.0
    %3515 = vmatpush1.xpose.msra.mxu0 0.0
    %3516 = vmatprep.subr.mxu0 0.0
    %3517 = vmatpush1.xpose.msra.mxu0 0.0
    %3518 = vmatprep.subr.mxu0 0.0
    %3519 = vmatpush1.xpose.msra.mxu0 0.0
    %3520 = vmatprep.subr.mxu0 0.0
    %3521 = vmatpush1.xpose.msra.mxu0 0.0
    %3522 = vmatprep.subr.mxu0 0.0
    %3523 = vmatpush1.xpose.msra.mxu0 0.0
    %3524 = vmatprep.subr.mxu0 0.0
    %3525 = vmatpush1.xpose.msra.mxu0 0.0
    %3526 = vmatprep.subr.mxu0 0.0
    %3527 = vmatpush1.xpose.msra.mxu0 0.0
    %3528 = vmatprep.subr.mxu0 0.0
    %3529 = vmatpush1.xpose.msra.mxu0 0.0
    %3530 = vmatprep.subr.mxu0 0.0
    %3531 = vmatpush1.xpose.msra.mxu0 0.0
    %3532 = vmatprep.subr.mxu0 0.0
    %3533 = vmatpush1.xpose.msra.mxu0 0.0
    %3534 = vmatprep.subr.mxu0 0.0
    %3535 = vmatpush1.xpose.msra.mxu0 0.0
    %3536 = vmatprep.subr.mxu0 0.0
    %3537 = vmatpush1.xpose.msra.mxu0 0.0
    %3538 = vmatprep.subr.mxu0 0.0
    %3539 = vmatpush1.xpose.msra.mxu0 0.0
    %3540 = vmatprep.subr.mxu0 0.0
    %3541 = vmatpush1.xpose.msra.mxu0 0.0
    %3542 = vmatprep.subr.mxu0 0.0
    %3543 = vmatpush1.xpose.msra.mxu0 0.0
    %3544 = vmatprep.subr.mxu0 0.0
    %3545 = vmatpush1.xpose.msra.mxu0 0.0
    %3546 = vmatprep.subr.mxu0 0.0
    %3547 = vmatpush1.xpose.msra.mxu0 0.0
    %3548 = vmatprep.subr.mxu0 0.0
    %3549 = vmatpush1.xpose.msra.mxu0 0.0
    %3550 = vmatprep.subr.mxu0 0.0
    %3551 = vmatpush1.xpose.msra.mxu0 0.0
    %3552 = vmatprep.subr.mxu0 0.0
    %3553 = vmatpush1.xpose.msra.mxu0 0.0
    %3554 = vmatprep.mubr.f32.mxu0 0.0
    %3555 = vmatmul.mubr.f32.gmra.mrb[0].mxu0 %v3482
    %v3556 = vpop.f32.mrb[0].mxu0
    %v3557 = vadd.f32 0.0, %v3556
    %v3558 = vpop.f32.mrb[0].mxu0
    %3559 = vmatprep.mubr.f32.mxu0 0.0
    %3560 = vmatmul.mubr.f32.gmra.mrb[0].mxu0 %v3484
    %v3561 = vpop.f32.mrb[0].mxu0
    %v3562 = vadd.f32 0.0, %v3561
    %v3563 = vpop.f32.mrb[0].mxu0
    %3564 = vdwg.mxu0
    %3567 = vrot.lane.b32.xlu0 %v669, 112
    %v3568 = vpop.permute.xlu0 %3567
    %3569 = vrot.lane.b32.xlu0 %v674, 112
    %v3570 = vpop.permute.xlu0 %3569
    %v3571 = vsel %vm853, %v669, 0
    %v3573 = vsel %vm853, %v674, 0
    %v3575 = vsel %vm853, %v3568, 0
    %v3577 = vsel %vm853, %v3570, 0
    %3579 = vmatprep.subr.mxu0 0.0
    %3580 = vmatpush1.xpose.msra.mxu0 %v3575
    %3581 = vmatprep.subr.mxu0 0.0
    %3582 = vmatpush1.xpose.msra.mxu0 %v3577
    %3583 = vmatprep.subr.mxu0 0.0
    %3584 = vmatpush1.xpose.msra.mxu0 0.0
    %3585 = vmatprep.subr.mxu0 0.0
    %3586 = vmatpush1.xpose.msra.mxu0 0.0
    %3587 = vmatprep.subr.mxu0 0.0
    %3588 = vmatpush1.xpose.msra.mxu0 0.0
    %3589 = vmatprep.subr.mxu0 0.0
    %3590 = vmatpush1.xpose.msra.mxu0 0.0
    %3591 = vmatprep.subr.mxu0 0.0
    %3592 = vmatpush1.xpose.msra.mxu0 0.0
    %3593 = vmatprep.subr.mxu0 0.0
    %3594 = vmatpush1.xpose.msra.mxu0 0.0
    %3595 = vmatprep.subr.mxu0 0.0
    %3596 = vmatpush1.xpose.msra.mxu0 0.0
    %3597 = vmatprep.subr.mxu0 0.0
    %3598 = vmatpush1.xpose.msra.mxu0 0.0
    %3599 = vmatprep.subr.mxu0 0.0
    %3600 = vmatpush1.xpose.msra.mxu0 0.0
    %3601 = vmatprep.subr.mxu0 0.0
    %3602 = vmatpush1.xpose.msra.mxu0 0.0
    %3603 = vmatprep.subr.mxu0 0.0
    %3604 = vmatpush1.xpose.msra.mxu0 0.0
    %3605 = vmatprep.subr.mxu0 0.0
    %3606 = vmatpush1.xpose.msra.mxu0 0.0
    %3607 = vmatprep.subr.mxu0 0.0
    %3608 = vmatpush1.xpose.msra.mxu0 0.0
    %3609 = vmatprep.subr.mxu0 0.0
    %3610 = vmatpush1.xpose.msra.mxu0 0.0
    %3611 = vmatprep.subr.mxu0 0.0
    %3612 = vmatpush1.xpose.msra.mxu0 0.0
    %3613 = vmatprep.subr.mxu0 0.0
    %3614 = vmatpush1.xpose.msra.mxu0 0.0
    %3615 = vmatprep.subr.mxu0 0.0
    %3616 = vmatpush1.xpose.msra.mxu0 0.0
    %3617 = vmatprep.subr.mxu0 0.0
    %3618 = vmatpush1.xpose.msra.mxu0 0.0
    %3619 = vmatprep.subr.mxu0 0.0
    %3620 = vmatpush1.xpose.msra.mxu0 0.0
    %3621 = vmatprep.subr.mxu0 0.0
    %3622 = vmatpush1.xpose.msra.mxu0 0.0
    %3623 = vmatprep.subr.mxu0 0.0
    %3624 = vmatpush1.xpose.msra.mxu0 0.0
    %3625 = vmatprep.subr.mxu0 0.0
    %3626 = vmatpush1.xpose.msra.mxu0 0.0
    %3627 = vmatprep.subr.mxu0 0.0
    %3628 = vmatpush1.xpose.msra.mxu0 0.0
    %3629 = vmatprep.subr.mxu0 0.0
    %3630 = vmatpush1.xpose.msra.mxu0 0.0
    %3631 = vmatprep.subr.mxu0 0.0
    %3632 = vmatpush1.xpose.msra.mxu0 0.0
    %3633 = vmatprep.subr.mxu0 0.0
    %3634 = vmatpush1.xpose.msra.mxu0 0.0
    %3635 = vmatprep.subr.mxu0 0.0
    %3636 = vmatpush1.xpose.msra.mxu0 0.0
    %3637 = vmatprep.subr.mxu0 0.0
    %3638 = vmatpush1.xpose.msra.mxu0 0.0
    %3639 = vmatprep.subr.mxu0 0.0
    %3640 = vmatpush1.xpose.msra.mxu0 0.0
    %3641 = vmatprep.subr.mxu0 0.0
    %3642 = vmatpush1.xpose.msra.mxu0 0.0
    %3643 = vmatprep.mubr.f32.mxu0 0.0
    %3644 = vmatmul.mubr.f32.gmra.mrb[0].mxu0 %v3571
    %v3645 = vpop.f32.mrb[0].mxu0
    %v3646 = vadd.f32 0.0, %v3645
    %v3647 = vpop.f32.mrb[0].mxu0
    %3648 = vmatprep.mubr.f32.mxu0 0.0
    %3649 = vmatmul.mubr.f32.gmra.mrb[0].mxu0 %v3573
    %v3650 = vpop.f32.mrb[0].mxu0
    %v3651 = vadd.f32 0.0, %v3650
    %v3652 = vpop.f32.mrb[0].mxu0
    %3653 = vdwg.mxu0
    %3656 = vrot.lane.b32.xlu0 %v754, 112
    %v3657 = vpop.permute.xlu0 %3656
    %3658 = vrot.lane.b32.xlu0 %v759, 112
    %v3659 = vpop.permute.xlu0 %3658
    %v3660 = vsel %vm853, %v754, 0
    %v3662 = vsel %vm853, %v759, 0
    %v3664 = vsel %vm853, %v3657, 0
    %v3666 = vsel %vm853, %v3659, 0
    %3668 = vmatprep.subr.mxu0 0.0
    %3669 = vmatpush1.xpose.msra.mxu0 %v3664
    %3670 = vmatprep.subr.mxu0 0.0
    %3671 = vmatpush1.xpose.msra.mxu0 %v3666
    %3672 = vmatprep.subr.mxu0 0.0
    %3673 = vmatpush1.xpose.msra.mxu0 0.0
    %3674 = vmatprep.subr.mxu0 0.0
    %3675 = vmatpush1.xpose.msra.mxu0 0.0
    %3676 = vmatprep.subr.mxu0 0.0
    %3677 = vmatpush1.xpose.msra.mxu0 0.0
    %3678 = vmatprep.subr.mxu0 0.0
    %3679 = vmatpush1.xpose.msra.mxu0 0.0
    %3680 = vmatprep.subr.mxu0 0.0
    %3681 = vmatpush1.xpose.msra.mxu0 0.0
    %3682 = vmatprep.subr.mxu0 0.0
    %3683 = vmatpush1.xpose.msra.mxu0 0.0
    %3684 = vmatprep.subr.mxu0 0.0
    %3685 = vmatpush1.xpose.msra.mxu0 0.0
    %3686 = vmatprep.subr.mxu0 0.0
    %3687 = vmatpush1.xpose.msra.mxu0 0.0
    %3688 = vmatprep.subr.mxu0 0.0
    %3689 = vmatpush1.xpose.msra.mxu0 0.0
    %3690 = vmatprep.subr.mxu0 0.0
    %3691 = vmatpush1.xpose.msra.mxu0 0.0
    %3692 = vmatprep.subr.mxu0 0.0
    %3693 = vmatpush1.xpose.msra.mxu0 0.0
    %3694 = vmatprep.subr.mxu0 0.0
    %3695 = vmatpush1.xpose.msra.mxu0 0.0
    %3696 = vmatprep.subr.mxu0 0.0
    %3697 = vmatpush1.xpose.msra.mxu0 0.0
    %3698 = vmatprep.subr.mxu0 0.0
    %3699 = vmatpush1.xpose.msra.mxu0 0.0
    %3700 = vmatprep.subr.mxu0 0.0
    %3701 = vmatpush1.xpose.msra.mxu0 0.0
    %3702 = vmatprep.subr.mxu0 0.0
    %3703 = vmatpush1.xpose.msra.mxu0 0.0
    %3704 = vmatprep.subr.mxu0 0.0
    %3705 = vmatpush1.xpose.msra.mxu0 0.0
    %3706 = vmatprep.subr.mxu0 0.0
    %3707 = vmatpush1.xpose.msra.mxu0 0.0
    %3708 = vmatprep.subr.mxu0 0.0
    %3709 = vmatpush1.xpose.msra.mxu0 0.0
    %3710 = vmatprep.subr.mxu0 0.0
    %3711 = vmatpush1.xpose.msra.mxu0 0.0
    %3712 = vmatprep.subr.mxu0 0.0
    %3713 = vmatpush1.xpose.msra.mxu0 0.0
    %3714 = vmatprep.subr.mxu0 0.0
    %3715 = vmatpush1.xpose.msra.mxu0 0.0
    %3716 = vmatprep.subr.mxu0 0.0
    %3717 = vmatpush1.xpose.msra.mxu0 0.0
    %3718 = vmatprep.subr.mxu0 0.0
    %3719 = vmatpush1.xpose.msra.mxu0 0.0
    %3720 = vmatprep.subr.mxu0 0.0
    %3721 = vmatpush1.xpose.msra.mxu0 0.0
    %3722 = vmatprep.subr.mxu0 0.0
    %3723 = vmatpush1.xpose.msra.mxu0 0.0
    %3724 = vmatprep.subr.mxu0 0.0
    %3725 = vmatpush1.xpose.msra.mxu0 0.0
    %3726 = vmatprep.subr.mxu0 0.0
    %3727 = vmatpush1.xpose.msra.mxu0 0.0
    %3728 = vmatprep.subr.mxu0 0.0
    %3729 = vmatpush1.xpose.msra.mxu0 0.0
    %3730 = vmatprep.subr.mxu0 0.0
    %3731 = vmatpush1.xpose.msra.mxu0 0.0
    %3732 = vmatprep.mubr.f32.mxu0 0.0
    %3733 = vmatmul.mubr.f32.gmra.mrb[0].mxu0 %v3660
    %v3734 = vpop.f32.mrb[0].mxu0
    %v3735 = vadd.f32 0.0, %v3734
    %v3736 = vpop.f32.mrb[0].mxu0
    %3737 = vmatprep.mubr.f32.mxu0 0.0
    %3738 = vmatmul.mubr.f32.gmra.mrb[0].mxu0 %v3662
    %v3739 = vpop.f32.mrb[0].mxu0
    %v3740 = vadd.f32 0.0, %v3739
    %v3741 = vpop.f32.mrb[0].mxu0
    %3742 = vdwg.mxu0
    %3745 = vrot.lane.b32.xlu0 %v839, 112
    %v3746 = vpop.permute.xlu0 %3745
    %3747 = vrot.lane.b32.xlu0 %v844, 112
    %v3748 = vpop.permute.xlu0 %3747
    %v3749 = vsel %vm853, %v839, 0
    %v3751 = vsel %vm853, %v844, 0
    %v3753 = vsel %vm853, %v3746, 0
    %v3755 = vsel %vm853, %v3748, 0
    %3757 = vmatprep.subr.mxu0 0.0
    %3758 = vmatpush1.xpose.msra.mxu0 %v3753
    %3759 = vmatprep.subr.mxu0 0.0
    %3760 = vmatpush1.xpose.msra.mxu0 %v3755
    %3761 = vmatprep.subr.mxu0 0.0
    %3762 = vmatpush1.xpose.msra.mxu0 0.0
    %3763 = vmatprep.subr.mxu0 0.0
    %3764 = vmatpush1.xpose.msra.mxu0 0.0
    %3765 = vmatprep.subr.mxu0 0.0
    %3766 = vmatpush1.xpose.msra.mxu0 0.0
    %3767 = vmatprep.subr.mxu0 0.0
    %3768 = vmatpush1.xpose.msra.mxu0 0.0
    %3769 = vmatprep.subr.mxu0 0.0
    %3770 = vmatpush1.xpose.msra.mxu0 0.0
    %3771 = vmatprep.subr.mxu0 0.0
    %3772 = vmatpush1.xpose.msra.mxu0 0.0
    %3773 = vmatprep.subr.mxu0 0.0
    %3774 = vmatpush1.xpose.msra.mxu0 0.0
    %3775 = vmatprep.subr.mxu0 0.0
    %3776 = vmatpush1.xpose.msra.mxu0 0.0
    %3777 = vmatprep.subr.mxu0 0.0
    %3778 = vmatpush1.xpose.msra.mxu0 0.0
    %3779 = vmatprep.subr.mxu0 0.0
    %3780 = vmatpush1.xpose.msra.mxu0 0.0
    %3781 = vmatprep.subr.mxu0 0.0
    %3782 = vmatpush1.xpose.msra.mxu0 0.0
    %3783 = vmatprep.subr.mxu0 0.0
    %3784 = vmatpush1.xpose.msra.mxu0 0.0
    %3785 = vmatprep.subr.mxu0 0.0
    %3786 = vmatpush1.xpose.msra.mxu0 0.0
    %3787 = vmatprep.subr.mxu0 0.0
    %3788 = vmatpush1.xpose.msra.mxu0 0.0
    %3789 = vmatprep.subr.mxu0 0.0
    %3790 = vmatpush1.xpose.msra.mxu0 0.0
    %3791 = vmatprep.subr.mxu0 0.0
    %3792 = vmatpush1.xpose.msra.mxu0 0.0
    %3793 = vmatprep.subr.mxu0 0.0
    %3794 = vmatpush1.xpose.msra.mxu0 0.0
    %3795 = vmatprep.subr.mxu0 0.0
    %3796 = vmatpush1.xpose.msra.mxu0 0.0
    %3797 = vmatprep.subr.mxu0 0.0
    %3798 = vmatpush1.xpose.msra.mxu0 0.0
    %3799 = vmatprep.subr.mxu0 0.0
    %3800 = vmatpush1.xpose.msra.mxu0 0.0
    %3801 = vmatprep.subr.mxu0 0.0
    %3802 = vmatpush1.xpose.msra.mxu0 0.0
    %3803 = vmatprep.subr.mxu0 0.0
    %3804 = vmatpush1.xpose.msra.mxu0 0.0
    %3805 = vmatprep.subr.mxu0 0.0
    %3806 = vmatpush1.xpose.msra.mxu0 0.0
    %3807 = vmatprep.subr.mxu0 0.0
    %3808 = vmatpush1.xpose.msra.mxu0 0.0
    %3809 = vmatprep.subr.mxu0 0.0
    %3810 = vmatpush1.xpose.msra.mxu0 0.0
    %3811 = vmatprep.subr.mxu0 0.0
    %3812 = vmatpush1.xpose.msra.mxu0 0.0
    %3813 = vmatprep.subr.mxu0 0.0
    %3814 = vmatpush1.xpose.msra.mxu0 0.0
    %3815 = vmatprep.subr.mxu0 0.0
    %3816 = vmatpush1.xpose.msra.mxu0 0.0
    %3817 = vmatprep.subr.mxu0 0.0
    %3818 = vmatpush1.xpose.msra.mxu0 0.0
    %3819 = vmatprep.subr.mxu0 0.0
    %3820 = vmatpush1.xpose.msra.mxu0 0.0
    %3821 = vmatprep.mubr.f32.mxu0 0.0
    %3822 = vmatmul.mubr.f32.gmra.mrb[0].mxu0 %v3749
    %v3823 = vpop.f32.mrb[0].mxu0
    %v3824 = vadd.f32 0.0, %v3823
    %v3825 = vpop.f32.mrb[0].mxu0
    %3826 = vmatprep.mubr.f32.mxu0 0.0
    %3827 = vmatmul.mubr.f32.gmra.mrb[0].mxu0 %v3751
    %v3828 = vpop.f32.mrb[0].mxu0
    %v3829 = vadd.f32 0.0, %v3828
    %v3830 = vpop.f32.mrb[0].mxu0
    %3831 = vdwg.mxu0
    %v3832 = vmul.f32 %v3201, 0.25
    %v3833 = vmul.f32 %v3206, 0.25
    %v3834 = vmul.f32 %v3290, 0.25
    %v3835 = vmul.f32 %v3295, 0.25
    %v3836 = vmul.f32 %v3379, 0.25
    %v3837 = vmul.f32 %v3384, 0.25
    %v3838 = vmul.f32 %v3468, 0.25
    %v3839 = vmul.f32 %v3473, 0.25
    %v3840 = vmul.f32 %v3557, 0.25
    %v3841 = vmul.f32 %v3562, 0.25
    %v3842 = vmul.f32 %v3646, 0.25
    %v3843 = vmul.f32 %v3651, 0.25
    %v3844 = vmul.f32 %v3735, 0.25
    %v3845 = vmul.f32 %v3740, 0.25
    %v3846 = vmul.f32 %v3824, 0.25
    %v3847 = vmul.f32 %v3829, 0.25
    %v3848 = vsel %vm853, %v3832, -inf
    %3849 = vmax.xlane.f32.xlu0 %v3848
    %v3850 = vpop.xlane.xlu0 %3849
    %v3851 = vsel %vm853, %v3833, -inf
    %3852 = vmax.xlane.f32.xlu0 %v3851
    %v3853 = vpop.xlane.xlu0 %3852
    %v3854 = vsel %vm853, %v3834, -inf
    %3855 = vmax.xlane.f32.xlu0 %v3854
    %v3856 = vpop.xlane.xlu0 %3855
    %v3857 = vsel %vm853, %v3835, -inf
    %3858 = vmax.xlane.f32.xlu0 %v3857
    %v3859 = vpop.xlane.xlu0 %3858
    %v3860 = vsel %vm853, %v3836, -inf
    %3861 = vmax.xlane.f32.xlu0 %v3860
    %v3862 = vpop.xlane.xlu0 %3861
    %v3863 = vsel %vm853, %v3837, -inf
    %3864 = vmax.xlane.f32.xlu0 %v3863
    %v3865 = vpop.xlane.xlu0 %3864
    %v3866 = vsel %vm853, %v3838, -inf
    %3867 = vmax.xlane.f32.xlu0 %v3866
    %v3868 = vpop.xlane.xlu0 %3867
    %v3869 = vsel %vm853, %v3839, -inf
    %3870 = vmax.xlane.f32.xlu0 %v3869
    %v3871 = vpop.xlane.xlu0 %3870
    %v3872 = vsel %vm853, %v3840, -inf
    %3873 = vmax.xlane.f32.xlu0 %v3872
    %v3874 = vpop.xlane.xlu0 %3873
    %v3875 = vsel %vm853, %v3841, -inf
    %3876 = vmax.xlane.f32.xlu0 %v3875
    %v3877 = vpop.xlane.xlu0 %3876
    %v3878 = vsel %vm853, %v3842, -inf
    %3879 = vmax.xlane.f32.xlu0 %v3878
    %v3880 = vpop.xlane.xlu0 %3879
    %v3881 = vsel %vm853, %v3843, -inf
    %3882 = vmax.xlane.f32.xlu0 %v3881
    %v3883 = vpop.xlane.xlu0 %3882
    %v3884 = vsel %vm853, %v3844, -inf
    %3885 = vmax.xlane.f32.xlu0 %v3884
    %v3886 = vpop.xlane.xlu0 %3885
    %v3887 = vsel %vm853, %v3845, -inf
    %3888 = vmax.xlane.f32.xlu0 %v3887
    %v3889 = vpop.xlane.xlu0 %3888
    %v3890 = vsel %vm853, %v3846, -inf
    %3891 = vmax.xlane.f32.xlu0 %v3890
    %v3892 = vpop.xlane.xlu0 %3891
    %v3893 = vsel %vm853, %v3847, -inf
    %3894 = vmax.xlane.f32.xlu0 %v3893
    %v3895 = vpop.xlane.xlu0 %3894
    %v3896 = vsub.f32 %v3832, %v3850
    %v3897 = vsub.f32 %v3833, %v3853
    %v3898 = vsub.f32 %v3834, %v3856
    %v3899 = vsub.f32 %v3835, %v3859
    %v3900 = vsub.f32 %v3836, %v3862
    %v3901 = vsub.f32 %v3837, %v3865
    %v3902 = vsub.f32 %v3838, %v3868
    %v3903 = vsub.f32 %v3839, %v3871
    %v3904 = vsub.f32 %v3840, %v3874
    %v3905 = vsub.f32 %v3841, %v3877
    %v3906 = vsub.f32 %v3842, %v3880
    %v3907 = vsub.f32 %v3843, %v3883
    %v3908 = vsub.f32 %v3844, %v3886
    %v3909 = vsub.f32 %v3845, %v3889
    %v3910 = vsub.f32 %v3846, %v3892
    %v3911 = vsub.f32 %v3847, %v3895
    %v3912 = vmul.f32 %v3896, 1.442695
    %v3913 = vpow.pop %v3912
    %v3914 = vmul.f32 %v3897, 1.442695
    %v3915 = vpow.pop %v3914
    %v3916 = vmul.f32 %v3898, 1.442695
    %v3917 = vpow.pop %v3916
    %v3918 = vmul.f32 %v3899, 1.442695
    %v3919 = vpow.pop %v3918
    %v3920 = vmul.f32 %v3900, 1.442695
    %v3921 = vpow.pop %v3920
    %v3922 = vmul.f32 %v3901, 1.442695
    %v3923 = vpow.pop %v3922
    %v3924 = vmul.f32 %v3902, 1.442695
    %v3925 = vpow.pop %v3924
    %v3926 = vmul.f32 %v3903, 1.442695
    %v3927 = vpow.pop %v3926
    %v3928 = vmul.f32 %v3904, 1.442695
    %v3929 = vpow.pop %v3928
    %v3930 = vmul.f32 %v3905, 1.442695
    %v3931 = vpow.pop %v3930
    %v3932 = vmul.f32 %v3906, 1.442695
    %v3933 = vpow.pop %v3932
    %v3934 = vmul.f32 %v3907, 1.442695
    %v3935 = vpow.pop %v3934
    %v3936 = vmul.f32 %v3908, 1.442695
    %v3937 = vpow.pop %v3936
    %v3938 = vmul.f32 %v3909, 1.442695
    %v3939 = vpow.pop %v3938
    %v3940 = vmul.f32 %v3910, 1.442695
    %v3941 = vpow.pop %v3940
    %v3942 = vmul.f32 %v3911, 1.442695
    %v3943 = vpow.pop %v3942
    %v3944 = vsel %vm853, %v3913, 0.0
    %3945 = vadd.xlane.f32.xlu0 %v3944
    %v3946 = vpop.xlane.xlu0 %3945
    %v3947 = vsel %vm853, %v3915, 0.0
    %3948 = vadd.xlane.f32.xlu0 %v3947
    %v3949 = vpop.xlane.xlu0 %3948
    %v3950 = vsel %vm853, %v3917, 0.0
    %3951 = vadd.xlane.f32.xlu0 %v3950
    %v3952 = vpop.xlane.xlu0 %3951
    %v3953 = vsel %vm853, %v3919, 0.0
    %3954 = vadd.xlane.f32.xlu0 %v3953
    %v3955 = vpop.xlane.xlu0 %3954
    %v3956 = vsel %vm853, %v3921, 0.0
    %3957 = vadd.xlane.f32.xlu0 %v3956
    %v3958 = vpop.xlane.xlu0 %3957
    %v3959 = vsel %vm853, %v3923, 0.0
    %3960 = vadd.xlane.f32.xlu0 %v3959
    %v3961 = vpop.xlane.xlu0 %3960
    %v3962 = vsel %vm853, %v3925, 0.0
    %3963 = vadd.xlane.f32.xlu0 %v3962
    %v3964 = vpop.xlane.xlu0 %3963
    %v3965 = vsel %vm853, %v3927, 0.0
    %3966 = vadd.xlane.f32.xlu0 %v3965
    %v3967 = vpop.xlane.xlu0 %3966
    %v3968 = vsel %vm853, %v3929, 0.0
    %3969 = vadd.xlane.f32.xlu0 %v3968
    %v3970 = vpop.xlane.xlu0 %3969
    %v3971 = vsel %vm853, %v3931, 0.0
    %3972 = vadd.xlane.f32.xlu0 %v3971
    %v3973 = vpop.xlane.xlu0 %3972
    %v3974 = vsel %vm853, %v3933, 0.0
    %3975 = vadd.xlane.f32.xlu0 %v3974
    %v3976 = vpop.xlane.xlu0 %3975
    %v3977 = vsel %vm853, %v3935, 0.0
    %3978 = vadd.xlane.f32.xlu0 %v3977
    %v3979 = vpop.xlane.xlu0 %3978
    %v3980 = vsel %vm853, %v3937, 0.0
    %3981 = vadd.xlane.f32.xlu0 %v3980
    %v3982 = vpop.xlane.xlu0 %3981
    %v3983 = vsel %vm853, %v3939, 0.0
    %3984 = vadd.xlane.f32.xlu0 %v3983
    %v3985 = vpop.xlane.xlu0 %3984
    %v3986 = vsel %vm853, %v3941, 0.0
    %3987 = vadd.xlane.f32.xlu0 %v3986
    %v3988 = vpop.xlane.xlu0 %3987
    %v3989 = vsel %vm853, %v3943, 0.0
    %3990 = vadd.xlane.f32.xlu0 %v3989
    %v3991 = vpop.xlane.xlu0 %3990
    %v3992 = vrcp.pop %v3946
    %v3993 = vmul.f32 %v3913, %v3992
    %v3994 = vrcp.pop %v3949
    %v3995 = vmul.f32 %v3915, %v3994
    %v3996 = vrcp.pop %v3952
    %v3997 = vmul.f32 %v3917, %v3996
    %v3998 = vrcp.pop %v3955
    %v3999 = vmul.f32 %v3919, %v3998
    %v4000 = vrcp.pop %v3958
    %v4001 = vmul.f32 %v3921, %v4000
    %v4002 = vrcp.pop %v3961
    %v4003 = vmul.f32 %v3923, %v4002
    %v4004 = vrcp.pop %v3964
    %v4005 = vmul.f32 %v3925, %v4004
    %v4006 = vrcp.pop %v3967
    %v4007 = vmul.f32 %v3927, %v4006
    %v4008 = vrcp.pop %v3970
    %v4009 = vmul.f32 %v3929, %v4008
    %v4010 = vrcp.pop %v3973
    %v4011 = vmul.f32 %v3931, %v4010
    %v4012 = vrcp.pop %v3976
    %v4013 = vmul.f32 %v3933, %v4012
    %v4014 = vrcp.pop %v3979
    %v4015 = vmul.f32 %v3935, %v4014
    %v4016 = vrcp.pop %v3982
    %v4017 = vmul.f32 %v3937, %v4016
    %v4018 = vrcp.pop %v3985
    %v4019 = vmul.f32 %v3939, %v4018
    %v4020 = vrcp.pop %v3988
    %v4021 = vmul.f32 %v3941, %v4020
    %v4022 = vrcp.pop %v3991
    %v4023 = vmul.f32 %v3943, %v4022
    %4024 = vrot.lane.b32.xlu0 %v244, 96
    %v4025 = vpop.permute.xlu0 %4024
    %4026 = vrot.lane.b32.xlu0 %v249, 96
    %v4027 = vpop.permute.xlu0 %4026
    %v4031 = vsel %vm853, %v3993, 0
    %v4034 = vsel %vm853, %v3995, 0
    %4036 = vmatprep.subr.mxu0 0.0
    %4037 = vmatpush1.msra.mxu0 %v4025
    %4038 = vmatprep.subr.mxu0 0.0
    %4039 = vmatpush1.msra.mxu0 %v4027
    %4040 = vmatprep.subr.mxu0 0.0
    %4041 = vmatpush1.msra.mxu0 0.0
    %4042 = vmatprep.subr.mxu0 0.0
    %4043 = vmatpush1.msra.mxu0 0.0
    %4044 = vmatprep.subr.mxu0 0.0
    %4045 = vmatpush1.msra.mxu0 0.0
    %4046 = vmatprep.subr.mxu0 0.0
    %4047 = vmatpush1.msra.mxu0 0.0
    %4048 = vmatprep.subr.mxu0 0.0
    %4049 = vmatpush1.msra.mxu0 0.0
    %4050 = vmatprep.subr.mxu0 0.0
    %4051 = vmatpush1.msra.mxu0 0.0
    %4052 = vmatprep.subr.mxu0 0.0
    %4053 = vmatpush1.msra.mxu0 0.0
    %4054 = vmatprep.subr.mxu0 0.0
    %4055 = vmatpush1.msra.mxu0 0.0
    %4056 = vmatprep.subr.mxu0 0.0
    %4057 = vmatpush1.msra.mxu0 0.0
    %4058 = vmatprep.subr.mxu0 0.0
    %4059 = vmatpush1.msra.mxu0 0.0
    %4060 = vmatprep.subr.mxu0 0.0
    %4061 = vmatpush1.msra.mxu0 0.0
    %4062 = vmatprep.subr.mxu0 0.0
    %4063 = vmatpush1.msra.mxu0 0.0
    %4064 = vmatprep.subr.mxu0 0.0
    %4065 = vmatpush1.msra.mxu0 0.0
    %4066 = vmatprep.subr.mxu0 0.0
    %4067 = vmatpush1.msra.mxu0 0.0
    %4068 = vmatprep.subr.mxu0 0.0
    %4069 = vmatpush1.msra.mxu0 0.0
    %4070 = vmatprep.subr.mxu0 0.0
    %4071 = vmatpush1.msra.mxu0 0.0
    %4072 = vmatprep.subr.mxu0 0.0
    %4073 = vmatpush1.msra.mxu0 0.0
    %4074 = vmatprep.subr.mxu0 0.0
    %4075 = vmatpush1.msra.mxu0 0.0
    %4076 = vmatprep.subr.mxu0 0.0
    %4077 = vmatpush1.msra.mxu0 0.0
    %4078 = vmatprep.subr.mxu0 0.0
    %4079 = vmatpush1.msra.mxu0 0.0
    %4080 = vmatprep.subr.mxu0 0.0
    %4081 = vmatpush1.msra.mxu0 0.0
    %4082 = vmatprep.subr.mxu0 0.0
    %4083 = vmatpush1.msra.mxu0 0.0
    %4084 = vmatprep.subr.mxu0 0.0
    %4085 = vmatpush1.msra.mxu0 0.0
    %4086 = vmatprep.subr.mxu0 0.0
    %4087 = vmatpush1.msra.mxu0 0.0
    %4088 = vmatprep.subr.mxu0 0.0
    %4089 = vmatpush1.msra.mxu0 0.0
    %4090 = vmatprep.subr.mxu0 0.0
    %4091 = vmatpush1.msra.mxu0 0.0
    %4092 = vmatprep.subr.mxu0 0.0
    %4093 = vmatpush1.msra.mxu0 0.0
    %4094 = vmatprep.subr.mxu0 0.0
    %4095 = vmatpush1.msra.mxu0 0.0
    %4096 = vmatprep.subr.mxu0 0.0
    %4097 = vmatpush1.msra.mxu0 0.0
    %4098 = vmatprep.subr.mxu0 0.0
    %4099 = vmatpush1.msra.mxu0 0.0
    %4100 = vmatprep.mubr.f32.mxu0 0.0
    %4101 = vmatmul.mubr.f32.gmra.mrb[0].mxu0 %v4031
    %v4102 = vpop.f32.mrb[0].mxu0
    %v4103 = vadd.f32 0.0, %v4102
    %v4104 = vpop.f32.mrb[0].mxu0
    %4105 = vmatprep.mubr.f32.mxu0 0.0
    %4106 = vmatmul.mubr.f32.gmra.mrb[0].mxu0 %v4034
    %v4107 = vpop.f32.mrb[0].mxu0
    %v4108 = vadd.f32 0.0, %v4107
    %v4109 = vpop.f32.mrb[0].mxu0
    %4110 = vdwg.mxu0
    %4111 = vrot.lane.b32.xlu0 %v329, 96
    %v4112 = vpop.permute.xlu0 %4111
    %4113 = vrot.lane.b32.xlu0 %v334, 96
    %v4114 = vpop.permute.xlu0 %4113
    %v4118 = vsel %vm853, %v3997, 0
    %v4121 = vsel %vm853, %v3999, 0
    %4123 = vmatprep.subr.mxu0 0.0
    %4124 = vmatpush1.msra.mxu0 %v4112
    %4125 = vmatprep.subr.mxu0 0.0
    %4126 = vmatpush1.msra.mxu0 %v4114
    %4127 = vmatprep.subr.mxu0 0.0
    %4128 = vmatpush1.msra.mxu0 0.0
    %4129 = vmatprep.subr.mxu0 0.0
    %4130 = vmatpush1.msra.mxu0 0.0
    %4131 = vmatprep.subr.mxu0 0.0
    %4132 = vmatpush1.msra.mxu0 0.0
    %4133 = vmatprep.subr.mxu0 0.0
    %4134 = vmatpush1.msra.mxu0 0.0
    %4135 = vmatprep.subr.mxu0 0.0
    %4136 = vmatpush1.msra.mxu0 0.0
    %4137 = vmatprep.subr.mxu0 0.0
    %4138 = vmatpush1.msra.mxu0 0.0
    %4139 = vmatprep.subr.mxu0 0.0
    %4140 = vmatpush1.msra.mxu0 0.0
    %4141 = vmatprep.subr.mxu0 0.0
    %4142 = vmatpush1.msra.mxu0 0.0
    %4143 = vmatprep.subr.mxu0 0.0
    %4144 = vmatpush1.msra.mxu0 0.0
    %4145 = vmatprep.subr.mxu0 0.0
    %4146 = vmatpush1.msra.mxu0 0.0
    %4147 = vmatprep.subr.mxu0 0.0
    %4148 = vmatpush1.msra.mxu0 0.0
    %4149 = vmatprep.subr.mxu0 0.0
    %4150 = vmatpush1.msra.mxu0 0.0
    %4151 = vmatprep.subr.mxu0 0.0
    %4152 = vmatpush1.msra.mxu0 0.0
    %4153 = vmatprep.subr.mxu0 0.0
    %4154 = vmatpush1.msra.mxu0 0.0
    %4155 = vmatprep.subr.mxu0 0.0
    %4156 = vmatpush1.msra.mxu0 0.0
    %4157 = vmatprep.subr.mxu0 0.0
    %4158 = vmatpush1.msra.mxu0 0.0
    %4159 = vmatprep.subr.mxu0 0.0
    %4160 = vmatpush1.msra.mxu0 0.0
    %4161 = vmatprep.subr.mxu0 0.0
    %4162 = vmatpush1.msra.mxu0 0.0
    %4163 = vmatprep.subr.mxu0 0.0
    %4164 = vmatpush1.msra.mxu0 0.0
    %4165 = vmatprep.subr.mxu0 0.0
    %4166 = vmatpush1.msra.mxu0 0.0
    %4167 = vmatprep.subr.mxu0 0.0
    %4168 = vmatpush1.msra.mxu0 0.0
    %4169 = vmatprep.subr.mxu0 0.0
    %4170 = vmatpush1.msra.mxu0 0.0
    %4171 = vmatprep.subr.mxu0 0.0
    %4172 = vmatpush1.msra.mxu0 0.0
    %4173 = vmatprep.subr.mxu0 0.0
    %4174 = vmatpush1.msra.mxu0 0.0
    %4175 = vmatprep.subr.mxu0 0.0
    %4176 = vmatpush1.msra.mxu0 0.0
    %4177 = vmatprep.subr.mxu0 0.0
    %4178 = vmatpush1.msra.mxu0 0.0
    %4179 = vmatprep.subr.mxu0 0.0
    %4180 = vmatpush1.msra.mxu0 0.0
    %4181 = vmatprep.subr.mxu0 0.0
    %4182 = vmatpush1.msra.mxu0 0.0
    %4183 = vmatprep.subr.mxu0 0.0
    %4184 = vmatpush1.msra.mxu0 0.0
    %4185 = vmatprep.subr.mxu0 0.0
    %4186 = vmatpush1.msra.mxu0 0.0
    %4187 = vmatprep.mubr.f32.mxu0 0.0
    %4188 = vmatmul.mubr.f32.gmra.mrb[0].mxu0 %v4118
    %v4189 = vpop.f32.mrb[0].mxu0
    %v4190 = vadd.f32 0.0, %v4189
    %v4191 = vpop.f32.mrb[0].mxu0
    %4192 = vmatprep.mubr.f32.mxu0 0.0
    %4193 = vmatmul.mubr.f32.gmra.mrb[0].mxu0 %v4121
    %v4194 = vpop.f32.mrb[0].mxu0
    %v4195 = vadd.f32 0.0, %v4194
    %v4196 = vpop.f32.mrb[0].mxu0
    %4197 = vdwg.mxu0
    %4198 = vrot.lane.b32.xlu0 %v414, 96
    %v4199 = vpop.permute.xlu0 %4198
    %4200 = vrot.lane.b32.xlu0 %v419, 96
    %v4201 = vpop.permute.xlu0 %4200
    %v4205 = vsel %vm853, %v4001, 0
    %v4208 = vsel %vm853, %v4003, 0
    %4210 = vmatprep.subr.mxu0 0.0
    %4211 = vmatpush1.msra.mxu0 %v4199
    %4212 = vmatprep.subr.mxu0 0.0
    %4213 = vmatpush1.msra.mxu0 %v4201
    %4214 = vmatprep.subr.mxu0 0.0
    %4215 = vmatpush1.msra.mxu0 0.0
    %4216 = vmatprep.subr.mxu0 0.0
    %4217 = vmatpush1.msra.mxu0 0.0
    %4218 = vmatprep.subr.mxu0 0.0
    %4219 = vmatpush1.msra.mxu0 0.0
    %4220 = vmatprep.subr.mxu0 0.0
    %4221 = vmatpush1.msra.mxu0 0.0
    %4222 = vmatprep.subr.mxu0 0.0
    %4223 = vmatpush1.msra.mxu0 0.0
    %4224 = vmatprep.subr.mxu0 0.0
    %4225 = vmatpush1.msra.mxu0 0.0
    %4226 = vmatprep.subr.mxu0 0.0
    %4227 = vmatpush1.msra.mxu0 0.0
    %4228 = vmatprep.subr.mxu0 0.0
    %4229 = vmatpush1.msra.mxu0 0.0
    %4230 = vmatprep.subr.mxu0 0.0
    %4231 = vmatpush1.msra.mxu0 0.0
    %4232 = vmatprep.subr.mxu0 0.0
    %4233 = vmatpush1.msra.mxu0 0.0
    %4234 = vmatprep.subr.mxu0 0.0
    %4235 = vmatpush1.msra.mxu0 0.0
    %4236 = vmatprep.subr.mxu0 0.0
    %4237 = vmatpush1.msra.mxu0 0.0
    %4238 = vmatprep.subr.mxu0 0.0
    %4239 = vmatpush1.msra.mxu0 0.0
    %4240 = vmatprep.subr.mxu0 0.0
    %4241 = vmatpush1.msra.mxu0 0.0
    %4242 = vmatprep.subr.mxu0 0.0
    %4243 = vmatpush1.msra.mxu0 0.0
    %4244 = vmatprep.subr.mxu0 0.0
    %4245 = vmatpush1.msra.mxu0 0.0
    %4246 = vmatprep.subr.mxu0 0.0
    %4247 = vmatpush1.msra.mxu0 0.0
    %4248 = vmatprep.subr.mxu0 0.0
    %4249 = vmatpush1.msra.mxu0 0.0
    %4250 = vmatprep.subr.mxu0 0.0
    %4251 = vmatpush1.msra.mxu0 0.0
    %4252 = vmatprep.subr.mxu0 0.0
    %4253 = vmatpush1.msra.mxu0 0.0
    %4254 = vmatprep.subr.mxu0 0.0
    %4255 = vmatpush1.msra.mxu0 0.0
    %4256 = vmatprep.subr.mxu0 0.0
    %4257 = vmatpush1.msra.mxu0 0.0
    %4258 = vmatprep.subr.mxu0 0.0
    %4259 = vmatpush1.msra.mxu0 0.0
    %4260 = vmatprep.subr.mxu0 0.0
    %4261 = vmatpush1.msra.mxu0 0.0
    %4262 = vmatprep.subr.mxu0 0.0
    %4263 = vmatpush1.msra.mxu0 0.0
    %4264 = vmatprep.subr.mxu0 0.0
    %4265 = vmatpush1.msra.mxu0 0.0
    %4266 = vmatprep.subr.mxu0 0.0
    %4267 = vmatpush1.msra.mxu0 0.0
    %4268 = vmatprep.subr.mxu0 0.0
    %4269 = vmatpush1.msra.mxu0 0.0
    %4270 = vmatprep.subr.mxu0 0.0
    %4271 = vmatpush1.msra.mxu0 0.0
    %4272 = vmatprep.subr.mxu0 0.0
    %4273 = vmatpush1.msra.mxu0 0.0
    %4274 = vmatprep.mubr.f32.mxu0 0.0
    %4275 = vmatmul.mubr.f32.gmra.mrb[0].mxu0 %v4205
    %v4276 = vpop.f32.mrb[0].mxu0
    %v4277 = vadd.f32 0.0, %v4276
    %v4278 = vpop.f32.mrb[0].mxu0
    %4279 = vmatprep.mubr.f32.mxu0 0.0
    %4280 = vmatmul.mubr.f32.gmra.mrb[0].mxu0 %v4208
    %v4281 = vpop.f32.mrb[0].mxu0
    %v4282 = vadd.f32 0.0, %v4281
    %v4283 = vpop.f32.mrb[0].mxu0
    %4284 = vdwg.mxu0
    %4285 = vrot.lane.b32.xlu0 %v499, 96
    %v4286 = vpop.permute.xlu0 %4285
    %4287 = vrot.lane.b32.xlu0 %v504, 96
    %v4288 = vpop.permute.xlu0 %4287
    %v4292 = vsel %vm853, %v4005, 0
    %v4295 = vsel %vm853, %v4007, 0
    %4297 = vmatprep.subr.mxu0 0.0
    %4298 = vmatpush1.msra.mxu0 %v4286
    %4299 = vmatprep.subr.mxu0 0.0
    %4300 = vmatpush1.msra.mxu0 %v4288
    %4301 = vmatprep.subr.mxu0 0.0
    %4302 = vmatpush1.msra.mxu0 0.0
    %4303 = vmatprep.subr.mxu0 0.0
    %4304 = vmatpush1.msra.mxu0 0.0
    %4305 = vmatprep.subr.mxu0 0.0
    %4306 = vmatpush1.msra.mxu0 0.0
    %4307 = vmatprep.subr.mxu0 0.0
    %4308 = vmatpush1.msra.mxu0 0.0
    %4309 = vmatprep.subr.mxu0 0.0
    %4310 = vmatpush1.msra.mxu0 0.0
    %4311 = vmatprep.subr.mxu0 0.0
    %4312 = vmatpush1.msra.mxu0 0.0
    %4313 = vmatprep.subr.mxu0 0.0
    %4314 = vmatpush1.msra.mxu0 0.0
    %4315 = vmatprep.subr.mxu0 0.0
    %4316 = vmatpush1.msra.mxu0 0.0
    %4317 = vmatprep.subr.mxu0 0.0
    %4318 = vmatpush1.msra.mxu0 0.0
    %4319 = vmatprep.subr.mxu0 0.0
    %4320 = vmatpush1.msra.mxu0 0.0
    %4321 = vmatprep.subr.mxu0 0.0
    %4322 = vmatpush1.msra.mxu0 0.0
    %4323 = vmatprep.subr.mxu0 0.0
    %4324 = vmatpush1.msra.mxu0 0.0
    %4325 = vmatprep.subr.mxu0 0.0
    %4326 = vmatpush1.msra.mxu0 0.0
    %4327 = vmatprep.subr.mxu0 0.0
    %4328 = vmatpush1.msra.mxu0 0.0
    %4329 = vmatprep.subr.mxu0 0.0
    %4330 = vmatpush1.msra.mxu0 0.0
    %4331 = vmatprep.subr.mxu0 0.0
    %4332 = vmatpush1.msra.mxu0 0.0
    %4333 = vmatprep.subr.mxu0 0.0
    %4334 = vmatpush1.msra.mxu0 0.0
    %4335 = vmatprep.subr.mxu0 0.0
    %4336 = vmatpush1.msra.mxu0 0.0
    %4337 = vmatprep.subr.mxu0 0.0
    %4338 = vmatpush1.msra.mxu0 0.0
    %4339 = vmatprep.subr.mxu0 0.0
    %4340 = vmatpush1.msra.mxu0 0.0
    %4341 = vmatprep.subr.mxu0 0.0
    %4342 = vmatpush1.msra.mxu0 0.0
    %4343 = vmatprep.subr.mxu0 0.0
    %4344 = vmatpush1.msra.mxu0 0.0
    %4345 = vmatprep.subr.mxu0 0.0
    %4346 = vmatpush1.msra.mxu0 0.0
    %4347 = vmatprep.subr.mxu0 0.0
    %4348 = vmatpush1.msra.mxu0 0.0
    %4349 = vmatprep.subr.mxu0 0.0
    %4350 = vmatpush1.msra.mxu0 0.0
    %4351 = vmatprep.subr.mxu0 0.0
    %4352 = vmatpush1.msra.mxu0 0.0
    %4353 = vmatprep.subr.mxu0 0.0
    %4354 = vmatpush1.msra.mxu0 0.0
    %4355 = vmatprep.subr.mxu0 0.0
    %4356 = vmatpush1.msra.mxu0 0.0
    %4357 = vmatprep.subr.mxu0 0.0
    %4358 = vmatpush1.msra.mxu0 0.0
    %4359 = vmatprep.subr.mxu0 0.0
    %4360 = vmatpush1.msra.mxu0 0.0
    %4361 = vmatprep.mubr.f32.mxu0 0.0
    %4362 = vmatmul.mubr.f32.gmra.mrb[0].mxu0 %v4292
    %v4363 = vpop.f32.mrb[0].mxu0
    %v4364 = vadd.f32 0.0, %v4363
    %v4365 = vpop.f32.mrb[0].mxu0
    %4366 = vmatprep.mubr.f32.mxu0 0.0
    %4367 = vmatmul.mubr.f32.gmra.mrb[0].mxu0 %v4295
    %v4368 = vpop.f32.mrb[0].mxu0
    %v4369 = vadd.f32 0.0, %v4368
    %v4370 = vpop.f32.mrb[0].mxu0
    %4371 = vdwg.mxu0
    %4372 = vrot.lane.b32.xlu0 %v584, 96
    %v4373 = vpop.permute.xlu0 %4372
    %4374 = vrot.lane.b32.xlu0 %v589, 96
    %v4375 = vpop.permute.xlu0 %4374
    %v4379 = vsel %vm853, %v4009, 0
    %v4382 = vsel %vm853, %v4011, 0
    %4384 = vmatprep.subr.mxu0 0.0
    %4385 = vmatpush1.msra.mxu0 %v4373
    %4386 = vmatprep.subr.mxu0 0.0
    %4387 = vmatpush1.msra.mxu0 %v4375
    %4388 = vmatprep.subr.mxu0 0.0
    %4389 = vmatpush1.msra.mxu0 0.0
    %4390 = vmatprep.subr.mxu0 0.0
    %4391 = vmatpush1.msra.mxu0 0.0
    %4392 = vmatprep.subr.mxu0 0.0
    %4393 = vmatpush1.msra.mxu0 0.0
    %4394 = vmatprep.subr.mxu0 0.0
    %4395 = vmatpush1.msra.mxu0 0.0
    %4396 = vmatprep.subr.mxu0 0.0
    %4397 = vmatpush1.msra.mxu0 0.0
    %4398 = vmatprep.subr.mxu0 0.0
    %4399 = vmatpush1.msra.mxu0 0.0
    %4400 = vmatprep.subr.mxu0 0.0
    %4401 = vmatpush1.msra.mxu0 0.0
    %4402 = vmatprep.subr.mxu0 0.0
    %4403 = vmatpush1.msra.mxu0 0.0
    %4404 = vmatprep.subr.mxu0 0.0
    %4405 = vmatpush1.msra.mxu0 0.0
    %4406 = vmatprep.subr.mxu0 0.0
    %4407 = vmatpush1.msra.mxu0 0.0
    %4408 = vmatprep.subr.mxu0 0.0
    %4409 = vmatpush1.msra.mxu0 0.0
    %4410 = vmatprep.subr.mxu0 0.0
    %4411 = vmatpush1.msra.mxu0 0.0
    %4412 = vmatprep.subr.mxu0 0.0
    %4413 = vmatpush1.msra.mxu0 0.0
    %4414 = vmatprep.subr.mxu0 0.0
    %4415 = vmatpush1.msra.mxu0 0.0
    %4416 = vmatprep.subr.mxu0 0.0
    %4417 = vmatpush1.msra.mxu0 0.0
    %4418 = vmatprep.subr.mxu0 0.0
    %4419 = vmatpush1.msra.mxu0 0.0
    %4420 = vmatprep.subr.mxu0 0.0
    %4421 = vmatpush1.msra.mxu0 0.0
    %4422 = vmatprep.subr.mxu0 0.0
    %4423 = vmatpush1.msra.mxu0 0.0
    %4424 = vmatprep.subr.mxu0 0.0
    %4425 = vmatpush1.msra.mxu0 0.0
    %4426 = vmatprep.subr.mxu0 0.0
    %4427 = vmatpush1.msra.mxu0 0.0
    %4428 = vmatprep.subr.mxu0 0.0
    %4429 = vmatpush1.msra.mxu0 0.0
    %4430 = vmatprep.subr.mxu0 0.0
    %4431 = vmatpush1.msra.mxu0 0.0
    %4432 = vmatprep.subr.mxu0 0.0
    %4433 = vmatpush1.msra.mxu0 0.0
    %4434 = vmatprep.subr.mxu0 0.0
    %4435 = vmatpush1.msra.mxu0 0.0
    %4436 = vmatprep.subr.mxu0 0.0
    %4437 = vmatpush1.msra.mxu0 0.0
    %4438 = vmatprep.subr.mxu0 0.0
    %4439 = vmatpush1.msra.mxu0 0.0
    %4440 = vmatprep.subr.mxu0 0.0
    %4441 = vmatpush1.msra.mxu0 0.0
    %4442 = vmatprep.subr.mxu0 0.0
    %4443 = vmatpush1.msra.mxu0 0.0
    %4444 = vmatprep.subr.mxu0 0.0
    %4445 = vmatpush1.msra.mxu0 0.0
    %4446 = vmatprep.subr.mxu0 0.0
    %4447 = vmatpush1.msra.mxu0 0.0
    %4448 = vmatprep.mubr.f32.mxu0 0.0
    %4449 = vmatmul.mubr.f32.gmra.mrb[0].mxu0 %v4379
    %v4450 = vpop.f32.mrb[0].mxu0
    %v4451 = vadd.f32 0.0, %v4450
    %v4452 = vpop.f32.mrb[0].mxu0
    %4453 = vmatprep.mubr.f32.mxu0 0.0
    %4454 = vmatmul.mubr.f32.gmra.mrb[0].mxu0 %v4382
    %v4455 = vpop.f32.mrb[0].mxu0
    %v4456 = vadd.f32 0.0, %v4455
    %v4457 = vpop.f32.mrb[0].mxu0
    %4458 = vdwg.mxu0
    %4459 = vrot.lane.b32.xlu0 %v669, 96
    %v4460 = vpop.permute.xlu0 %4459
    %4461 = vrot.lane.b32.xlu0 %v674, 96
    %v4462 = vpop.permute.xlu0 %4461
    %v4466 = vsel %vm853, %v4013, 0
    %v4469 = vsel %vm853, %v4015, 0
    %4471 = vmatprep.subr.mxu0 0.0
    %4472 = vmatpush1.msra.mxu0 %v4460
    %4473 = vmatprep.subr.mxu0 0.0
    %4474 = vmatpush1.msra.mxu0 %v4462
    %4475 = vmatprep.subr.mxu0 0.0
    %4476 = vmatpush1.msra.mxu0 0.0
    %4477 = vmatprep.subr.mxu0 0.0
    %4478 = vmatpush1.msra.mxu0 0.0
    %4479 = vmatprep.subr.mxu0 0.0
    %4480 = vmatpush1.msra.mxu0 0.0
    %4481 = vmatprep.subr.mxu0 0.0
    %4482 = vmatpush1.msra.mxu0 0.0
    %4483 = vmatprep.subr.mxu0 0.0
    %4484 = vmatpush1.msra.mxu0 0.0
    %4485 = vmatprep.subr.mxu0 0.0
    %4486 = vmatpush1.msra.mxu0 0.0
    %4487 = vmatprep.subr.mxu0 0.0
    %4488 = vmatpush1.msra.mxu0 0.0
    %4489 = vmatprep.subr.mxu0 0.0
    %4490 = vmatpush1.msra.mxu0 0.0
    %4491 = vmatprep.subr.mxu0 0.0
    %4492 = vmatpush1.msra.mxu0 0.0
    %4493 = vmatprep.subr.mxu0 0.0
    %4494 = vmatpush1.msra.mxu0 0.0
    %4495 = vmatprep.subr.mxu0 0.0
    %4496 = vmatpush1.msra.mxu0 0.0
    %4497 = vmatprep.subr.mxu0 0.0
    %4498 = vmatpush1.msra.mxu0 0.0
    %4499 = vmatprep.subr.mxu0 0.0
    %4500 = vmatpush1.msra.mxu0 0.0
    %4501 = vmatprep.subr.mxu0 0.0
    %4502 = vmatpush1.msra.mxu0 0.0
    %4503 = vmatprep.subr.mxu0 0.0
    %4504 = vmatpush1.msra.mxu0 0.0
    %4505 = vmatprep.subr.mxu0 0.0
    %4506 = vmatpush1.msra.mxu0 0.0
    %4507 = vmatprep.subr.mxu0 0.0
    %4508 = vmatpush1.msra.mxu0 0.0
    %4509 = vmatprep.subr.mxu0 0.0
    %4510 = vmatpush1.msra.mxu0 0.0
    %4511 = vmatprep.subr.mxu0 0.0
    %4512 = vmatpush1.msra.mxu0 0.0
    %4513 = vmatprep.subr.mxu0 0.0
    %4514 = vmatpush1.msra.mxu0 0.0
    %4515 = vmatprep.subr.mxu0 0.0
    %4516 = vmatpush1.msra.mxu0 0.0
    %4517 = vmatprep.subr.mxu0 0.0
    %4518 = vmatpush1.msra.mxu0 0.0
    %4519 = vmatprep.subr.mxu0 0.0
    %4520 = vmatpush1.msra.mxu0 0.0
    %4521 = vmatprep.subr.mxu0 0.0
    %4522 = vmatpush1.msra.mxu0 0.0
    %4523 = vmatprep.subr.mxu0 0.0
    %4524 = vmatpush1.msra.mxu0 0.0
    %4525 = vmatprep.subr.mxu0 0.0
    %4526 = vmatpush1.msra.mxu0 0.0
    %4527 = vmatprep.subr.mxu0 0.0
    %4528 = vmatpush1.msra.mxu0 0.0
    %4529 = vmatprep.subr.mxu0 0.0
    %4530 = vmatpush1.msra.mxu0 0.0
    %4531 = vmatprep.subr.mxu0 0.0
    %4532 = vmatpush1.msra.mxu0 0.0
    %4533 = vmatprep.subr.mxu0 0.0
    %4534 = vmatpush1.msra.mxu0 0.0
    %4535 = vmatprep.mubr.f32.mxu0 0.0
    %4536 = vmatmul.mubr.f32.gmra.mrb[0].mxu0 %v4466
    %v4537 = vpop.f32.mrb[0].mxu0
    %v4538 = vadd.f32 0.0, %v4537
    %v4539 = vpop.f32.mrb[0].mxu0
    %4540 = vmatprep.mubr.f32.mxu0 0.0
    %4541 = vmatmul.mubr.f32.gmra.mrb[0].mxu0 %v4469
    %v4542 = vpop.f32.mrb[0].mxu0
    %v4543 = vadd.f32 0.0, %v4542
    %v4544 = vpop.f32.mrb[0].mxu0
    %4545 = vdwg.mxu0
    %4546 = vrot.lane.b32.xlu0 %v754, 96
    %v4547 = vpop.permute.xlu0 %4546
    %4548 = vrot.lane.b32.xlu0 %v759, 96
    %v4549 = vpop.permute.xlu0 %4548
    %v4553 = vsel %vm853, %v4017, 0
    %v4556 = vsel %vm853, %v4019, 0
    %4558 = vmatprep.subr.mxu0 0.0
    %4559 = vmatpush1.msra.mxu0 %v4547
    %4560 = vmatprep.subr.mxu0 0.0
    %4561 = vmatpush1.msra.mxu0 %v4549
    %4562 = vmatprep.subr.mxu0 0.0
    %4563 = vmatpush1.msra.mxu0 0.0
    %4564 = vmatprep.subr.mxu0 0.0
    %4565 = vmatpush1.msra.mxu0 0.0
    %4566 = vmatprep.subr.mxu0 0.0
    %4567 = vmatpush1.msra.mxu0 0.0
    %4568 = vmatprep.subr.mxu0 0.0
    %4569 = vmatpush1.msra.mxu0 0.0
    %4570 = vmatprep.subr.mxu0 0.0
    %4571 = vmatpush1.msra.mxu0 0.0
    %4572 = vmatprep.subr.mxu0 0.0
    %4573 = vmatpush1.msra.mxu0 0.0
    %4574 = vmatprep.subr.mxu0 0.0
    %4575 = vmatpush1.msra.mxu0 0.0
    %4576 = vmatprep.subr.mxu0 0.0
    %4577 = vmatpush1.msra.mxu0 0.0
    %4578 = vmatprep.subr.mxu0 0.0
    %4579 = vmatpush1.msra.mxu0 0.0
    %4580 = vmatprep.subr.mxu0 0.0
    %4581 = vmatpush1.msra.mxu0 0.0
    %4582 = vmatprep.subr.mxu0 0.0
    %4583 = vmatpush1.msra.mxu0 0.0
    %4584 = vmatprep.subr.mxu0 0.0
    %4585 = vmatpush1.msra.mxu0 0.0
    %4586 = vmatprep.subr.mxu0 0.0
    %4587 = vmatpush1.msra.mxu0 0.0
    %4588 = vmatprep.subr.mxu0 0.0
    %4589 = vmatpush1.msra.mxu0 0.0
    %4590 = vmatprep.subr.mxu0 0.0
    %4591 = vmatpush1.msra.mxu0 0.0
    %4592 = vmatprep.subr.mxu0 0.0
    %4593 = vmatpush1.msra.mxu0 0.0
    %4594 = vmatprep.subr.mxu0 0.0
    %4595 = vmatpush1.msra.mxu0 0.0
    %4596 = vmatprep.subr.mxu0 0.0
    %4597 = vmatpush1.msra.mxu0 0.0
    %4598 = vmatprep.subr.mxu0 0.0
    %4599 = vmatpush1.msra.mxu0 0.0
    %4600 = vmatprep.subr.mxu0 0.0
    %4601 = vmatpush1.msra.mxu0 0.0
    %4602 = vmatprep.subr.mxu0 0.0
    %4603 = vmatpush1.msra.mxu0 0.0
    %4604 = vmatprep.subr.mxu0 0.0
    %4605 = vmatpush1.msra.mxu0 0.0
    %4606 = vmatprep.subr.mxu0 0.0
    %4607 = vmatpush1.msra.mxu0 0.0
    %4608 = vmatprep.subr.mxu0 0.0
    %4609 = vmatpush1.msra.mxu0 0.0
    %4610 = vmatprep.subr.mxu0 0.0
    %4611 = vmatpush1.msra.mxu0 0.0
    %4612 = vmatprep.subr.mxu0 0.0
    %4613 = vmatpush1.msra.mxu0 0.0
    %4614 = vmatprep.subr.mxu0 0.0
    %4615 = vmatpush1.msra.mxu0 0.0
    %4616 = vmatprep.subr.mxu0 0.0
    %4617 = vmatpush1.msra.mxu0 0.0
    %4618 = vmatprep.subr.mxu0 0.0
    %4619 = vmatpush1.msra.mxu0 0.0
    %4620 = vmatprep.subr.mxu0 0.0
    %4621 = vmatpush1.msra.mxu0 0.0
    %4622 = vmatprep.mubr.f32.mxu0 0.0
    %4623 = vmatmul.mubr.f32.gmra.mrb[0].mxu0 %v4553
    %v4624 = vpop.f32.mrb[0].mxu0
    %v4625 = vadd.f32 0.0, %v4624
    %v4626 = vpop.f32.mrb[0].mxu0
    %4627 = vmatprep.mubr.f32.mxu0 0.0
    %4628 = vmatmul.mubr.f32.gmra.mrb[0].mxu0 %v4556
    %v4629 = vpop.f32.mrb[0].mxu0
    %v4630 = vadd.f32 0.0, %v4629
    %v4631 = vpop.f32.mrb[0].mxu0
    %4632 = vdwg.mxu0
    %4633 = vrot.lane.b32.xlu0 %v839, 96
    %v4634 = vpop.permute.xlu0 %4633
    %4635 = vrot.lane.b32.xlu0 %v844, 96
    %v4636 = vpop.permute.xlu0 %4635
    %v4640 = vsel %vm853, %v4021, 0
    %v4643 = vsel %vm853, %v4023, 0
    %4645 = vmatprep.subr.mxu0 0.0
    %4646 = vmatpush1.msra.mxu0 %v4634
    %4647 = vmatprep.subr.mxu0 0.0
    %4648 = vmatpush1.msra.mxu0 %v4636
    %4649 = vmatprep.subr.mxu0 0.0
    %4650 = vmatpush1.msra.mxu0 0.0
    %4651 = vmatprep.subr.mxu0 0.0
    %4652 = vmatpush1.msra.mxu0 0.0
    %4653 = vmatprep.subr.mxu0 0.0
    %4654 = vmatpush1.msra.mxu0 0.0
    %4655 = vmatprep.subr.mxu0 0.0
    %4656 = vmatpush1.msra.mxu0 0.0
    %4657 = vmatprep.subr.mxu0 0.0
    %4658 = vmatpush1.msra.mxu0 0.0
    %4659 = vmatprep.subr.mxu0 0.0
    %4660 = vmatpush1.msra.mxu0 0.0
    %4661 = vmatprep.subr.mxu0 0.0
    %4662 = vmatpush1.msra.mxu0 0.0
    %4663 = vmatprep.subr.mxu0 0.0
    %4664 = vmatpush1.msra.mxu0 0.0
    %4665 = vmatprep.subr.mxu0 0.0
    %4666 = vmatpush1.msra.mxu0 0.0
    %4667 = vmatprep.subr.mxu0 0.0
    %4668 = vmatpush1.msra.mxu0 0.0
    %4669 = vmatprep.subr.mxu0 0.0
    %4670 = vmatpush1.msra.mxu0 0.0
    %4671 = vmatprep.subr.mxu0 0.0
    %4672 = vmatpush1.msra.mxu0 0.0
    %4673 = vmatprep.subr.mxu0 0.0
    %4674 = vmatpush1.msra.mxu0 0.0
    %4675 = vmatprep.subr.mxu0 0.0
    %4676 = vmatpush1.msra.mxu0 0.0
    %4677 = vmatprep.subr.mxu0 0.0
    %4678 = vmatpush1.msra.mxu0 0.0
    %4679 = vmatprep.subr.mxu0 0.0
    %4680 = vmatpush1.msra.mxu0 0.0
    %4681 = vmatprep.subr.mxu0 0.0
    %4682 = vmatpush1.msra.mxu0 0.0
    %4683 = vmatprep.subr.mxu0 0.0
    %4684 = vmatpush1.msra.mxu0 0.0
    %4685 = vmatprep.subr.mxu0 0.0
    %4686 = vmatpush1.msra.mxu0 0.0
    %4687 = vmatprep.subr.mxu0 0.0
    %4688 = vmatpush1.msra.mxu0 0.0
    %4689 = vmatprep.subr.mxu0 0.0
    %4690 = vmatpush1.msra.mxu0 0.0
    %4691 = vmatprep.subr.mxu0 0.0
    %4692 = vmatpush1.msra.mxu0 0.0
    %4693 = vmatprep.subr.mxu0 0.0
    %4694 = vmatpush1.msra.mxu0 0.0
    %4695 = vmatprep.subr.mxu0 0.0
    %4696 = vmatpush1.msra.mxu0 0.0
    %4697 = vmatprep.subr.mxu0 0.0
    %4698 = vmatpush1.msra.mxu0 0.0
    %4699 = vmatprep.subr.mxu0 0.0
    %4700 = vmatpush1.msra.mxu0 0.0
    %4701 = vmatprep.subr.mxu0 0.0
    %4702 = vmatpush1.msra.mxu0 0.0
    %4703 = vmatprep.subr.mxu0 0.0
    %4704 = vmatpush1.msra.mxu0 0.0
    %4705 = vmatprep.subr.mxu0 0.0
    %4706 = vmatpush1.msra.mxu0 0.0
    %4707 = vmatprep.subr.mxu0 0.0
    %4708 = vmatpush1.msra.mxu0 0.0
    %4709 = vmatprep.mubr.f32.mxu0 0.0
    %4710 = vmatmul.mubr.f32.gmra.mrb[0].mxu0 %v4640
    %v4711 = vpop.f32.mrb[0].mxu0
    %v4712 = vadd.f32 0.0, %v4711
    %v4713 = vpop.f32.mrb[0].mxu0
    %4714 = vmatprep.mubr.f32.mxu0 0.0
    %4715 = vmatmul.mubr.f32.gmra.mrb[0].mxu0 %v4643
    %v4716 = vpop.f32.mrb[0].mxu0
    %v4717 = vadd.f32 0.0, %v4716
    %v4718 = vpop.f32.mrb[0].mxu0
    %4719 = vdwg.mxu0
    %v4721 = vsel %vm853, %v4103, 0
    %v4724 = vsel %vm853, %v4108, 0
    %4726 = vmatprep.subr.mxu0 0.0
    %4727 = vmatpush1.msra.mxu0 %v150
    %4728 = vmatprep.subr.mxu0 0.0
    %4729 = vmatpush1.msra.mxu0 %v151
    %4730 = vmatprep.subr.mxu0 0.0
    %4731 = vmatpush1.msra.mxu0 0.0
    %4732 = vmatprep.subr.mxu0 0.0
    %4733 = vmatpush1.msra.mxu0 0.0
    %4734 = vmatprep.subr.mxu0 0.0
    %4735 = vmatpush1.msra.mxu0 0.0
    %4736 = vmatprep.subr.mxu0 0.0
    %4737 = vmatpush1.msra.mxu0 0.0
    %4738 = vmatprep.subr.mxu0 0.0
    %4739 = vmatpush1.msra.mxu0 0.0
    %4740 = vmatprep.subr.mxu0 0.0
    %4741 = vmatpush1.msra.mxu0 0.0
    %4742 = vmatprep.subr.mxu0 0.0
    %4743 = vmatpush1.msra.mxu0 0.0
    %4744 = vmatprep.subr.mxu0 0.0
    %4745 = vmatpush1.msra.mxu0 0.0
    %4746 = vmatprep.subr.mxu0 0.0
    %4747 = vmatpush1.msra.mxu0 0.0
    %4748 = vmatprep.subr.mxu0 0.0
    %4749 = vmatpush1.msra.mxu0 0.0
    %4750 = vmatprep.subr.mxu0 0.0
    %4751 = vmatpush1.msra.mxu0 0.0
    %4752 = vmatprep.subr.mxu0 0.0
    %4753 = vmatpush1.msra.mxu0 0.0
    %4754 = vmatprep.subr.mxu0 0.0
    %4755 = vmatpush1.msra.mxu0 0.0
    %4756 = vmatprep.subr.mxu0 0.0
    %4757 = vmatpush1.msra.mxu0 0.0
    %4758 = vmatprep.subr.mxu0 0.0
    %4759 = vmatpush1.msra.mxu0 0.0
    %4760 = vmatprep.subr.mxu0 0.0
    %4761 = vmatpush1.msra.mxu0 0.0
    %4762 = vmatprep.subr.mxu0 0.0
    %4763 = vmatpush1.msra.mxu0 0.0
    %4764 = vmatprep.subr.mxu0 0.0
    %4765 = vmatpush1.msra.mxu0 0.0
    %4766 = vmatprep.subr.mxu0 0.0
    %4767 = vmatpush1.msra.mxu0 0.0
    %4768 = vmatprep.subr.mxu0 0.0
    %4769 = vmatpush1.msra.mxu0 0.0
    %4770 = vmatprep.subr.mxu0 0.0
    %4771 = vmatpush1.msra.mxu0 0.0
    %4772 = vmatprep.subr.mxu0 0.0
    %4773 = vmatpush1.msra.mxu0 0.0
    %4774 = vmatprep.subr.mxu0 0.0
    %4775 = vmatpush1.msra.mxu0 0.0
    %4776 = vmatprep.subr.mxu0 0.0
    %4777 = vmatpush1.msra.mxu0 0.0
    %4778 = vmatprep.subr.mxu0 0.0
    %4779 = vmatpush1.msra.mxu0 0.0
    %4780 = vmatprep.subr.mxu0 0.0
    %4781 = vmatpush1.msra.mxu0 0.0
    %4782 = vmatprep.subr.mxu0 0.0
    %4783 = vmatpush1.msra.mxu0 0.0
    %4784 = vmatprep.subr.mxu0 0.0
    %4785 = vmatpush1.msra.mxu0 0.0
    %4786 = vmatprep.subr.mxu0 0.0
    %4787 = vmatpush1.msra.mxu0 0.0
    %4788 = vmatprep.subr.mxu0 0.0
    %4789 = vmatpush1.msra.mxu0 0.0
    %4790 = vmatprep.mubr.f32.mxu0 0.0
    %4791 = vmatmul.mubr.f32.gmra.mrb[0].mxu0 %v4721
    %v4792 = vpop.f32.mrb[0].mxu0
    %v4793 = vadd.f32 0.0, %v4792
    %v4794 = vpop.f32.mrb[0].mxu0
    %4795 = vmatprep.mubr.f32.mxu0 0.0
    %4796 = vmatmul.mubr.f32.gmra.mrb[0].mxu0 %v4724
    %v4797 = vpop.f32.mrb[0].mxu0
    %v4798 = vadd.f32 0.0, %v4797
    %v4799 = vpop.f32.mrb[0].mxu0
    %4800 = vdwg.mxu0
    %v4802 = vsel %vm853, %v4190, 0
    %v4805 = vsel %vm853, %v4195, 0
    %4807 = vmatprep.subr.mxu0 0.0
    %4808 = vmatpush1.msra.mxu0 %v152
    %4809 = vmatprep.subr.mxu0 0.0
    %4810 = vmatpush1.msra.mxu0 %v153
    %4811 = vmatprep.subr.mxu0 0.0
    %4812 = vmatpush1.msra.mxu0 0.0
    %4813 = vmatprep.subr.mxu0 0.0
    %4814 = vmatpush1.msra.mxu0 0.0
    %4815 = vmatprep.subr.mxu0 0.0
    %4816 = vmatpush1.msra.mxu0 0.0
    %4817 = vmatprep.subr.mxu0 0.0
    %4818 = vmatpush1.msra.mxu0 0.0
    %4819 = vmatprep.subr.mxu0 0.0
    %4820 = vmatpush1.msra.mxu0 0.0
    %4821 = vmatprep.subr.mxu0 0.0
    %4822 = vmatpush1.msra.mxu0 0.0
    %4823 = vmatprep.subr.mxu0 0.0
    %4824 = vmatpush1.msra.mxu0 0.0
    %4825 = vmatprep.subr.mxu0 0.0
    %4826 = vmatpush1.msra.mxu0 0.0
    %4827 = vmatprep.subr.mxu0 0.0
    %4828 = vmatpush1.msra.mxu0 0.0
    %4829 = vmatprep.subr.mxu0 0.0
    %4830 = vmatpush1.msra.mxu0 0.0
    %4831 = vmatprep.subr.mxu0 0.0
    %4832 = vmatpush1.msra.mxu0 0.0
    %4833 = vmatprep.subr.mxu0 0.0
    %4834 = vmatpush1.msra.mxu0 0.0
    %4835 = vmatprep.subr.mxu0 0.0
    %4836 = vmatpush1.msra.mxu0 0.0
    %4837 = vmatprep.subr.mxu0 0.0
    %4838 = vmatpush1.msra.mxu0 0.0
    %4839 = vmatprep.subr.mxu0 0.0
    %4840 = vmatpush1.msra.mxu0 0.0
    %4841 = vmatprep.subr.mxu0 0.0
    %4842 = vmatpush1.msra.mxu0 0.0
    %4843 = vmatprep.subr.mxu0 0.0
    %4844 = vmatpush1.msra.mxu0 0.0
    %4845 = vmatprep.subr.mxu0 0.0
    %4846 = vmatpush1.msra.mxu0 0.0
    %4847 = vmatprep.subr.mxu0 0.0
    %4848 = vmatpush1.msra.mxu0 0.0
    %4849 = vmatprep.subr.mxu0 0.0
    %4850 = vmatpush1.msra.mxu0 0.0
    %4851 = vmatprep.subr.mxu0 0.0
    %4852 = vmatpush1.msra.mxu0 0.0
    %4853 = vmatprep.subr.mxu0 0.0
    %4854 = vmatpush1.msra.mxu0 0.0
    %4855 = vmatprep.subr.mxu0 0.0
    %4856 = vmatpush1.msra.mxu0 0.0
    %4857 = vmatprep.subr.mxu0 0.0
    %4858 = vmatpush1.msra.mxu0 0.0
    %4859 = vmatprep.subr.mxu0 0.0
    %4860 = vmatpush1.msra.mxu0 0.0
    %4861 = vmatprep.subr.mxu0 0.0
    %4862 = vmatpush1.msra.mxu0 0.0
    %4863 = vmatprep.subr.mxu0 0.0
    %4864 = vmatpush1.msra.mxu0 0.0
    %4865 = vmatprep.subr.mxu0 0.0
    %4866 = vmatpush1.msra.mxu0 0.0
    %4867 = vmatprep.subr.mxu0 0.0
    %4868 = vmatpush1.msra.mxu0 0.0
    %4869 = vmatprep.subr.mxu0 0.0
    %4870 = vmatpush1.msra.mxu0 0.0
    %4871 = vmatprep.mubr.f32.mxu0 0.0
    %4872 = vmatmul.mubr.f32.gmra.mrb[0].mxu0 %v4802
    %v4873 = vpop.f32.mrb[0].mxu0
    %v4874 = vadd.f32 0.0, %v4873
    %v4875 = vpop.f32.mrb[0].mxu0
    %4876 = vmatprep.mubr.f32.mxu0 0.0
    %4877 = vmatmul.mubr.f32.gmra.mrb[0].mxu0 %v4805
    %v4878 = vpop.f32.mrb[0].mxu0
    %v4879 = vadd.f32 0.0, %v4878
    %v4880 = vpop.f32.mrb[0].mxu0
    %4881 = vdwg.mxu0
    %v4883 = vsel %vm853, %v4277, 0
    %v4886 = vsel %vm853, %v4282, 0
    %4888 = vmatprep.subr.mxu0 0.0
    %4889 = vmatpush1.msra.mxu0 %v154
    %4890 = vmatprep.subr.mxu0 0.0
    %4891 = vmatpush1.msra.mxu0 %v155
    %4892 = vmatprep.subr.mxu0 0.0
    %4893 = vmatpush1.msra.mxu0 0.0
    %4894 = vmatprep.subr.mxu0 0.0
    %4895 = vmatpush1.msra.mxu0 0.0
    %4896 = vmatprep.subr.mxu0 0.0
    %4897 = vmatpush1.msra.mxu0 0.0
    %4898 = vmatprep.subr.mxu0 0.0
    %4899 = vmatpush1.msra.mxu0 0.0
    %4900 = vmatprep.subr.mxu0 0.0
    %4901 = vmatpush1.msra.mxu0 0.0
    %4902 = vmatprep.subr.mxu0 0.0
    %4903 = vmatpush1.msra.mxu0 0.0
    %4904 = vmatprep.subr.mxu0 0.0
    %4905 = vmatpush1.msra.mxu0 0.0
    %4906 = vmatprep.subr.mxu0 0.0
    %4907 = vmatpush1.msra.mxu0 0.0
    %4908 = vmatprep.subr.mxu0 0.0
    %4909 = vmatpush1.msra.mxu0 0.0
    %4910 = vmatprep.subr.mxu0 0.0
    %4911 = vmatpush1.msra.mxu0 0.0
    %4912 = vmatprep.subr.mxu0 0.0
    %4913 = vmatpush1.msra.mxu0 0.0
    %4914 = vmatprep.subr.mxu0 0.0
    %4915 = vmatpush1.msra.mxu0 0.0
    %4916 = vmatprep.subr.mxu0 0.0
    %4917 = vmatpush1.msra.mxu0 0.0
    %4918 = vmatprep.subr.mxu0 0.0
    %4919 = vmatpush1.msra.mxu0 0.0
    %4920 = vmatprep.subr.mxu0 0.0
    %4921 = vmatpush1.msra.mxu0 0.0
    %4922 = vmatprep.subr.mxu0 0.0
    %4923 = vmatpush1.msra.mxu0 0.0
    %4924 = vmatprep.subr.mxu0 0.0
    %4925 = vmatpush1.msra.mxu0 0.0
    %4926 = vmatprep.subr.mxu0 0.0
    %4927 = vmatpush1.msra.mxu0 0.0
    %4928 = vmatprep.subr.mxu0 0.0
    %4929 = vmatpush1.msra.mxu0 0.0
    %4930 = vmatprep.subr.mxu0 0.0
    %4931 = vmatpush1.msra.mxu0 0.0
    %4932 = vmatprep.subr.mxu0 0.0
    %4933 = vmatpush1.msra.mxu0 0.0
    %4934 = vmatprep.subr.mxu0 0.0
    %4935 = vmatpush1.msra.mxu0 0.0
    %4936 = vmatprep.subr.mxu0 0.0
    %4937 = vmatpush1.msra.mxu0 0.0
    %4938 = vmatprep.subr.mxu0 0.0
    %4939 = vmatpush1.msra.mxu0 0.0
    %4940 = vmatprep.subr.mxu0 0.0
    %4941 = vmatpush1.msra.mxu0 0.0
    %4942 = vmatprep.subr.mxu0 0.0
    %4943 = vmatpush1.msra.mxu0 0.0
    %4944 = vmatprep.subr.mxu0 0.0
    %4945 = vmatpush1.msra.mxu0 0.0
    %4946 = vmatprep.subr.mxu0 0.0
    %4947 = vmatpush1.msra.mxu0 0.0
    %4948 = vmatprep.subr.mxu0 0.0
    %4949 = vmatpush1.msra.mxu0 0.0
    %4950 = vmatprep.subr.mxu0 0.0
    %4951 = vmatpush1.msra.mxu0 0.0
    %4952 = vmatprep.mubr.f32.mxu0 0.0
    %4953 = vmatmul.mubr.f32.gmra.mrb[0].mxu0 %v4883
    %v4954 = vpop.f32.mrb[0].mxu0
    %v4955 = vadd.f32 0.0, %v4954
    %v4956 = vpop.f32.mrb[0].mxu0
    %4957 = vmatprep.mubr.f32.mxu0 0.0
    %4958 = vmatmul.mubr.f32.gmra.mrb[0].mxu0 %v4886
    %v4959 = vpop.f32.mrb[0].mxu0
    %v4960 = vadd.f32 0.0, %v4959
    %v4961 = vpop.f32.mrb[0].mxu0
    %4962 = vdwg.mxu0
    %v4964 = vsel %vm853, %v4364, 0
    %v4967 = vsel %vm853, %v4369, 0
    %4969 = vmatprep.subr.mxu0 0.0
    %4970 = vmatpush1.msra.mxu0 %v156
    %4971 = vmatprep.subr.mxu0 0.0
    %4972 = vmatpush1.msra.mxu0 %v157
    %4973 = vmatprep.subr.mxu0 0.0
    %4974 = vmatpush1.msra.mxu0 0.0
    %4975 = vmatprep.subr.mxu0 0.0
    %4976 = vmatpush1.msra.mxu0 0.0
    %4977 = vmatprep.subr.mxu0 0.0
    %4978 = vmatpush1.msra.mxu0 0.0
    %4979 = vmatprep.subr.mxu0 0.0
    %4980 = vmatpush1.msra.mxu0 0.0
    %4981 = vmatprep.subr.mxu0 0.0
    %4982 = vmatpush1.msra.mxu0 0.0
    %4983 = vmatprep.subr.mxu0 0.0
    %4984 = vmatpush1.msra.mxu0 0.0
    %4985 = vmatprep.subr.mxu0 0.0
    %4986 = vmatpush1.msra.mxu0 0.0
    %4987 = vmatprep.subr.mxu0 0.0
    %4988 = vmatpush1.msra.mxu0 0.0
    %4989 = vmatprep.subr.mxu0 0.0
    %4990 = vmatpush1.msra.mxu0 0.0
    %4991 = vmatprep.subr.mxu0 0.0
    %4992 = vmatpush1.msra.mxu0 0.0
    %4993 = vmatprep.subr.mxu0 0.0
    %4994 = vmatpush1.msra.mxu0 0.0
    %4995 = vmatprep.subr.mxu0 0.0
    %4996 = vmatpush1.msra.mxu0 0.0
    %4997 = vmatprep.subr.mxu0 0.0
    %4998 = vmatpush1.msra.mxu0 0.0
    %4999 = vmatprep.subr.mxu0 0.0
    %5000 = vmatpush1.msra.mxu0 0.0
    %5001 = vmatprep.subr.mxu0 0.0
    %5002 = vmatpush1.msra.mxu0 0.0
    %5003 = vmatprep.subr.mxu0 0.0
    %5004 = vmatpush1.msra.mxu0 0.0
    %5005 = vmatprep.subr.mxu0 0.0
    %5006 = vmatpush1.msra.mxu0 0.0
    %5007 = vmatprep.subr.mxu0 0.0
    %5008 = vmatpush1.msra.mxu0 0.0
    %5009 = vmatprep.subr.mxu0 0.0
    %5010 = vmatpush1.msra.mxu0 0.0
    %5011 = vmatprep.subr.mxu0 0.0
    %5012 = vmatpush1.msra.mxu0 0.0
    %5013 = vmatprep.subr.mxu0 0.0
    %5014 = vmatpush1.msra.mxu0 0.0
    %5015 = vmatprep.subr.mxu0 0.0
    %5016 = vmatpush1.msra.mxu0 0.0
    %5017 = vmatprep.subr.mxu0 0.0
    %5018 = vmatpush1.msra.mxu0 0.0
    %5019 = vmatprep.subr.mxu0 0.0
    %5020 = vmatpush1.msra.mxu0 0.0
    %5021 = vmatprep.subr.mxu0 0.0
    %5022 = vmatpush1.msra.mxu0 0.0
    %5023 = vmatprep.subr.mxu0 0.0
    %5024 = vmatpush1.msra.mxu0 0.0
    %5025 = vmatprep.subr.mxu0 0.0
    %5026 = vmatpush1.msra.mxu0 0.0
    %5027 = vmatprep.subr.mxu0 0.0
    %5028 = vmatpush1.msra.mxu0 0.0
    %5029 = vmatprep.subr.mxu0 0.0
    %5030 = vmatpush1.msra.mxu0 0.0
    %5031 = vmatprep.subr.mxu0 0.0
    %5032 = vmatpush1.msra.mxu0 0.0
    %5033 = vmatprep.mubr.f32.mxu0 0.0
    %5034 = vmatmul.mubr.f32.gmra.mrb[0].mxu0 %v4964
    %v5035 = vpop.f32.mrb[0].mxu0
    %v5036 = vadd.f32 0.0, %v5035
    %v5037 = vpop.f32.mrb[0].mxu0
    %5038 = vmatprep.mubr.f32.mxu0 0.0
    %5039 = vmatmul.mubr.f32.gmra.mrb[0].mxu0 %v4967
    %v5040 = vpop.f32.mrb[0].mxu0
    %v5041 = vadd.f32 0.0, %v5040
    %v5042 = vpop.f32.mrb[0].mxu0
    %5043 = vdwg.mxu0
    %v5045 = vsel %vm853, %v4451, 0
    %v5048 = vsel %vm853, %v4456, 0
    %5050 = vmatprep.subr.mxu0 0.0
    %5051 = vmatpush1.msra.mxu0 %v158
    %5052 = vmatprep.subr.mxu0 0.0
    %5053 = vmatpush1.msra.mxu0 %v159
    %5054 = vmatprep.subr.mxu0 0.0
    %5055 = vmatpush1.msra.mxu0 0.0
    %5056 = vmatprep.subr.mxu0 0.0
    %5057 = vmatpush1.msra.mxu0 0.0
    %5058 = vmatprep.subr.mxu0 0.0
    %5059 = vmatpush1.msra.mxu0 0.0
    %5060 = vmatprep.subr.mxu0 0.0
    %5061 = vmatpush1.msra.mxu0 0.0
    %5062 = vmatprep.subr.mxu0 0.0
    %5063 = vmatpush1.msra.mxu0 0.0
    %5064 = vmatprep.subr.mxu0 0.0
    %5065 = vmatpush1.msra.mxu0 0.0
    %5066 = vmatprep.subr.mxu0 0.0
    %5067 = vmatpush1.msra.mxu0 0.0
    %5068 = vmatprep.subr.mxu0 0.0
    %5069 = vmatpush1.msra.mxu0 0.0
    %5070 = vmatprep.subr.mxu0 0.0
    %5071 = vmatpush1.msra.mxu0 0.0
    %5072 = vmatprep.subr.mxu0 0.0
    %5073 = vmatpush1.msra.mxu0 0.0
    %5074 = vmatprep.subr.mxu0 0.0
    %5075 = vmatpush1.msra.mxu0 0.0
    %5076 = vmatprep.subr.mxu0 0.0
    %5077 = vmatpush1.msra.mxu0 0.0
    %5078 = vmatprep.subr.mxu0 0.0
    %5079 = vmatpush1.msra.mxu0 0.0
    %5080 = vmatprep.subr.mxu0 0.0
    %5081 = vmatpush1.msra.mxu0 0.0
    %5082 = vmatprep.subr.mxu0 0.0
    %5083 = vmatpush1.msra.mxu0 0.0
    %5084 = vmatprep.subr.mxu0 0.0
    %5085 = vmatpush1.msra.mxu0 0.0
    %5086 = vmatprep.subr.mxu0 0.0
    %5087 = vmatpush1.msra.mxu0 0.0
    %5088 = vmatprep.subr.mxu0 0.0
    %5089 = vmatpush1.msra.mxu0 0.0
    %5090 = vmatprep.subr.mxu0 0.0
    %5091 = vmatpush1.msra.mxu0 0.0
    %5092 = vmatprep.subr.mxu0 0.0
    %5093 = vmatpush1.msra.mxu0 0.0
    %5094 = vmatprep.subr.mxu0 0.0
    %5095 = vmatpush1.msra.mxu0 0.0
    %5096 = vmatprep.subr.mxu0 0.0
    %5097 = vmatpush1.msra.mxu0 0.0
    %5098 = vmatprep.subr.mxu0 0.0
    %5099 = vmatpush1.msra.mxu0 0.0
    %5100 = vmatprep.subr.mxu0 0.0
    %5101 = vmatpush1.msra.mxu0 0.0
    %5102 = vmatprep.subr.mxu0 0.0
    %5103 = vmatpush1.msra.mxu0 0.0
    %5104 = vmatprep.subr.mxu0 0.0
    %5105 = vmatpush1.msra.mxu0 0.0
    %5106 = vmatprep.subr.mxu0 0.0
    %5107 = vmatpush1.msra.mxu0 0.0
    %5108 = vmatprep.subr.mxu0 0.0
    %5109 = vmatpush1.msra.mxu0 0.0
    %5110 = vmatprep.subr.mxu0 0.0
    %5111 = vmatpush1.msra.mxu0 0.0
    %5112 = vmatprep.subr.mxu0 0.0
    %5113 = vmatpush1.msra.mxu0 0.0
    %5114 = vmatprep.mubr.f32.mxu0 0.0
    %5115 = vmatmul.mubr.f32.gmra.mrb[0].mxu0 %v5045
    %v5116 = vpop.f32.mrb[0].mxu0
    %v5117 = vadd.f32 0.0, %v5116
    %v5118 = vpop.f32.mrb[0].mxu0
    %5119 = vmatprep.mubr.f32.mxu0 0.0
    %5120 = vmatmul.mubr.f32.gmra.mrb[0].mxu0 %v5048
    %v5121 = vpop.f32.mrb[0].mxu0
    %v5122 = vadd.f32 0.0, %v5121
    %v5123 = vpop.f32.mrb[0].mxu0
    %5124 = vdwg.mxu0
    %v5126 = vsel %vm853, %v4538, 0
    %v5129 = vsel %vm853, %v4543, 0
    %5131 = vmatprep.subr.mxu0 0.0
    %5132 = vmatpush1.msra.mxu0 %v160
    %5133 = vmatprep.subr.mxu0 0.0
    %5134 = vmatpush1.msra.mxu0 %v161
    %5135 = vmatprep.subr.mxu0 0.0
    %5136 = vmatpush1.msra.mxu0 0.0
    %5137 = vmatprep.subr.mxu0 0.0
    %5138 = vmatpush1.msra.mxu0 0.0
    %5139 = vmatprep.subr.mxu0 0.0
    %5140 = vmatpush1.msra.mxu0 0.0
    %5141 = vmatprep.subr.mxu0 0.0
    %5142 = vmatpush1.msra.mxu0 0.0
    %5143 = vmatprep.subr.mxu0 0.0
    %5144 = vmatpush1.msra.mxu0 0.0
    %5145 = vmatprep.subr.mxu0 0.0
    %5146 = vmatpush1.msra.mxu0 0.0
    %5147 = vmatprep.subr.mxu0 0.0
    %5148 = vmatpush1.msra.mxu0 0.0
    %5149 = vmatprep.subr.mxu0 0.0
    %5150 = vmatpush1.msra.mxu0 0.0
    %5151 = vmatprep.subr.mxu0 0.0
    %5152 = vmatpush1.msra.mxu0 0.0
    %5153 = vmatprep.subr.mxu0 0.0
    %5154 = vmatpush1.msra.mxu0 0.0
    %5155 = vmatprep.subr.mxu0 0.0
    %5156 = vmatpush1.msra.mxu0 0.0
    %5157 = vmatprep.subr.mxu0 0.0
    %5158 = vmatpush1.msra.mxu0 0.0
    %5159 = vmatprep.subr.mxu0 0.0
    %5160 = vmatpush1.msra.mxu0 0.0
    %5161 = vmatprep.subr.mxu0 0.0
    %5162 = vmatpush1.msra.mxu0 0.0
    %5163 = vmatprep.subr.mxu0 0.0
    %5164 = vmatpush1.msra.mxu0 0.0
    %5165 = vmatprep.subr.mxu0 0.0
    %5166 = vmatpush1.msra.mxu0 0.0
    %5167 = vmatprep.subr.mxu0 0.0
    %5168 = vmatpush1.msra.mxu0 0.0
    %5169 = vmatprep.subr.mxu0 0.0
    %5170 = vmatpush1.msra.mxu0 0.0
    %5171 = vmatprep.subr.mxu0 0.0
    %5172 = vmatpush1.msra.mxu0 0.0
    %5173 = vmatprep.subr.mxu0 0.0
    %5174 = vmatpush1.msra.mxu0 0.0
    %5175 = vmatprep.subr.mxu0 0.0
    %5176 = vmatpush1.msra.mxu0 0.0
    %5177 = vmatprep.subr.mxu0 0.0
    %5178 = vmatpush1.msra.mxu0 0.0
    %5179 = vmatprep.subr.mxu0 0.0
    %5180 = vmatpush1.msra.mxu0 0.0
    %5181 = vmatprep.subr.mxu0 0.0
    %5182 = vmatpush1.msra.mxu0 0.0
    %5183 = vmatprep.subr.mxu0 0.0
    %5184 = vmatpush1.msra.mxu0 0.0
    %5185 = vmatprep.subr.mxu0 0.0
    %5186 = vmatpush1.msra.mxu0 0.0
    %5187 = vmatprep.subr.mxu0 0.0
    %5188 = vmatpush1.msra.mxu0 0.0
    %5189 = vmatprep.subr.mxu0 0.0
    %5190 = vmatpush1.msra.mxu0 0.0
    %5191 = vmatprep.subr.mxu0 0.0
    %5192 = vmatpush1.msra.mxu0 0.0
    %5193 = vmatprep.subr.mxu0 0.0
    %5194 = vmatpush1.msra.mxu0 0.0
    %5195 = vmatprep.mubr.f32.mxu0 0.0
    %5196 = vmatmul.mubr.f32.gmra.mrb[0].mxu0 %v5126
    %v5197 = vpop.f32.mrb[0].mxu0
    %v5198 = vadd.f32 0.0, %v5197
    %v5199 = vpop.f32.mrb[0].mxu0
    %5200 = vmatprep.mubr.f32.mxu0 0.0
    %5201 = vmatmul.mubr.f32.gmra.mrb[0].mxu0 %v5129
    %v5202 = vpop.f32.mrb[0].mxu0
    %v5203 = vadd.f32 0.0, %v5202
    %v5204 = vpop.f32.mrb[0].mxu0
    %5205 = vdwg.mxu0
    %v5207 = vsel %vm853, %v4625, 0
    %v5210 = vsel %vm853, %v4630, 0
    %5212 = vmatprep.subr.mxu0 0.0
    %5213 = vmatpush1.msra.mxu0 %v162
    %5214 = vmatprep.subr.mxu0 0.0
    %5215 = vmatpush1.msra.mxu0 %v163
    %5216 = vmatprep.subr.mxu0 0.0
    %5217 = vmatpush1.msra.mxu0 0.0
    %5218 = vmatprep.subr.mxu0 0.0
    %5219 = vmatpush1.msra.mxu0 0.0
    %5220 = vmatprep.subr.mxu0 0.0
    %5221 = vmatpush1.msra.mxu0 0.0
    %5222 = vmatprep.subr.mxu0 0.0
    %5223 = vmatpush1.msra.mxu0 0.0
    %5224 = vmatprep.subr.mxu0 0.0
    %5225 = vmatpush1.msra.mxu0 0.0
    %5226 = vmatprep.subr.mxu0 0.0
    %5227 = vmatpush1.msra.mxu0 0.0
    %5228 = vmatprep.subr.mxu0 0.0
    %5229 = vmatpush1.msra.mxu0 0.0
    %5230 = vmatprep.subr.mxu0 0.0
    %5231 = vmatpush1.msra.mxu0 0.0
    %5232 = vmatprep.subr.mxu0 0.0
    %5233 = vmatpush1.msra.mxu0 0.0
    %5234 = vmatprep.subr.mxu0 0.0
    %5235 = vmatpush1.msra.mxu0 0.0
    %5236 = vmatprep.subr.mxu0 0.0
    %5237 = vmatpush1.msra.mxu0 0.0
    %5238 = vmatprep.subr.mxu0 0.0
    %5239 = vmatpush1.msra.mxu0 0.0
    %5240 = vmatprep.subr.mxu0 0.0
    %5241 = vmatpush1.msra.mxu0 0.0
    %5242 = vmatprep.subr.mxu0 0.0
    %5243 = vmatpush1.msra.mxu0 0.0
    %5244 = vmatprep.subr.mxu0 0.0
    %5245 = vmatpush1.msra.mxu0 0.0
    %5246 = vmatprep.subr.mxu0 0.0
    %5247 = vmatpush1.msra.mxu0 0.0
    %5248 = vmatprep.subr.mxu0 0.0
    %5249 = vmatpush1.msra.mxu0 0.0
    %5250 = vmatprep.subr.mxu0 0.0
    %5251 = vmatpush1.msra.mxu0 0.0
    %5252 = vmatprep.subr.mxu0 0.0
    %5253 = vmatpush1.msra.mxu0 0.0
    %5254 = vmatprep.subr.mxu0 0.0
    %5255 = vmatpush1.msra.mxu0 0.0
    %5256 = vmatprep.subr.mxu0 0.0
    %5257 = vmatpush1.msra.mxu0 0.0
    %5258 = vmatprep.subr.mxu0 0.0
    %5259 = vmatpush1.msra.mxu0 0.0
    %5260 = vmatprep.subr.mxu0 0.0
    %5261 = vmatpush1.msra.mxu0 0.0
    %5262 = vmatprep.subr.mxu0 0.0
    %5263 = vmatpush1.msra.mxu0 0.0
    %5264 = vmatprep.subr.mxu0 0.0
    %5265 = vmatpush1.msra.mxu0 0.0
    %5266 = vmatprep.subr.mxu0 0.0
    %5267 = vmatpush1.msra.mxu0 0.0
    %5268 = vmatprep.subr.mxu0 0.0
    %5269 = vmatpush1.msra.mxu0 0.0
    %5270 = vmatprep.subr.mxu0 0.0
    %5271 = vmatpush1.msra.mxu0 0.0
    %5272 = vmatprep.subr.mxu0 0.0
    %5273 = vmatpush1.msra.mxu0 0.0
    %5274 = vmatprep.subr.mxu0 0.0
    %5275 = vmatpush1.msra.mxu0 0.0
    %5276 = vmatprep.mubr.f32.mxu0 0.0
    %5277 = vmatmul.mubr.f32.gmra.mrb[0].mxu0 %v5207
    %v5278 = vpop.f32.mrb[0].mxu0
    %v5279 = vadd.f32 0.0, %v5278
    %v5280 = vpop.f32.mrb[0].mxu0
    %5281 = vmatprep.mubr.f32.mxu0 0.0
    %5282 = vmatmul.mubr.f32.gmra.mrb[0].mxu0 %v5210
    %v5283 = vpop.f32.mrb[0].mxu0
    %v5284 = vadd.f32 0.0, %v5283
    %v5285 = vpop.f32.mrb[0].mxu0
    %5286 = vdwg.mxu0
    %v5288 = vsel %vm853, %v4712, 0
    %v5291 = vsel %vm853, %v4717, 0
    %5293 = vmatprep.subr.mxu0 0.0
    %5294 = vmatpush1.msra.mxu0 %v164
    %5295 = vmatprep.subr.mxu0 0.0
    %5296 = vmatpush1.msra.mxu0 %v165
    %5297 = vmatprep.subr.mxu0 0.0
    %5298 = vmatpush1.msra.mxu0 0.0
    %5299 = vmatprep.subr.mxu0 0.0
    %5300 = vmatpush1.msra.mxu0 0.0
    %5301 = vmatprep.subr.mxu0 0.0
    %5302 = vmatpush1.msra.mxu0 0.0
    %5303 = vmatprep.subr.mxu0 0.0
    %5304 = vmatpush1.msra.mxu0 0.0
    %5305 = vmatprep.subr.mxu0 0.0
    %5306 = vmatpush1.msra.mxu0 0.0
    %5307 = vmatprep.subr.mxu0 0.0
    %5308 = vmatpush1.msra.mxu0 0.0
    %5309 = vmatprep.subr.mxu0 0.0
    %5310 = vmatpush1.msra.mxu0 0.0
    %5311 = vmatprep.subr.mxu0 0.0
    %5312 = vmatpush1.msra.mxu0 0.0
    %5313 = vmatprep.subr.mxu0 0.0
    %5314 = vmatpush1.msra.mxu0 0.0
    %5315 = vmatprep.subr.mxu0 0.0
    %5316 = vmatpush1.msra.mxu0 0.0
    %5317 = vmatprep.subr.mxu0 0.0
    %5318 = vmatpush1.msra.mxu0 0.0
    %5319 = vmatprep.subr.mxu0 0.0
    %5320 = vmatpush1.msra.mxu0 0.0
    %5321 = vmatprep.subr.mxu0 0.0
    %5322 = vmatpush1.msra.mxu0 0.0
    %5323 = vmatprep.subr.mxu0 0.0
    %5324 = vmatpush1.msra.mxu0 0.0
    %5325 = vmatprep.subr.mxu0 0.0
    %5326 = vmatpush1.msra.mxu0 0.0
    %5327 = vmatprep.subr.mxu0 0.0
    %5328 = vmatpush1.msra.mxu0 0.0
    %5329 = vmatprep.subr.mxu0 0.0
    %5330 = vmatpush1.msra.mxu0 0.0
    %5331 = vmatprep.subr.mxu0 0.0
    %5332 = vmatpush1.msra.mxu0 0.0
    %5333 = vmatprep.subr.mxu0 0.0
    %5334 = vmatpush1.msra.mxu0 0.0
    %5335 = vmatprep.subr.mxu0 0.0
    %5336 = vmatpush1.msra.mxu0 0.0
    %5337 = vmatprep.subr.mxu0 0.0
    %5338 = vmatpush1.msra.mxu0 0.0
    %5339 = vmatprep.subr.mxu0 0.0
    %5340 = vmatpush1.msra.mxu0 0.0
    %5341 = vmatprep.subr.mxu0 0.0
    %5342 = vmatpush1.msra.mxu0 0.0
    %5343 = vmatprep.subr.mxu0 0.0
    %5344 = vmatpush1.msra.mxu0 0.0
    %5345 = vmatprep.subr.mxu0 0.0
    %5346 = vmatpush1.msra.mxu0 0.0
    %5347 = vmatprep.subr.mxu0 0.0
    %5348 = vmatpush1.msra.mxu0 0.0
    %5349 = vmatprep.subr.mxu0 0.0
    %5350 = vmatpush1.msra.mxu0 0.0
    %5351 = vmatprep.subr.mxu0 0.0
    %5352 = vmatpush1.msra.mxu0 0.0
    %5353 = vmatprep.subr.mxu0 0.0
    %5354 = vmatpush1.msra.mxu0 0.0
    %5355 = vmatprep.subr.mxu0 0.0
    %5356 = vmatpush1.msra.mxu0 0.0
    %5357 = vmatprep.mubr.f32.mxu0 0.0
    %5358 = vmatmul.mubr.f32.gmra.mrb[0].mxu0 %v5288
    %v5359 = vpop.f32.mrb[0].mxu0
    %v5360 = vadd.f32 0.0, %v5359
    %v5361 = vpop.f32.mrb[0].mxu0
    %5362 = vmatprep.mubr.f32.mxu0 0.0
    %5363 = vmatmul.mubr.f32.gmra.mrb[0].mxu0 %v5291
    %v5364 = vpop.f32.mrb[0].mxu0
    %v5365 = vadd.f32 0.0, %v5364
    %v5366 = vpop.f32.mrb[0].mxu0
    %5367 = vdwg.mxu0
    %v5368 = vadd.f32 %v4793, %v4874
    %v5369 = vadd.f32 %v5368, %v4955
    %v5370 = vadd.f32 %v5369, %v5036
    %v5371 = vadd.f32 %v5370, %v5117
    %v5372 = vadd.f32 %v5371, %v5198
    %v5373 = vadd.f32 %v5372, %v5279
    %v5374 = vadd.f32 %v5373, %v5360
    %v5375 = vadd.f32 %v4798, %v4879
    %v5376 = vadd.f32 %v5375, %v4960
    %v5377 = vadd.f32 %v5376, %v5041
    %v5378 = vadd.f32 %v5377, %v5122
    %v5379 = vadd.f32 %v5378, %v5203
    %v5380 = vadd.f32 %v5379, %v5284
    %v5381 = vadd.f32 %v5380, %v5365
    %v5382 = vadd.f32 %v5374, %v3114
    %v5383 = vadd.f32 %v5381, %v3114
    %s5384 = scalar_lea.vmem [#allocation2], 16
    %5385 = vst [vmem:[%s5384] sm:$0xff] %v5382
    %5386 = vst [vmem:[%s5384 + $0x8] sm:$0xff] %v5383
    // Predicated region
    $region18: #{attention_forward.1} parent=1 // pred_check
      _
    $region19: #{attention_forward.1} parent=1 // pred_check_branch
      %5388 = sbr.rel (0) target = $region21
    $region20: #{attention_forward.1} parent=1 // pred_region
      %s5390 = ssub.s32 512, 512
      %5391 = vsyncadd [#allocation3], %s5390
      %s5392 = sshll.u32 [#allocation2], 4
      %s5393 = int_to_ptr.vmem [resolvable:$true] %s5392
      %5398 = dma.vmem_to_hbm [thread:$0]  %s5393, 512, %s4, [#allocation3], 128, 128, 8
    $region21: #{attention_forward.1} parent=1 // pred_fallthru
      _
    // Predicated region
    $region22: #{attention_forward.1} parent=1 // pred_check
      _
    $region23: #{attention_forward.1} parent=1 // pred_check_branch
      %5400 = sbr.rel (0) target = $region25
    $region24: #{attention_forward.1} parent=1 // pred_region
      %5401 = dma.done [#allocation3], 512
    $region25: #{attention_forward.1} parent=1 // pred_fallthru
      _
    %5402 = vsyncpa [#allocation3], 1

</llo_original>
